<compile_context>
chip_gen: v7x
topology: tpu7x:2x2x1
jax: 0.10.0
libtpu: 0.0.40
codegen_flags: <defaults>
</compile_context>

<pallas_src>
import jax
import jax.numpy as jnp
from jax.experimental import pallas as pl
from jax.experimental.pallas import tpu as pltpu


def _make_kernel(offs, C1, Cout, L, dot_dtype):
    """Fused conv3x3 -> ReLU -> conv3x3 -> ReLU over a (C, L) flat-lane block."""

    def kernel(x_ref, w1_ref, w2_ref, mask_ref, o_ref):
        x = x_ref[...]                      # (Cin, L)  lane-dense activations
        interior = mask_ref[...]            # (1, L)    1.0 on valid HxW columns

        # ---- conv1: 9 shift-and-accumulate partial matmuls -----------------
        # Shift the small (Cin, L) operand; wrap lanes only hit halo columns.
        acc1 = None
        for t, o in enumerate(offs):
            xt = x if o == 0 else pltpu.roll(x, (-o) % L, axis=1)
            part = jnp.dot(w1_ref[t], xt, preferred_element_type=jnp.float32)
            acc1 = part if acc1 is None else acc1 + part

        # ReLU; the interior mask re-zeroes halo columns, which emulates
        # conv2's zero padding.  Single cast for the conv2 MXU operands.
        mid = (jnp.maximum(acc1, 0.0) * interior).astype(dot_dtype)  # (C1, L)

        # ---- conv2: 9 shift-and-accumulate partial matmuls -----------------
        # Shift the small (Cout, L) RESULT instead of the (C1, L) operand.
        acc2 = None
        for t, o in enumerate(offs):
            part = jnp.dot(w2_ref[t], mid, preferred_element_type=jnp.float32)
            part = part if o == 0 else pltpu.roll(part, (-o) % L, axis=1)
            acc2 = part if acc2 is None else acc2 + part

        o_ref[...] = jnp.maximum(acc2, 0.0)                          # (Cout, L)

    return kernel


def input_cv_block(x_nchw, w1_oihw, w2_oihw, *, nb=None,
                   compute_dtype=jnp.float32):
    """Pallas implementation of InputCvBlock.forward (no-bias convs + ReLU).

    x_nchw : (N, num_in_frames, H, W)                 float32
    w1_oihw: (out_ch*interm_ch, num_in_frames, 3, 3)  float32 (PyTorch layout)
    w2_oihw: (out_ch, out_ch*interm_ch, 3, 3)         float32
    nb     : images fused per grid step (lane-concatenated).  Default N ->
             one step / one wide matmul per tap (best on single-TC v5e/v6e).
             On v7x choose nb so N//nb is a multiple of 2 (uses both TCs).
    compute_dtype: dtype of the MXU operands (f32 default; bf16 is worthwhile
             on v6e/v7x — accumulation stays f32, relax tolerances to ~1e-2).
    returns: (N, out_ch, H, W) float32
    """
    N, Cin, H, W = x_nchw.shape
    C1 = w1_oihw.shape[0]
    Cout = w2_oihw.shape[0]
    Hp, Wp = H + 2, W + 2
    P = Hp * Wp
    Pa = ((P + 127) // 128) * 128           # lane-dense padded spatial extent
    if nb is None:
        nb = N
    assert N % nb == 0, "nb must divide the batch"
    L = nb * Pa                             # lanes handled per grid step

    # Lane offset of 3x3 tap (dy, dx) in the padded-flat layout.
    offs = [(dy - 1) * Wp + (dx - 1) for dy in range(3) for dx in range(3)]

    # Zero-pad (conv1 padding=1), flatten padded (Hp, Wp) onto lanes, pad the
    # lane axis to Pa, then fuse the batch along lanes: (Cin, N*Pa).
    xp = jnp.pad(x_nchw, ((0, 0), (0, 0), (1, 1), (1, 1))).reshape(N, Cin, P)
    xp = jnp.pad(xp, ((0, 0), (0, 0), (0, Pa - P)))
    x_cl = jnp.transpose(xp, (1, 0, 2)).reshape(Cin, N * Pa).astype(compute_dtype)

    # Per-tap weight matrices: w[t][o, i] = W_oihw[o, i, ky, kx], t = ky*3+kx.
    w1t = jnp.transpose(w1_oihw, (2, 3, 0, 1)).reshape(9, C1, Cin).astype(compute_dtype)
    w2t = jnp.transpose(w2_oihw, (2, 3, 0, 1)).reshape(9, Cout, C1).astype(compute_dtype)

    # Interior mask of the padded-flat layout, tiled over the nb fused images.
    m = jnp.pad(jnp.ones((H, W), jnp.float32), ((1, 1), (1, 1))).reshape(1, P)
    m = jnp.pad(m, ((0, 0), (0, Pa - P)))
    mask = jnp.tile(m, (1, nb))                                     # (1, L)

    out_flat = pl.pallas_call(
        _make_kernel(offs, C1, Cout, L, compute_dtype),
        out_shape=jax.ShapeDtypeStruct((Cout, N * Pa), jnp.float32),
        grid_spec=pltpu.PrefetchScalarGridSpec(
            num_scalar_prefetch=0,
            grid=(N // nb,),
            in_specs=[
                pl.BlockSpec((Cin, L), lambda n: (0, n)),          # activations
                pl.BlockSpec((9, C1, Cin), lambda n: (0, 0, 0)),   # conv1 taps
                pl.BlockSpec((9, Cout, C1), lambda n: (0, 0, 0)),  # conv2 taps
                pl.BlockSpec((1, L), lambda n: (0, 0)),            # interior mask
            ],
            out_specs=pl.BlockSpec((Cout, L), lambda n: (0, n)),
        ),
        compiler_params=pltpu.CompilerParams(
            dimension_semantics=("parallel",)),   # spreads steps over TCs (v7x)
    )(x_cl, w1t, w2t, mask)

    # Interior slice of the padded-flat result -> (N, Cout, H, W).  This slice
    # is the ONLY consumer of the kernel output; halo columns hold roll-wrap
    # garbage by design.
    out = out_flat.reshape(Cout, N, Pa)[:, :, :P].reshape(Cout, N, Hp, Wp)
    return jnp.transpose(out, (1, 0, 2, 3))[:, :, 1:H + 1, 1:W + 1]


def _reference(x_nchw, w1_oihw, w2_oihw):
    dn = ("NCHW", "OIHW", "NCHW")
    y = jax.lax.conv_general_dilated(x_nchw, w1_oihw, (1, 1), "SAME",
                                     dimension_numbers=dn)
    y = jnp.maximum(y, 0.0)
    y = jax.lax.conv_general_dilated(y, w2_oihw, (1, 1), "SAME",
                                     dimension_numbers=dn)
    return jnp.maximum(y, 0.0)


if __name__ == "__main__":
    # Module config: InputCvBlock(num_in_frames=4, out_ch=8) -> interm_ch = 4
    num_in_frames = 4
    out_ch = 8
    interm_ch = 4
    N, H, W = 2, 16, 16

    key = jax.random.PRNGKey(0)
    kx, kw1, kw2 = jax.random.split(key, 3)

    x = jax.random.normal(kx, (N, num_in_frames, H, W), dtype=jnp.float32)
    # Deterministic synthetic weights (PyTorch Conv2d weight shapes, no bias).
    w1 = 0.1 * jax.random.normal(
        kw1, (out_ch * interm_ch, num_in_frames, 3, 3), dtype=jnp.float32)
    w2 = 0.1 * jax.random.normal(
        kw2, (out_ch, out_ch * interm_ch, 3, 3), dtype=jnp.float32)

    out = jax.block_until_ready(input_cv_block(x, w1, w2))

    ref = jax.block_until_ready(_reference(x, w1, w2))
    assert out.shape == (N, out_ch, H, W)
    assert jnp.allclose(out, ref, atol=1e-4, rtol=1e-4), \
        "mismatch vs XLA conv reference"

    print("KERNEL_OK")
</pallas_src>

<mosaic_0001>
module attributes {stable_mosaic.version = 11 : i64} {
  func.func @kernel(%arg0: i32, %arg1: memref<4x768xf32, #tpu.memory_space<vmem>>, %arg2: memref<9x32x4xf32, #tpu.memory_space<vmem>>, %arg3: memref<9x8x32xf32, #tpu.memory_space<vmem>>, %arg4: memref<1x768xf32, #tpu.memory_space<vmem>>, %arg5: memref<8x768xf32, #tpu.memory_space<vmem>>) attributes {dimension_semantics = [#tpu.dimension_semantics<parallel>], iteration_bounds = array<i64: 1>, scalar_prefetch = 0 : i64, scratch_operands = 0 : i64, tpu.core_type = #tpu.core_type<tc>, window_params = [{transform_indices = @transform_0, window_bounds = array<i64: 4, 768>}, {pipeline_mode = #tpu.pipeline_mode<synchronous>, transform_indices = @transform_1, window_bounds = array<i64: 9, 32, 4>}, {pipeline_mode = #tpu.pipeline_mode<synchronous>, transform_indices = @transform_2, window_bounds = array<i64: 9, 8, 32>}, {pipeline_mode = #tpu.pipeline_mode<synchronous>, transform_indices = @transform_3, window_bounds = array<i64: 1, 768>}, {transform_indices = @transform_4, window_bounds = array<i64: 8, 768>}]} {
    %c0 = arith.constant 0 : index
    %c0_0 = arith.constant 0 : index
    %0 = vector.load %arg1[%c0, %c0_0] : memref<4x768xf32, #tpu.memory_space<vmem>>, vector<4x768xf32>
    %c0_1 = arith.constant 0 : index
    %c0_2 = arith.constant 0 : index
    %1 = vector.load %arg4[%c0_1, %c0_2] : memref<1x768xf32, #tpu.memory_space<vmem>>, vector<1x768xf32>
    %c19_i32 = arith.constant 19 : i32
    %2 = tpu.dynamic_rotate %0 by %c19_i32 dim 1 : vector<4x768xf32>, i32 -> vector<4x768xf32>
    %c0_3 = arith.constant 0 : index
    %c0_4 = arith.constant 0 : index
    %c0_5 = arith.constant 0 : index
    %3 = vector.load %arg2[%c0_3, %c0_4, %c0_5] : memref<9x32x4xf32, #tpu.memory_space<vmem>>, vector<1x32x4xf32>
    %4 = vector.shape_cast %3 : vector<1x32x4xf32> to vector<32x4xf32>
    %cst = arith.constant dense<0.000000e+00> : vector<32x768xf32>
    %5 = tpu.matmul %4, %2, %cst {dimension_numbers = #tpu.dot_dimension_numbers<[1], [0], [0], [1], [0, 0, 1, 1], [], []>} : vector<32x4xf32>, vector<4x768xf32>, vector<32x768xf32> -> vector<32x768xf32>
    %c18_i32 = arith.constant 18 : i32
    %6 = tpu.dynamic_rotate %0 by %c18_i32 dim 1 : vector<4x768xf32>, i32 -> vector<4x768xf32>
    %c1 = arith.constant 1 : index
    %c0_6 = arith.constant 0 : index
    %c0_7 = arith.constant 0 : index
    %7 = vector.load %arg2[%c1, %c0_6, %c0_7] : memref<9x32x4xf32, #tpu.memory_space<vmem>>, vector<1x32x4xf32>
    %8 = vector.shape_cast %7 : vector<1x32x4xf32> to vector<32x4xf32>
    %cst_8 = arith.constant dense<0.000000e+00> : vector<32x768xf32>
    %9 = tpu.matmul %8, %6, %cst_8 {dimension_numbers = #tpu.dot_dimension_numbers<[1], [0], [0], [1], [0, 0, 1, 1], [], []>} : vector<32x4xf32>, vector<4x768xf32>, vector<32x768xf32> -> vector<32x768xf32>
    %10 = arith.addf %5, %9 : vector<32x768xf32>
    %c17_i32 = arith.constant 17 : i32
    %11 = tpu.dynamic_rotate %0 by %c17_i32 dim 1 : vector<4x768xf32>, i32 -> vector<4x768xf32>
    %c2 = arith.constant 2 : index
    %c0_9 = arith.constant 0 : index
    %c0_10 = arith.constant 0 : index
    %12 = vector.load %arg2[%c2, %c0_9, %c0_10] : memref<9x32x4xf32, #tpu.memory_space<vmem>>, vector<1x32x4xf32>
    %13 = vector.shape_cast %12 : vector<1x32x4xf32> to vector<32x4xf32>
    %cst_11 = arith.constant dense<0.000000e+00> : vector<32x768xf32>
    %14 = tpu.matmul %13, %11, %cst_11 {dimension_numbers = #tpu.dot_dimension_numbers<[1], [0], [0], [1], [0, 0, 1, 1], [], []>} : vector<32x4xf32>, vector<4x768xf32>, vector<32x768xf32> -> vector<32x768xf32>
    %15 = arith.addf %10, %14 : vector<32x768xf32>
    %c1_i32 = arith.constant 1 : i32
    %16 = tpu.dynamic_rotate %0 by %c1_i32 dim 1 : vector<4x768xf32>, i32 -> vector<4x768xf32>
    %c3 = arith.constant 3 : index
    %c0_12 = arith.constant 0 : index
    %c0_13 = arith.constant 0 : index
    %17 = vector.load %arg2[%c3, %c0_12, %c0_13] : memref<9x32x4xf32, #tpu.memory_space<vmem>>, vector<1x32x4xf32>
    %18 = vector.shape_cast %17 : vector<1x32x4xf32> to vector<32x4xf32>
    %cst_14 = arith.constant dense<0.000000e+00> : vector<32x768xf32>
    %19 = tpu.matmul %18, %16, %cst_14 {dimension_numbers = #tpu.dot_dimension_numbers<[1], [0], [0], [1], [0, 0, 1, 1], [], []>} : vector<32x4xf32>, vector<4x768xf32>, vector<32x768xf32> -> vector<32x768xf32>
    %20 = arith.addf %15, %19 : vector<32x768xf32>
    %c4 = arith.constant 4 : index
    %c0_15 = arith.constant 0 : index
    %c0_16 = arith.constant 0 : index
    %21 = vector.load %arg2[%c4, %c0_15, %c0_16] : memref<9x32x4xf32, #tpu.memory_space<vmem>>, vector<1x32x4xf32>
    %22 = vector.shape_cast %21 : vector<1x32x4xf32> to vector<32x4xf32>
    %cst_17 = arith.constant dense<0.000000e+00> : vector<32x768xf32>
    %23 = tpu.matmul %22, %0, %cst_17 {dimension_numbers = #tpu.dot_dimension_numbers<[1], [0], [0], [1], [0, 0, 1, 1], [], []>} : vector<32x4xf32>, vector<4x768xf32>, vector<32x768xf32> -> vector<32x768xf32>
    %24 = arith.addf %20, %23 : vector<32x768xf32>
    %c767_i32 = arith.constant 767 : i32
    %25 = tpu.dynamic_rotate %0 by %c767_i32 dim 1 : vector<4x768xf32>, i32 -> vector<4x768xf32>
    %c5 = arith.constant 5 : index
    %c0_18 = arith.constant 0 : index
    %c0_19 = arith.constant 0 : index
    %26 = vector.load %arg2[%c5, %c0_18, %c0_19] : memref<9x32x4xf32, #tpu.memory_space<vmem>>, vector<1x32x4xf32>
    %27 = vector.shape_cast %26 : vector<1x32x4xf32> to vector<32x4xf32>
    %cst_20 = arith.constant dense<0.000000e+00> : vector<32x768xf32>
    %28 = tpu.matmul %27, %25, %cst_20 {dimension_numbers = #tpu.dot_dimension_numbers<[1], [0], [0], [1], [0, 0, 1, 1], [], []>} : vector<32x4xf32>, vector<4x768xf32>, vector<32x768xf32> -> vector<32x768xf32>
    %29 = arith.addf %24, %28 : vector<32x768xf32>
    %c751_i32 = arith.constant 751 : i32
    %30 = tpu.dynamic_rotate %0 by %c751_i32 dim 1 : vector<4x768xf32>, i32 -> vector<4x768xf32>
    %c6 = arith.constant 6 : index
    %c0_21 = arith.constant 0 : index
    %c0_22 = arith.constant 0 : index
    %31 = vector.load %arg2[%c6, %c0_21, %c0_22] : memref<9x32x4xf32, #tpu.memory_space<vmem>>, vector<1x32x4xf32>
    %32 = vector.shape_cast %31 : vector<1x32x4xf32> to vector<32x4xf32>
    %cst_23 = arith.constant dense<0.000000e+00> : vector<32x768xf32>
    %33 = tpu.matmul %32, %30, %cst_23 {dimension_numbers = #tpu.dot_dimension_numbers<[1], [0], [0], [1], [0, 0, 1, 1], [], []>} : vector<32x4xf32>, vector<4x768xf32>, vector<32x768xf32> -> vector<32x768xf32>
    %34 = arith.addf %29, %33 : vector<32x768xf32>
    %c750_i32 = arith.constant 750 : i32
    %35 = tpu.dynamic_rotate %0 by %c750_i32 dim 1 : vector<4x768xf32>, i32 -> vector<4x768xf32>
    %c7 = arith.constant 7 : index
    %c0_24 = arith.constant 0 : index
    %c0_25 = arith.constant 0 : index
    %36 = vector.load %arg2[%c7, %c0_24, %c0_25] : memref<9x32x4xf32, #tpu.memory_space<vmem>>, vector<1x32x4xf32>
    %37 = vector.shape_cast %36 : vector<1x32x4xf32> to vector<32x4xf32>
    %cst_26 = arith.constant dense<0.000000e+00> : vector<32x768xf32>
    %38 = tpu.matmul %37, %35, %cst_26 {dimension_numbers = #tpu.dot_dimension_numbers<[1], [0], [0], [1], [0, 0, 1, 1], [], []>} : vector<32x4xf32>, vector<4x768xf32>, vector<32x768xf32> -> vector<32x768xf32>
    %39 = arith.addf %34, %38 : vector<32x768xf32>
    %c749_i32 = arith.constant 749 : i32
    %40 = tpu.dynamic_rotate %0 by %c749_i32 dim 1 : vector<4x768xf32>, i32 -> vector<4x768xf32>
    %c8 = arith.constant 8 : index
    %c0_27 = arith.constant 0 : index
    %c0_28 = arith.constant 0 : index
    %41 = vector.load %arg2[%c8, %c0_27, %c0_28] : memref<9x32x4xf32, #tpu.memory_space<vmem>>, vector<1x32x4xf32>
    %42 = vector.shape_cast %41 : vector<1x32x4xf32> to vector<32x4xf32>
    %cst_29 = arith.constant dense<0.000000e+00> : vector<32x768xf32>
    %43 = tpu.matmul %42, %40, %cst_29 {dimension_numbers = #tpu.dot_dimension_numbers<[1], [0], [0], [1], [0, 0, 1, 1], [], []>} : vector<32x4xf32>, vector<4x768xf32>, vector<32x768xf32> -> vector<32x768xf32>
    %44 = arith.addf %39, %43 : vector<32x768xf32>
    %cst_30 = arith.constant 0.000000e+00 : f32
    %45 = vector.broadcast %cst_30 : f32 to vector<32x768xf32>
    %46 = arith.maximumf %44, %45 : vector<32x768xf32>
    %47 = vector.broadcast %1 : vector<1x768xf32> to vector<32x768xf32>
    %48 = arith.mulf %46, %47 : vector<32x768xf32>
    %c0_31 = arith.constant 0 : index
    %c0_32 = arith.constant 0 : index
    %c0_33 = arith.constant 0 : index
    %49 = vector.load %arg3[%c0_31, %c0_32, %c0_33] : memref<9x8x32xf32, #tpu.memory_space<vmem>>, vector<1x8x32xf32>
    %50 = vector.shape_cast %49 : vector<1x8x32xf32> to vector<8x32xf32>
    %cst_34 = arith.constant dense<0.000000e+00> : vector<8x768xf32>
    %51 = tpu.matmul %50, %48, %cst_34 {dimension_numbers = #tpu.dot_dimension_numbers<[1], [0], [0], [1], [0, 0, 1, 1], [], []>} : vector<8x32xf32>, vector<32x768xf32>, vector<8x768xf32> -> vector<8x768xf32>
    %c19_i32_35 = arith.constant 19 : i32
    %52 = tpu.dynamic_rotate %51 by %c19_i32_35 dim 1 : vector<8x768xf32>, i32 -> vector<8x768xf32>
    %c1_36 = arith.constant 1 : index
    %c0_37 = arith.constant 0 : index
    %c0_38 = arith.constant 0 : index
    %53 = vector.load %arg3[%c1_36, %c0_37, %c0_38] : memref<9x8x32xf32, #tpu.memory_space<vmem>>, vector<1x8x32xf32>
    %54 = vector.shape_cast %53 : vector<1x8x32xf32> to vector<8x32xf32>
    %cst_39 = arith.constant dense<0.000000e+00> : vector<8x768xf32>
    %55 = tpu.matmul %54, %48, %cst_39 {dimension_numbers = #tpu.dot_dimension_numbers<[1], [0], [0], [1], [0, 0, 1, 1], [], []>} : vector<8x32xf32>, vector<32x768xf32>, vector<8x768xf32> -> vector<8x768xf32>
    %c18_i32_40 = arith.constant 18 : i32
    %56 = tpu.dynamic_rotate %55 by %c18_i32_40 dim 1 : vector<8x768xf32>, i32 -> vector<8x768xf32>
    %57 = arith.addf %52, %56 : vector<8x768xf32>
    %c2_41 = arith.constant 2 : index
    %c0_42 = arith.constant 0 : index
    %c0_43 = arith.constant 0 : index
    %58 = vector.load %arg3[%c2_41, %c0_42, %c0_43] : memref<9x8x32xf32, #tpu.memory_space<vmem>>, vector<1x8x32xf32>
    %59 = vector.shape_cast %58 : vector<1x8x32xf32> to vector<8x32xf32>
    %cst_44 = arith.constant dense<0.000000e+00> : vector<8x768xf32>
    %60 = tpu.matmul %59, %48, %cst_44 {dimension_numbers = #tpu.dot_dimension_numbers<[1], [0], [0], [1], [0, 0, 1, 1], [], []>} : vector<8x32xf32>, vector<32x768xf32>, vector<8x768xf32> -> vector<8x768xf32>
    %c17_i32_45 = arith.constant 17 : i32
    %61 = tpu.dynamic_rotate %60 by %c17_i32_45 dim 1 : vector<8x768xf32>, i32 -> vector<8x768xf32>
    %62 = arith.addf %57, %61 : vector<8x768xf32>
    %c3_46 = arith.constant 3 : index
    %c0_47 = arith.constant 0 : index
    %c0_48 = arith.constant 0 : index
    %63 = vector.load %arg3[%c3_46, %c0_47, %c0_48] : memref<9x8x32xf32, #tpu.memory_space<vmem>>, vector<1x8x32xf32>
    %64 = vector.shape_cast %63 : vector<1x8x32xf32> to vector<8x32xf32>
    %cst_49 = arith.constant dense<0.000000e+00> : vector<8x768xf32>
    %65 = tpu.matmul %64, %48, %cst_49 {dimension_numbers = #tpu.dot_dimension_numbers<[1], [0], [0], [1], [0, 0, 1, 1], [], []>} : vector<8x32xf32>, vector<32x768xf32>, vector<8x768xf32> -> vector<8x768xf32>
    %c1_i32_50 = arith.constant 1 : i32
    %66 = tpu.dynamic_rotate %65 by %c1_i32_50 dim 1 : vector<8x768xf32>, i32 -> vector<8x768xf32>
    %67 = arith.addf %62, %66 : vector<8x768xf32>
    %c4_51 = arith.constant 4 : index
    %c0_52 = arith.constant 0 : index
    %c0_53 = arith.constant 0 : index
    %68 = vector.load %arg3[%c4_51, %c0_52, %c0_53] : memref<9x8x32xf32, #tpu.memory_space<vmem>>, vector<1x8x32xf32>
    %69 = vector.shape_cast %68 : vector<1x8x32xf32> to vector<8x32xf32>
    %cst_54 = arith.constant dense<0.000000e+00> : vector<8x768xf32>
    %70 = tpu.matmul %69, %48, %cst_54 {dimension_numbers = #tpu.dot_dimension_numbers<[1], [0], [0], [1], [0, 0, 1, 1], [], []>} : vector<8x32xf32>, vector<32x768xf32>, vector<8x768xf32> -> vector<8x768xf32>
    %71 = arith.addf %67, %70 : vector<8x768xf32>
    %c5_55 = arith.constant 5 : index
    %c0_56 = arith.constant 0 : index
    %c0_57 = arith.constant 0 : index
    %72 = vector.load %arg3[%c5_55, %c0_56, %c0_57] : memref<9x8x32xf32, #tpu.memory_space<vmem>>, vector<1x8x32xf32>
    %73 = vector.shape_cast %72 : vector<1x8x32xf32> to vector<8x32xf32>
    %cst_58 = arith.constant dense<0.000000e+00> : vector<8x768xf32>
    %74 = tpu.matmul %73, %48, %cst_58 {dimension_numbers = #tpu.dot_dimension_numbers<[1], [0], [0], [1], [0, 0, 1, 1], [], []>} : vector<8x32xf32>, vector<32x768xf32>, vector<8x768xf32> -> vector<8x768xf32>
    %c767_i32_59 = arith.constant 767 : i32
    %75 = tpu.dynamic_rotate %74 by %c767_i32_59 dim 1 : vector<8x768xf32>, i32 -> vector<8x768xf32>
    %76 = arith.addf %71, %75 : vector<8x768xf32>
    %c6_60 = arith.constant 6 : index
    %c0_61 = arith.constant 0 : index
    %c0_62 = arith.constant 0 : index
    %77 = vector.load %arg3[%c6_60, %c0_61, %c0_62] : memref<9x8x32xf32, #tpu.memory_space<vmem>>, vector<1x8x32xf32>
    %78 = vector.shape_cast %77 : vector<1x8x32xf32> to vector<8x32xf32>
    %cst_63 = arith.constant dense<0.000000e+00> : vector<8x768xf32>
    %79 = tpu.matmul %78, %48, %cst_63 {dimension_numbers = #tpu.dot_dimension_numbers<[1], [0], [0], [1], [0, 0, 1, 1], [], []>} : vector<8x32xf32>, vector<32x768xf32>, vector<8x768xf32> -> vector<8x768xf32>
    %c751_i32_64 = arith.constant 751 : i32
    %80 = tpu.dynamic_rotate %79 by %c751_i32_64 dim 1 : vector<8x768xf32>, i32 -> vector<8x768xf32>
    %81 = arith.addf %76, %80 : vector<8x768xf32>
    %c7_65 = arith.constant 7 : index
    %c0_66 = arith.constant 0 : index
    %c0_67 = arith.constant 0 : index
    %82 = vector.load %arg3[%c7_65, %c0_66, %c0_67] : memref<9x8x32xf32, #tpu.memory_space<vmem>>, vector<1x8x32xf32>
    %83 = vector.shape_cast %82 : vector<1x8x32xf32> to vector<8x32xf32>
    %cst_68 = arith.constant dense<0.000000e+00> : vector<8x768xf32>
    %84 = tpu.matmul %83, %48, %cst_68 {dimension_numbers = #tpu.dot_dimension_numbers<[1], [0], [0], [1], [0, 0, 1, 1], [], []>} : vector<8x32xf32>, vector<32x768xf32>, vector<8x768xf32> -> vector<8x768xf32>
    %c750_i32_69 = arith.constant 750 : i32
    %85 = tpu.dynamic_rotate %84 by %c750_i32_69 dim 1 : vector<8x768xf32>, i32 -> vector<8x768xf32>
    %86 = arith.addf %81, %85 : vector<8x768xf32>
    %c8_70 = arith.constant 8 : index
    %c0_71 = arith.constant 0 : index
    %c0_72 = arith.constant 0 : index
    %87 = vector.load %arg3[%c8_70, %c0_71, %c0_72] : memref<9x8x32xf32, #tpu.memory_space<vmem>>, vector<1x8x32xf32>
    %88 = vector.shape_cast %87 : vector<1x8x32xf32> to vector<8x32xf32>
    %cst_73 = arith.constant dense<0.000000e+00> : vector<8x768xf32>
    %89 = tpu.matmul %88, %48, %cst_73 {dimension_numbers = #tpu.dot_dimension_numbers<[1], [0], [0], [1], [0, 0, 1, 1], [], []>} : vector<8x32xf32>, vector<32x768xf32>, vector<8x768xf32> -> vector<8x768xf32>
    %c749_i32_74 = arith.constant 749 : i32
    %90 = tpu.dynamic_rotate %89 by %c749_i32_74 dim 1 : vector<8x768xf32>, i32 -> vector<8x768xf32>
    %91 = arith.addf %86, %90 : vector<8x768xf32>
    %cst_75 = arith.constant 0.000000e+00 : f32
    %92 = vector.broadcast %cst_75 : f32 to vector<8x768xf32>
    %93 = arith.maximumf %91, %92 : vector<8x768xf32>
    %c0_76 = arith.constant 0 : index
    %c0_77 = arith.constant 0 : index
    %94 = vector.load %arg5[%c0_76, %c0_77] : memref<8x768xf32, #tpu.memory_space<vmem>>, vector<8x768xf32>
    tpu.vector_store %arg5[%c0_76, %c0_77], %93 {strides = array<i32>} : memref<8x768xf32, #tpu.memory_space<vmem>>, vector<8x768xf32>,
    return
  }
  func.func @transform_0(%arg0: i32) -> (i32, i32) {
    %c0_i32 = arith.constant 0 : i32
    %c0_i32_0 = arith.constant 0 : i32
    return %c0_i32, %arg0 : i32, i32
  }
  func.func @transform_1(%arg0: i32) -> (i32, i32, i32) {
    %c0_i32 = arith.constant 0 : i32
    %c0_i32_0 = arith.constant 0 : i32
    %c0_i32_1 = arith.constant 0 : i32
    %c0_i32_2 = arith.constant 0 : i32
    return %c0_i32, %c0_i32_0, %c0_i32_1 : i32, i32, i32
  }
  func.func @transform_2(%arg0: i32) -> (i32, i32, i32) {
    %c0_i32 = arith.constant 0 : i32
    %c0_i32_0 = arith.constant 0 : i32
    %c0_i32_1 = arith.constant 0 : i32
    %c0_i32_2 = arith.constant 0 : i32
    return %c0_i32, %c0_i32_0, %c0_i32_1 : i32, i32, i32
  }
  func.func @transform_3(%arg0: i32) -> (i32, i32) {
    %c0_i32 = arith.constant 0 : i32
    %c0_i32_0 = arith.constant 0 : i32
    %c0_i32_1 = arith.constant 0 : i32
    return %c0_i32, %c0_i32_0 : i32, i32
  }
  func.func @transform_4(%arg0: i32) -> (i32, i32) {
    %c0_i32 = arith.constant 0 : i32
    %c0_i32_0 = arith.constant 0 : i32
    return %c0_i32, %arg0 : i32, i32
  }
}

</mosaic_0001>

<llo_original>
// kernel: tpu_custom_call.1
$region0: #{tpu_custom_call.1}
  #allocation0 [shape = 'u32[]', space=smem, size = 0x4, offset = 0x4, fixed_abs, tag = 'smem constant byte address 0x4 - core index']
  #allocation1 [shape = 'u32[144,128]{1,0:T(1,128)}', space=vmem, size = 0x12000, scoped, tag = 'internal scratch']
  %s0 = inlined_call_operand.vmem [shape: f32[4,768], index: 0, kind: input, shape index: {}]
  %s1 = inlined_call_operand.vmem [shape: f32[9,32,4], index: 1, kind: input, shape index: {}]
  %s2 = inlined_call_operand.vmem [shape: f32[9,8,32], index: 2, kind: input, shape index: {}]
  %s3 = inlined_call_operand.vmem [shape: f32[1,768], index: 3, kind: input, shape index: {}]
  %s4 = inlined_call_operand.hbm [shape: f32[8,768], index: 4, kind: output, shape index: {}]
  %s5 = sld [smem:[#allocation0]]
  $region26: #{tpu_custom_call.1} parent=0
    _
  %s7 = ssub.s32 1, %s5
  %s8 = scalar_select 0, %s7, %s5
  $region1: #{tpu_custom_call.1} parent=0
    #allocation2 [shape = 'u8[24576]{0}', space=vmem, size = 0x6000, scoped, tag = 'output window, operand 0, single buffered']
    #allocation3 [shape = 's32[1]{0}', space=sflag, size = 0x4, scoped, tag = 'scoped memory for tpu_custom_call.1']
    %9 = vsyncpa [#allocation3], 0
    // Predicated region
    $region2: #{tpu_custom_call.1} parent=1 // pred_check
      _
    $region3: #{tpu_custom_call.1} parent=1 // pred_check_branch
      %11 = sbr.rel (0) target = $region5
    $region4: #{tpu_custom_call.1} parent=1 // pred_region
      _
    $region5: #{tpu_custom_call.1} parent=1 // pred_fallthru
      _
    // Predicated region
    $region6: #{tpu_custom_call.1} parent=1 // pred_check
      _
    $region7: #{tpu_custom_call.1} parent=1 // pred_check_branch
      %13 = sbr.rel (0) target = $region9
    $region8: #{tpu_custom_call.1} parent=1 // pred_region
      _
    $region9: #{tpu_custom_call.1} parent=1 // pred_fallthru
      _
    // Predicated region
    $region10: #{tpu_custom_call.1} parent=1 // pred_check
      _
    $region11: #{tpu_custom_call.1} parent=1 // pred_check_branch
      %15 = sbr.rel (0) target = $region13
    $region12: #{tpu_custom_call.1} parent=1 // pred_region
      _
    $region13: #{tpu_custom_call.1} parent=1 // pred_fallthru
      _
    // Predicated region
    $region14: #{tpu_custom_call.1} parent=1 // pred_check
      _
    $region15: #{tpu_custom_call.1} parent=1 // pred_check_branch
      %17 = sbr.rel (0) target = $region17
    $region16: #{tpu_custom_call.1} parent=1 // pred_region
      _
    $region17: #{tpu_custom_call.1} parent=1 // pred_fallthru
      _
    %v18 = vld [vmem:[%s0] sm:$0xff]
    %v19 = vld [vmem:[%s0 + $0x8] sm:$0xff]
    %v20 = vld [vmem:[%s0 + $0x10] sm:$0xff]
    %v21 = vld [vmem:[%s3] sm:$0x3f]
    %v25 = vcombine.high %v18, %v18
    %v26 = vcombine.high %v19, %v19
    %v27 = vcombine.high %v20, %v20
    %31 = vrot.lane.b32.xlu0 %v18, 19
    %v32 = vpop.permute.xlu0 %31
    %33 = vrot.lane.b32.xlu0 %v25, 19
    %v34 = vpop.permute.xlu0 %33
    %35 = vrot.lane.b32.xlu0 %v19, 19
    %v36 = vpop.permute.xlu0 %35
    %37 = vrot.lane.b32.xlu0 %v26, 19
    %v38 = vpop.permute.xlu0 %37
    %39 = vrot.lane.b32.xlu0 %v20, 19
    %v40 = vpop.permute.xlu0 %39
    %41 = vrot.lane.b32.xlu0 %v27, 19
    %v42 = vpop.permute.xlu0 %41
    %v43 = vlaneseq
    %v44 = vand.u32 %v43, 127
    %vm45 = vcmp.lt.s32.totalorder %v44, 19
    %v46 = vsel %vm45, %v40, %v42
    %v47 = vsel %vm45, %v38, %v40
    %v48 = vsel %vm45, %v36, %v38
    %v49 = vsel %vm45, %v34, %v36
    %v50 = vsel %vm45, %v32, %v34
    %v51 = vsel %vm45, %v42, %v32
    %v52 = vld [vmem:[%s1] sm:$0xff]
    %v53 = vld [vmem:[%s1 + $0x8] sm:$0xff]
    %v54 = vld [vmem:[%s1 + $0x10] sm:$0xff]
    %v55 = vld [vmem:[%s1 + $0x18] sm:$0xff]
    %56 = vrot.lane.b32.xlu0 %v18, 18
    %v57 = vpop.permute.xlu0 %56
    %58 = vrot.lane.b32.xlu0 %v25, 18
    %v59 = vpop.permute.xlu0 %58
    %60 = vrot.lane.b32.xlu0 %v19, 18
    %v61 = vpop.permute.xlu0 %60
    %62 = vrot.lane.b32.xlu0 %v26, 18
    %v63 = vpop.permute.xlu0 %62
    %64 = vrot.lane.b32.xlu0 %v20, 18
    %v65 = vpop.permute.xlu0 %64
    %66 = vrot.lane.b32.xlu0 %v27, 18
    %v67 = vpop.permute.xlu0 %66
    %vm68 = vcmp.lt.s32.totalorder %v44, 18
    %v69 = vsel %vm68, %v65, %v67
    %v70 = vsel %vm68, %v63, %v65
    %v71 = vsel %vm68, %v61, %v63
    %v72 = vsel %vm68, %v59, %v61
    %v73 = vsel %vm68, %v57, %v59
    %v74 = vsel %vm68, %v67, %v57
    %s75 = scalar_lea.vmem %s1, 32
    %v76 = vld [vmem:[%s75] sm:$0xff]
    %v77 = vld [vmem:[%s75 + $0x8] sm:$0xff]
    %v78 = vld [vmem:[%s75 + $0x10] sm:$0xff]
    %v79 = vld [vmem:[%s75 + $0x18] sm:$0xff]
    %vm80 = vcmask 31744
    %v82 = vsel %vm80, %v76, 0
    %v85 = vsel %vm80, %v77, 0
    %v88 = vsel %vm80, %v78, 0
    %v91 = vsel %vm80, %v79, 0
    %vm93 = vcmask 1043456
    %v95 = vsel %vm93, %v74, 0
    %v98 = vsel %vm93, %v73, 0
    %v101 = vsel %vm93, %v72, 0
    %v104 = vsel %vm93, %v71, 0
    %v107 = vsel %vm93, %v70, 0
    %v110 = vsel %vm93, %v69, 0
    %112 = vmatprep.subr.mxu0 %v98
    %113 = vmatpush1.msra.mxu0 %v95
    %114 = vmatprep.subr.mxu0 0.0
    %115 = vmatpush1.msra.mxu0 0.0
    %116 = vmatprep.subr.mxu0 0.0
    %117 = vmatpush1.msra.mxu0 0.0
    %118 = vmatprep.subr.mxu0 0.0
    %119 = vmatpush1.msra.mxu0 0.0
    %120 = vmatprep.subr.mxu0 0.0
    %121 = vmatpush1.msra.mxu0 0.0
    %122 = vmatprep.subr.mxu0 0.0
    %123 = vmatpush1.msra.mxu0 0.0
    %124 = vmatprep.subr.mxu0 0.0
    %125 = vmatpush1.msra.mxu0 0.0
    %126 = vmatprep.subr.mxu0 0.0
    %127 = vmatpush1.msra.mxu0 0.0
    %128 = vmatprep.subr.mxu0 0.0
    %129 = vmatpush1.msra.mxu0 0.0
    %130 = vmatprep.subr.mxu0 0.0
    %131 = vmatpush1.msra.mxu0 0.0
    %132 = vmatprep.subr.mxu0 0.0
    %133 = vmatpush1.msra.mxu0 0.0
    %134 = vmatprep.subr.mxu0 0.0
    %135 = vmatpush1.msra.mxu0 0.0
    %136 = vmatprep.subr.mxu0 0.0
    %137 = vmatpush1.msra.mxu0 0.0
    %138 = vmatprep.subr.mxu0 0.0
    %139 = vmatpush1.msra.mxu0 0.0
    %140 = vmatprep.subr.mxu0 0.0
    %141 = vmatpush1.msra.mxu0 0.0
    %142 = vmatprep.subr.mxu0 0.0
    %143 = vmatpush1.msra.mxu0 0.0
    %144 = vmatprep.subr.mxu0 0.0
    %145 = vmatpush1.msra.mxu0 0.0
    %146 = vmatprep.subr.mxu0 0.0
    %147 = vmatpush1.msra.mxu0 0.0
    %148 = vmatprep.subr.mxu0 0.0
    %149 = vmatpush1.msra.mxu0 0.0
    %150 = vmatprep.subr.mxu0 0.0
    %151 = vmatpush1.msra.mxu0 0.0
    %152 = vmatprep.subr.mxu0 0.0
    %153 = vmatpush1.msra.mxu0 0.0
    %154 = vmatprep.subr.mxu0 0.0
    %155 = vmatpush1.msra.mxu0 0.0
    %156 = vmatprep.subr.mxu0 0.0
    %157 = vmatpush1.msra.mxu0 0.0
    %158 = vmatprep.subr.mxu0 0.0
    %159 = vmatpush1.msra.mxu0 0.0
    %160 = vmatprep.subr.mxu0 0.0
    %161 = vmatpush1.msra.mxu0 0.0
    %162 = vmatprep.subr.mxu0 0.0
    %163 = vmatpush1.msra.mxu0 0.0
    %164 = vmatprep.subr.mxu0 0.0
    %165 = vmatpush1.msra.mxu0 0.0
    %166 = vmatprep.subr.mxu0 0.0
    %167 = vmatpush1.msra.mxu0 0.0
    %168 = vmatprep.subr.mxu0 0.0
    %169 = vmatpush1.msra.mxu0 0.0
    %170 = vmatprep.subr.mxu0 0.0
    %171 = vmatpush1.msra.mxu0 0.0
    %172 = vmatprep.subr.mxu0 0.0
    %173 = vmatpush1.msra.mxu0 0.0
    %174 = vmatprep.subr.mxu0 0.0
    %175 = vmatpush1.msra.mxu0 0.0
    %176 = vmatprep.mubr.f32.mxu0 0.0
    %177 = vmatmul.mubr.f32.gmra.mrb[0].mxu0 %v82
    %v178 = vpop.f32.mrb[0].mxu0
    %v179 = vadd.f32 0.0, %v178
    %v180 = vpop.f32.mrb[0].mxu0
    %v181 = vadd.f32 0.0, %v180
    %182 = vmatprep.mubr.f32.mxu0 0.0
    %183 = vmatmul.mubr.f32.gmra.mrb[0].mxu0 %v85
    %v184 = vpop.f32.mrb[0].mxu0
    %v185 = vadd.f32 0.0, %v184
    %v186 = vpop.f32.mrb[0].mxu0
    %v187 = vadd.f32 0.0, %v186
    %188 = vmatprep.mubr.f32.mxu0 0.0
    %189 = vmatmul.mubr.f32.gmra.mrb[0].mxu0 %v88
    %v190 = vpop.f32.mrb[0].mxu0
    %v191 = vadd.f32 0.0, %v190
    %v192 = vpop.f32.mrb[0].mxu0
    %v193 = vadd.f32 0.0, %v192
    %194 = vmatprep.mubr.f32.mxu0 0.0
    %195 = vmatmul.mubr.f32.gmra.mrb[0].mxu0 %v91
    %v196 = vpop.f32.mrb[0].mxu0
    %v197 = vadd.f32 0.0, %v196
    %v198 = vpop.f32.mrb[0].mxu0
    %v199 = vadd.f32 0.0, %v198
    %200 = vdwg.mxu0
    %201 = vmatprep.subr.mxu0 %v104
    %202 = vmatpush1.msra.mxu0 %v101
    %203 = vmatprep.subr.mxu0 0.0
    %204 = vmatpush1.msra.mxu0 0.0
    %205 = vmatprep.subr.mxu0 0.0
    %206 = vmatpush1.msra.mxu0 0.0
    %207 = vmatprep.subr.mxu0 0.0
    %208 = vmatpush1.msra.mxu0 0.0
    %209 = vmatprep.subr.mxu0 0.0
    %210 = vmatpush1.msra.mxu0 0.0
    %211 = vmatprep.subr.mxu0 0.0
    %212 = vmatpush1.msra.mxu0 0.0
    %213 = vmatprep.subr.mxu0 0.0
    %214 = vmatpush1.msra.mxu0 0.0
    %215 = vmatprep.subr.mxu0 0.0
    %216 = vmatpush1.msra.mxu0 0.0
    %217 = vmatprep.subr.mxu0 0.0
    %218 = vmatpush1.msra.mxu0 0.0
    %219 = vmatprep.subr.mxu0 0.0
    %220 = vmatpush1.msra.mxu0 0.0
    %221 = vmatprep.subr.mxu0 0.0
    %222 = vmatpush1.msra.mxu0 0.0
    %223 = vmatprep.subr.mxu0 0.0
    %224 = vmatpush1.msra.mxu0 0.0
    %225 = vmatprep.subr.mxu0 0.0
    %226 = vmatpush1.msra.mxu0 0.0
    %227 = vmatprep.subr.mxu0 0.0
    %228 = vmatpush1.msra.mxu0 0.0
    %229 = vmatprep.subr.mxu0 0.0
    %230 = vmatpush1.msra.mxu0 0.0
    %231 = vmatprep.subr.mxu0 0.0
    %232 = vmatpush1.msra.mxu0 0.0
    %233 = vmatprep.subr.mxu0 0.0
    %234 = vmatpush1.msra.mxu0 0.0
    %235 = vmatprep.subr.mxu0 0.0
    %236 = vmatpush1.msra.mxu0 0.0
    %237 = vmatprep.subr.mxu0 0.0
    %238 = vmatpush1.msra.mxu0 0.0
    %239 = vmatprep.subr.mxu0 0.0
    %240 = vmatpush1.msra.mxu0 0.0
    %241 = vmatprep.subr.mxu0 0.0
    %242 = vmatpush1.msra.mxu0 0.0
    %243 = vmatprep.subr.mxu0 0.0
    %244 = vmatpush1.msra.mxu0 0.0
    %245 = vmatprep.subr.mxu0 0.0
    %246 = vmatpush1.msra.mxu0 0.0
    %247 = vmatprep.subr.mxu0 0.0
    %248 = vmatpush1.msra.mxu0 0.0
    %249 = vmatprep.subr.mxu0 0.0
    %250 = vmatpush1.msra.mxu0 0.0
    %251 = vmatprep.subr.mxu0 0.0
    %252 = vmatpush1.msra.mxu0 0.0
    %253 = vmatprep.subr.mxu0 0.0
    %254 = vmatpush1.msra.mxu0 0.0
    %255 = vmatprep.subr.mxu0 0.0
    %256 = vmatpush1.msra.mxu0 0.0
    %257 = vmatprep.subr.mxu0 0.0
    %258 = vmatpush1.msra.mxu0 0.0
    %259 = vmatprep.subr.mxu0 0.0
    %260 = vmatpush1.msra.mxu0 0.0
    %261 = vmatprep.subr.mxu0 0.0
    %262 = vmatpush1.msra.mxu0 0.0
    %263 = vmatprep.subr.mxu0 0.0
    %264 = vmatpush1.msra.mxu0 0.0
    %265 = vmatprep.mubr.f32.mxu0 0.0
    %266 = vmatmul.mubr.f32.gmra.mrb[0].mxu0 %v82
    %v267 = vpop.f32.mrb[0].mxu0
    %v268 = vadd.f32 0.0, %v267
    %v269 = vpop.f32.mrb[0].mxu0
    %v270 = vadd.f32 0.0, %v269
    %271 = vmatprep.mubr.f32.mxu0 0.0
    %272 = vmatmul.mubr.f32.gmra.mrb[0].mxu0 %v85
    %v273 = vpop.f32.mrb[0].mxu0
    %v274 = vadd.f32 0.0, %v273
    %v275 = vpop.f32.mrb[0].mxu0
    %v276 = vadd.f32 0.0, %v275
    %277 = vmatprep.mubr.f32.mxu0 0.0
    %278 = vmatmul.mubr.f32.gmra.mrb[0].mxu0 %v88
    %v279 = vpop.f32.mrb[0].mxu0
    %v280 = vadd.f32 0.0, %v279
    %v281 = vpop.f32.mrb[0].mxu0
    %v282 = vadd.f32 0.0, %v281
    %283 = vmatprep.mubr.f32.mxu0 0.0
    %284 = vmatmul.mubr.f32.gmra.mrb[0].mxu0 %v91
    %v285 = vpop.f32.mrb[0].mxu0
    %v286 = vadd.f32 0.0, %v285
    %v287 = vpop.f32.mrb[0].mxu0
    %v288 = vadd.f32 0.0, %v287
    %289 = vdwg.mxu0
    %290 = vmatprep.subr.mxu0 %v110
    %291 = vmatpush1.msra.mxu0 %v107
    %292 = vmatprep.subr.mxu0 0.0
    %293 = vmatpush1.msra.mxu0 0.0
    %294 = vmatprep.subr.mxu0 0.0
    %295 = vmatpush1.msra.mxu0 0.0
    %296 = vmatprep.subr.mxu0 0.0
    %297 = vmatpush1.msra.mxu0 0.0
    %298 = vmatprep.subr.mxu0 0.0
    %299 = vmatpush1.msra.mxu0 0.0
    %300 = vmatprep.subr.mxu0 0.0
    %301 = vmatpush1.msra.mxu0 0.0
    %302 = vmatprep.subr.mxu0 0.0
    %303 = vmatpush1.msra.mxu0 0.0
    %304 = vmatprep.subr.mxu0 0.0
    %305 = vmatpush1.msra.mxu0 0.0
    %306 = vmatprep.subr.mxu0 0.0
    %307 = vmatpush1.msra.mxu0 0.0
    %308 = vmatprep.subr.mxu0 0.0
    %309 = vmatpush1.msra.mxu0 0.0
    %310 = vmatprep.subr.mxu0 0.0
    %311 = vmatpush1.msra.mxu0 0.0
    %312 = vmatprep.subr.mxu0 0.0
    %313 = vmatpush1.msra.mxu0 0.0
    %314 = vmatprep.subr.mxu0 0.0
    %315 = vmatpush1.msra.mxu0 0.0
    %316 = vmatprep.subr.mxu0 0.0
    %317 = vmatpush1.msra.mxu0 0.0
    %318 = vmatprep.subr.mxu0 0.0
    %319 = vmatpush1.msra.mxu0 0.0
    %320 = vmatprep.subr.mxu0 0.0
    %321 = vmatpush1.msra.mxu0 0.0
    %322 = vmatprep.subr.mxu0 0.0
    %323 = vmatpush1.msra.mxu0 0.0
    %324 = vmatprep.subr.mxu0 0.0
    %325 = vmatpush1.msra.mxu0 0.0
    %326 = vmatprep.subr.mxu0 0.0
    %327 = vmatpush1.msra.mxu0 0.0
    %328 = vmatprep.subr.mxu0 0.0
    %329 = vmatpush1.msra.mxu0 0.0
    %330 = vmatprep.subr.mxu0 0.0
    %331 = vmatpush1.msra.mxu0 0.0
    %332 = vmatprep.subr.mxu0 0.0
    %333 = vmatpush1.msra.mxu0 0.0
    %334 = vmatprep.subr.mxu0 0.0
    %335 = vmatpush1.msra.mxu0 0.0
    %336 = vmatprep.subr.mxu0 0.0
    %337 = vmatpush1.msra.mxu0 0.0
    %338 = vmatprep.subr.mxu0 0.0
    %339 = vmatpush1.msra.mxu0 0.0
    %340 = vmatprep.subr.mxu0 0.0
    %341 = vmatpush1.msra.mxu0 0.0
    %342 = vmatprep.subr.mxu0 0.0
    %343 = vmatpush1.msra.mxu0 0.0
    %344 = vmatprep.subr.mxu0 0.0
    %345 = vmatpush1.msra.mxu0 0.0
    %346 = vmatprep.subr.mxu0 0.0
    %347 = vmatpush1.msra.mxu0 0.0
    %348 = vmatprep.subr.mxu0 0.0
    %349 = vmatpush1.msra.mxu0 0.0
    %350 = vmatprep.subr.mxu0 0.0
    %351 = vmatpush1.msra.mxu0 0.0
    %352 = vmatprep.subr.mxu0 0.0
    %353 = vmatpush1.msra.mxu0 0.0
    %354 = vmatprep.mubr.f32.mxu0 0.0
    %355 = vmatmul.mubr.f32.gmra.mrb[0].mxu0 %v82
    %v356 = vpop.f32.mrb[0].mxu0
    %v357 = vadd.f32 0.0, %v356
    %v358 = vpop.f32.mrb[0].mxu0
    %v359 = vadd.f32 0.0, %v358
    %360 = vmatprep.mubr.f32.mxu0 0.0
    %361 = vmatmul.mubr.f32.gmra.mrb[0].mxu0 %v85
    %v362 = vpop.f32.mrb[0].mxu0
    %v363 = vadd.f32 0.0, %v362
    %v364 = vpop.f32.mrb[0].mxu0
    %v365 = vadd.f32 0.0, %v364
    %366 = vmatprep.mubr.f32.mxu0 0.0
    %367 = vmatmul.mubr.f32.gmra.mrb[0].mxu0 %v88
    %v368 = vpop.f32.mrb[0].mxu0
    %v369 = vadd.f32 0.0, %v368
    %v370 = vpop.f32.mrb[0].mxu0
    %v371 = vadd.f32 0.0, %v370
    %372 = vmatprep.mubr.f32.mxu0 0.0
    %373 = vmatmul.mubr.f32.gmra.mrb[0].mxu0 %v91
    %v374 = vpop.f32.mrb[0].mxu0
    %v375 = vadd.f32 0.0, %v374
    %v376 = vpop.f32.mrb[0].mxu0
    %v377 = vadd.f32 0.0, %v376
    %378 = vdwg.mxu0
    %v380 = vsel %vm80, %v52, 0
    %v383 = vsel %vm80, %v53, 0
    %v386 = vsel %vm80, %v54, 0
    %v389 = vsel %vm80, %v55, 0
    %v392 = vsel %vm93, %v51, 0
    %v395 = vsel %vm93, %v50, 0
    %v398 = vsel %vm93, %v49, 0
    %v401 = vsel %vm93, %v48, 0
    %v404 = vsel %vm93, %v47, 0
    %v407 = vsel %vm93, %v46, 0
    %409 = vmatprep.subr.mxu0 %v395
    %410 = vmatpush1.msra.mxu0 %v392
    %411 = vmatprep.subr.mxu0 0.0
    %412 = vmatpush1.msra.mxu0 0.0
    %413 = vmatprep.subr.mxu0 0.0
    %414 = vmatpush1.msra.mxu0 0.0
    %415 = vmatprep.subr.mxu0 0.0
    %416 = vmatpush1.msra.mxu0 0.0
    %417 = vmatprep.subr.mxu0 0.0
    %418 = vmatpush1.msra.mxu0 0.0
    %419 = vmatprep.subr.mxu0 0.0
    %420 = vmatpush1.msra.mxu0 0.0
    %421 = vmatprep.subr.mxu0 0.0
    %422 = vmatpush1.msra.mxu0 0.0
    %423 = vmatprep.subr.mxu0 0.0
    %424 = vmatpush1.msra.mxu0 0.0
    %425 = vmatprep.subr.mxu0 0.0
    %426 = vmatpush1.msra.mxu0 0.0
    %427 = vmatprep.subr.mxu0 0.0
    %428 = vmatpush1.msra.mxu0 0.0
    %429 = vmatprep.subr.mxu0 0.0
    %430 = vmatpush1.msra.mxu0 0.0
    %431 = vmatprep.subr.mxu0 0.0
    %432 = vmatpush1.msra.mxu0 0.0
    %433 = vmatprep.subr.mxu0 0.0
    %434 = vmatpush1.msra.mxu0 0.0
    %435 = vmatprep.subr.mxu0 0.0
    %436 = vmatpush1.msra.mxu0 0.0
    %437 = vmatprep.subr.mxu0 0.0
    %438 = vmatpush1.msra.mxu0 0.0
    %439 = vmatprep.subr.mxu0 0.0
    %440 = vmatpush1.msra.mxu0 0.0
    %441 = vmatprep.subr.mxu0 0.0
    %442 = vmatpush1.msra.mxu0 0.0
    %443 = vmatprep.subr.mxu0 0.0
    %444 = vmatpush1.msra.mxu0 0.0
    %445 = vmatprep.subr.mxu0 0.0
    %446 = vmatpush1.msra.mxu0 0.0
    %447 = vmatprep.subr.mxu0 0.0
    %448 = vmatpush1.msra.mxu0 0.0
    %449 = vmatprep.subr.mxu0 0.0
    %450 = vmatpush1.msra.mxu0 0.0
    %451 = vmatprep.subr.mxu0 0.0
    %452 = vmatpush1.msra.mxu0 0.0
    %453 = vmatprep.subr.mxu0 0.0
    %454 = vmatpush1.msra.mxu0 0.0
    %455 = vmatprep.subr.mxu0 0.0
    %456 = vmatpush1.msra.mxu0 0.0
    %457 = vmatprep.subr.mxu0 0.0
    %458 = vmatpush1.msra.mxu0 0.0
    %459 = vmatprep.subr.mxu0 0.0
    %460 = vmatpush1.msra.mxu0 0.0
    %461 = vmatprep.subr.mxu0 0.0
    %462 = vmatpush1.msra.mxu0 0.0
    %463 = vmatprep.subr.mxu0 0.0
    %464 = vmatpush1.msra.mxu0 0.0
    %465 = vmatprep.subr.mxu0 0.0
    %466 = vmatpush1.msra.mxu0 0.0
    %467 = vmatprep.subr.mxu0 0.0
    %468 = vmatpush1.msra.mxu0 0.0
    %469 = vmatprep.subr.mxu0 0.0
    %470 = vmatpush1.msra.mxu0 0.0
    %471 = vmatprep.subr.mxu0 0.0
    %472 = vmatpush1.msra.mxu0 0.0
    %473 = vmatprep.mubr.f32.mxu0 0.0
    %474 = vmatmul.mubr.f32.gmra.mrb[0].mxu0 %v380
    %v475 = vpop.f32.mrb[0].mxu0
    %v476 = vadd.f32 %v179, %v475
    %v477 = vpop.f32.mrb[0].mxu0
    %v478 = vadd.f32 %v181, %v477
    %479 = vmatprep.mubr.f32.mxu0 0.0
    %480 = vmatmul.mubr.f32.gmra.mrb[0].mxu0 %v383
    %v481 = vpop.f32.mrb[0].mxu0
    %v482 = vadd.f32 %v185, %v481
    %v483 = vpop.f32.mrb[0].mxu0
    %v484 = vadd.f32 %v187, %v483
    %485 = vmatprep.mubr.f32.mxu0 0.0
    %486 = vmatmul.mubr.f32.gmra.mrb[0].mxu0 %v386
    %v487 = vpop.f32.mrb[0].mxu0
    %v488 = vadd.f32 %v191, %v487
    %v489 = vpop.f32.mrb[0].mxu0
    %v490 = vadd.f32 %v193, %v489
    %491 = vmatprep.mubr.f32.mxu0 0.0
    %492 = vmatmul.mubr.f32.gmra.mrb[0].mxu0 %v389
    %v493 = vpop.f32.mrb[0].mxu0
    %v494 = vadd.f32 %v197, %v493
    %v495 = vpop.f32.mrb[0].mxu0
    %v496 = vadd.f32 %v199, %v495
    %497 = vdwg.mxu0
    %498 = vmatprep.subr.mxu0 %v401
    %499 = vmatpush1.msra.mxu0 %v398
    %500 = vmatprep.subr.mxu0 0.0
    %501 = vmatpush1.msra.mxu0 0.0
    %502 = vmatprep.subr.mxu0 0.0
    %503 = vmatpush1.msra.mxu0 0.0
    %504 = vmatprep.subr.mxu0 0.0
    %505 = vmatpush1.msra.mxu0 0.0
    %506 = vmatprep.subr.mxu0 0.0
    %507 = vmatpush1.msra.mxu0 0.0
    %508 = vmatprep.subr.mxu0 0.0
    %509 = vmatpush1.msra.mxu0 0.0
    %510 = vmatprep.subr.mxu0 0.0
    %511 = vmatpush1.msra.mxu0 0.0
    %512 = vmatprep.subr.mxu0 0.0
    %513 = vmatpush1.msra.mxu0 0.0
    %514 = vmatprep.subr.mxu0 0.0
    %515 = vmatpush1.msra.mxu0 0.0
    %516 = vmatprep.subr.mxu0 0.0
    %517 = vmatpush1.msra.mxu0 0.0
    %518 = vmatprep.subr.mxu0 0.0
    %519 = vmatpush1.msra.mxu0 0.0
    %520 = vmatprep.subr.mxu0 0.0
    %521 = vmatpush1.msra.mxu0 0.0
    %522 = vmatprep.subr.mxu0 0.0
    %523 = vmatpush1.msra.mxu0 0.0
    %524 = vmatprep.subr.mxu0 0.0
    %525 = vmatpush1.msra.mxu0 0.0
    %526 = vmatprep.subr.mxu0 0.0
    %527 = vmatpush1.msra.mxu0 0.0
    %528 = vmatprep.subr.mxu0 0.0
    %529 = vmatpush1.msra.mxu0 0.0
    %530 = vmatprep.subr.mxu0 0.0
    %531 = vmatpush1.msra.mxu0 0.0
    %532 = vmatprep.subr.mxu0 0.0
    %533 = vmatpush1.msra.mxu0 0.0
    %534 = vmatprep.subr.mxu0 0.0
    %535 = vmatpush1.msra.mxu0 0.0
    %536 = vmatprep.subr.mxu0 0.0
    %537 = vmatpush1.msra.mxu0 0.0
    %538 = vmatprep.subr.mxu0 0.0
    %539 = vmatpush1.msra.mxu0 0.0
    %540 = vmatprep.subr.mxu0 0.0
    %541 = vmatpush1.msra.mxu0 0.0
    %542 = vmatprep.subr.mxu0 0.0
    %543 = vmatpush1.msra.mxu0 0.0
    %544 = vmatprep.subr.mxu0 0.0
    %545 = vmatpush1.msra.mxu0 0.0
    %546 = vmatprep.subr.mxu0 0.0
    %547 = vmatpush1.msra.mxu0 0.0
    %548 = vmatprep.subr.mxu0 0.0
    %549 = vmatpush1.msra.mxu0 0.0
    %550 = vmatprep.subr.mxu0 0.0
    %551 = vmatpush1.msra.mxu0 0.0
    %552 = vmatprep.subr.mxu0 0.0
    %553 = vmatpush1.msra.mxu0 0.0
    %554 = vmatprep.subr.mxu0 0.0
    %555 = vmatpush1.msra.mxu0 0.0
    %556 = vmatprep.subr.mxu0 0.0
    %557 = vmatpush1.msra.mxu0 0.0
    %558 = vmatprep.subr.mxu0 0.0
    %559 = vmatpush1.msra.mxu0 0.0
    %560 = vmatprep.subr.mxu0 0.0
    %561 = vmatpush1.msra.mxu0 0.0
    %562 = vmatprep.mubr.f32.mxu0 0.0
    %563 = vmatmul.mubr.f32.gmra.mrb[0].mxu0 %v380
    %v564 = vpop.f32.mrb[0].mxu0
    %v565 = vadd.f32 %v268, %v564
    %v566 = vpop.f32.mrb[0].mxu0
    %v567 = vadd.f32 %v270, %v566
    %568 = vmatprep.mubr.f32.mxu0 0.0
    %569 = vmatmul.mubr.f32.gmra.mrb[0].mxu0 %v383
    %v570 = vpop.f32.mrb[0].mxu0
    %v571 = vadd.f32 %v274, %v570
    %v572 = vpop.f32.mrb[0].mxu0
    %v573 = vadd.f32 %v276, %v572
    %574 = vmatprep.mubr.f32.mxu0 0.0
    %575 = vmatmul.mubr.f32.gmra.mrb[0].mxu0 %v386
    %v576 = vpop.f32.mrb[0].mxu0
    %v577 = vadd.f32 %v280, %v576
    %v578 = vpop.f32.mrb[0].mxu0
    %v579 = vadd.f32 %v282, %v578
    %580 = vmatprep.mubr.f32.mxu0 0.0
    %581 = vmatmul.mubr.f32.gmra.mrb[0].mxu0 %v389
    %v582 = vpop.f32.mrb[0].mxu0
    %v583 = vadd.f32 %v286, %v582
    %v584 = vpop.f32.mrb[0].mxu0
    %v585 = vadd.f32 %v288, %v584
    %586 = vdwg.mxu0
    %587 = vmatprep.subr.mxu0 %v407
    %588 = vmatpush1.msra.mxu0 %v404
    %589 = vmatprep.subr.mxu0 0.0
    %590 = vmatpush1.msra.mxu0 0.0
    %591 = vmatprep.subr.mxu0 0.0
    %592 = vmatpush1.msra.mxu0 0.0
    %593 = vmatprep.subr.mxu0 0.0
    %594 = vmatpush1.msra.mxu0 0.0
    %595 = vmatprep.subr.mxu0 0.0
    %596 = vmatpush1.msra.mxu0 0.0
    %597 = vmatprep.subr.mxu0 0.0
    %598 = vmatpush1.msra.mxu0 0.0
    %599 = vmatprep.subr.mxu0 0.0
    %600 = vmatpush1.msra.mxu0 0.0
    %601 = vmatprep.subr.mxu0 0.0
    %602 = vmatpush1.msra.mxu0 0.0
    %603 = vmatprep.subr.mxu0 0.0
    %604 = vmatpush1.msra.mxu0 0.0
    %605 = vmatprep.subr.mxu0 0.0
    %606 = vmatpush1.msra.mxu0 0.0
    %607 = vmatprep.subr.mxu0 0.0
    %608 = vmatpush1.msra.mxu0 0.0
    %609 = vmatprep.subr.mxu0 0.0
    %610 = vmatpush1.msra.mxu0 0.0
    %611 = vmatprep.subr.mxu0 0.0
    %612 = vmatpush1.msra.mxu0 0.0
    %613 = vmatprep.subr.mxu0 0.0
    %614 = vmatpush1.msra.mxu0 0.0
    %615 = vmatprep.subr.mxu0 0.0
    %616 = vmatpush1.msra.mxu0 0.0
    %617 = vmatprep.subr.mxu0 0.0
    %618 = vmatpush1.msra.mxu0 0.0
    %619 = vmatprep.subr.mxu0 0.0
    %620 = vmatpush1.msra.mxu0 0.0
    %621 = vmatprep.subr.mxu0 0.0
    %622 = vmatpush1.msra.mxu0 0.0
    %623 = vmatprep.subr.mxu0 0.0
    %624 = vmatpush1.msra.mxu0 0.0
    %625 = vmatprep.subr.mxu0 0.0
    %626 = vmatpush1.msra.mxu0 0.0
    %627 = vmatprep.subr.mxu0 0.0
    %628 = vmatpush1.msra.mxu0 0.0
    %629 = vmatprep.subr.mxu0 0.0
    %630 = vmatpush1.msra.mxu0 0.0
    %631 = vmatprep.subr.mxu0 0.0
    %632 = vmatpush1.msra.mxu0 0.0
    %633 = vmatprep.subr.mxu0 0.0
    %634 = vmatpush1.msra.mxu0 0.0
    %635 = vmatprep.subr.mxu0 0.0
    %636 = vmatpush1.msra.mxu0 0.0
    %637 = vmatprep.subr.mxu0 0.0
    %638 = vmatpush1.msra.mxu0 0.0
    %639 = vmatprep.subr.mxu0 0.0
    %640 = vmatpush1.msra.mxu0 0.0
    %641 = vmatprep.subr.mxu0 0.0
    %642 = vmatpush1.msra.mxu0 0.0
    %643 = vmatprep.subr.mxu0 0.0
    %644 = vmatpush1.msra.mxu0 0.0
    %645 = vmatprep.subr.mxu0 0.0
    %646 = vmatpush1.msra.mxu0 0.0
    %647 = vmatprep.subr.mxu0 0.0
    %648 = vmatpush1.msra.mxu0 0.0
    %649 = vmatprep.subr.mxu0 0.0
    %650 = vmatpush1.msra.mxu0 0.0
    %651 = vmatprep.mubr.f32.mxu0 0.0
    %652 = vmatmul.mubr.f32.gmra.mrb[0].mxu0 %v380
    %v653 = vpop.f32.mrb[0].mxu0
    %v654 = vadd.f32 %v357, %v653
    %v655 = vpop.f32.mrb[0].mxu0
    %v656 = vadd.f32 %v359, %v655
    %657 = vmatprep.mubr.f32.mxu0 0.0
    %658 = vmatmul.mubr.f32.gmra.mrb[0].mxu0 %v383
    %v659 = vpop.f32.mrb[0].mxu0
    %v660 = vadd.f32 %v363, %v659
    %v661 = vpop.f32.mrb[0].mxu0
    %v662 = vadd.f32 %v365, %v661
    %663 = vmatprep.mubr.f32.mxu0 0.0
    %664 = vmatmul.mubr.f32.gmra.mrb[0].mxu0 %v386
    %v665 = vpop.f32.mrb[0].mxu0
    %v666 = vadd.f32 %v369, %v665
    %v667 = vpop.f32.mrb[0].mxu0
    %v668 = vadd.f32 %v371, %v667
    %669 = vmatprep.mubr.f32.mxu0 0.0
    %670 = vmatmul.mubr.f32.gmra.mrb[0].mxu0 %v389
    %v671 = vpop.f32.mrb[0].mxu0
    %v672 = vadd.f32 %v375, %v671
    %v673 = vpop.f32.mrb[0].mxu0
    %v674 = vadd.f32 %v377, %v673
    %675 = vdwg.mxu0
    %676 = vrot.lane.b32.xlu0 %v18, 17
    %v677 = vpop.permute.xlu0 %676
    %678 = vrot.lane.b32.xlu0 %v25, 17
    %v679 = vpop.permute.xlu0 %678
    %680 = vrot.lane.b32.xlu0 %v19, 17
    %v681 = vpop.permute.xlu0 %680
    %682 = vrot.lane.b32.xlu0 %v26, 17
    %v683 = vpop.permute.xlu0 %682
    %684 = vrot.lane.b32.xlu0 %v20, 17
    %v685 = vpop.permute.xlu0 %684
    %686 = vrot.lane.b32.xlu0 %v27, 17
    %v687 = vpop.permute.xlu0 %686
    %vm688 = vcmp.lt.s32.totalorder %v44, 17
    %v689 = vsel %vm688, %v685, %v687
    %v690 = vsel %vm688, %v683, %v685
    %v691 = vsel %vm688, %v681, %v683
    %v692 = vsel %vm688, %v679, %v681
    %v693 = vsel %vm688, %v677, %v679
    %v694 = vsel %vm688, %v687, %v677
    %s695 = scalar_lea.vmem %s1, 64
    %v696 = vld [vmem:[%s695] sm:$0xff]
    %v697 = vld [vmem:[%s695 + $0x8] sm:$0xff]
    %v698 = vld [vmem:[%s695 + $0x10] sm:$0xff]
    %v699 = vld [vmem:[%s695 + $0x18] sm:$0xff]
    %v701 = vsel %vm80, %v696, 0
    %v704 = vsel %vm80, %v697, 0
    %v707 = vsel %vm80, %v698, 0
    %v710 = vsel %vm80, %v699, 0
    %v713 = vsel %vm93, %v694, 0
    %v716 = vsel %vm93, %v693, 0
    %v719 = vsel %vm93, %v692, 0
    %v722 = vsel %vm93, %v691, 0
    %v725 = vsel %vm93, %v690, 0
    %v728 = vsel %vm93, %v689, 0
    %730 = vmatprep.subr.mxu0 %v716
    %731 = vmatpush1.msra.mxu0 %v713
    %732 = vmatprep.subr.mxu0 0.0
    %733 = vmatpush1.msra.mxu0 0.0
    %734 = vmatprep.subr.mxu0 0.0
    %735 = vmatpush1.msra.mxu0 0.0
    %736 = vmatprep.subr.mxu0 0.0
    %737 = vmatpush1.msra.mxu0 0.0
    %738 = vmatprep.subr.mxu0 0.0
    %739 = vmatpush1.msra.mxu0 0.0
    %740 = vmatprep.subr.mxu0 0.0
    %741 = vmatpush1.msra.mxu0 0.0
    %742 = vmatprep.subr.mxu0 0.0
    %743 = vmatpush1.msra.mxu0 0.0
    %744 = vmatprep.subr.mxu0 0.0
    %745 = vmatpush1.msra.mxu0 0.0
    %746 = vmatprep.subr.mxu0 0.0
    %747 = vmatpush1.msra.mxu0 0.0
    %748 = vmatprep.subr.mxu0 0.0
    %749 = vmatpush1.msra.mxu0 0.0
    %750 = vmatprep.subr.mxu0 0.0
    %751 = vmatpush1.msra.mxu0 0.0
    %752 = vmatprep.subr.mxu0 0.0
    %753 = vmatpush1.msra.mxu0 0.0
    %754 = vmatprep.subr.mxu0 0.0
    %755 = vmatpush1.msra.mxu0 0.0
    %756 = vmatprep.subr.mxu0 0.0
    %757 = vmatpush1.msra.mxu0 0.0
    %758 = vmatprep.subr.mxu0 0.0
    %759 = vmatpush1.msra.mxu0 0.0
    %760 = vmatprep.subr.mxu0 0.0
    %761 = vmatpush1.msra.mxu0 0.0
    %762 = vmatprep.subr.mxu0 0.0
    %763 = vmatpush1.msra.mxu0 0.0
    %764 = vmatprep.subr.mxu0 0.0
    %765 = vmatpush1.msra.mxu0 0.0
    %766 = vmatprep.subr.mxu0 0.0
    %767 = vmatpush1.msra.mxu0 0.0
    %768 = vmatprep.subr.mxu0 0.0
    %769 = vmatpush1.msra.mxu0 0.0
    %770 = vmatprep.subr.mxu0 0.0
    %771 = vmatpush1.msra.mxu0 0.0
    %772 = vmatprep.subr.mxu0 0.0
    %773 = vmatpush1.msra.mxu0 0.0
    %774 = vmatprep.subr.mxu0 0.0
    %775 = vmatpush1.msra.mxu0 0.0
    %776 = vmatprep.subr.mxu0 0.0
    %777 = vmatpush1.msra.mxu0 0.0
    %778 = vmatprep.subr.mxu0 0.0
    %779 = vmatpush1.msra.mxu0 0.0
    %780 = vmatprep.subr.mxu0 0.0
    %781 = vmatpush1.msra.mxu0 0.0
    %782 = vmatprep.subr.mxu0 0.0
    %783 = vmatpush1.msra.mxu0 0.0
    %784 = vmatprep.subr.mxu0 0.0
    %785 = vmatpush1.msra.mxu0 0.0
    %786 = vmatprep.subr.mxu0 0.0
    %787 = vmatpush1.msra.mxu0 0.0
    %788 = vmatprep.subr.mxu0 0.0
    %789 = vmatpush1.msra.mxu0 0.0
    %790 = vmatprep.subr.mxu0 0.0
    %791 = vmatpush1.msra.mxu0 0.0
    %792 = vmatprep.subr.mxu0 0.0
    %793 = vmatpush1.msra.mxu0 0.0
    %794 = vmatprep.mubr.f32.mxu0 0.0
    %795 = vmatmul.mubr.f32.gmra.mrb[0].mxu0 %v701
    %v796 = vpop.f32.mrb[0].mxu0
    %v797 = vadd.f32 0.0, %v796
    %v798 = vpop.f32.mrb[0].mxu0
    %v799 = vadd.f32 0.0, %v798
    %800 = vmatprep.mubr.f32.mxu0 0.0
    %801 = vmatmul.mubr.f32.gmra.mrb[0].mxu0 %v704
    %v802 = vpop.f32.mrb[0].mxu0
    %v803 = vadd.f32 0.0, %v802
    %v804 = vpop.f32.mrb[0].mxu0
    %v805 = vadd.f32 0.0, %v804
    %806 = vmatprep.mubr.f32.mxu0 0.0
    %807 = vmatmul.mubr.f32.gmra.mrb[0].mxu0 %v707
    %v808 = vpop.f32.mrb[0].mxu0
    %v809 = vadd.f32 0.0, %v808
    %v810 = vpop.f32.mrb[0].mxu0
    %v811 = vadd.f32 0.0, %v810
    %812 = vmatprep.mubr.f32.mxu0 0.0
    %813 = vmatmul.mubr.f32.gmra.mrb[0].mxu0 %v710
    %v814 = vpop.f32.mrb[0].mxu0
    %v815 = vadd.f32 0.0, %v814
    %v816 = vpop.f32.mrb[0].mxu0
    %v817 = vadd.f32 0.0, %v816
    %818 = vdwg.mxu0
    %819 = vmatprep.subr.mxu0 %v722
    %820 = vmatpush1.msra.mxu0 %v719
    %821 = vmatprep.subr.mxu0 0.0
    %822 = vmatpush1.msra.mxu0 0.0
    %823 = vmatprep.subr.mxu0 0.0
    %824 = vmatpush1.msra.mxu0 0.0
    %825 = vmatprep.subr.mxu0 0.0
    %826 = vmatpush1.msra.mxu0 0.0
    %827 = vmatprep.subr.mxu0 0.0
    %828 = vmatpush1.msra.mxu0 0.0
    %829 = vmatprep.subr.mxu0 0.0
    %830 = vmatpush1.msra.mxu0 0.0
    %831 = vmatprep.subr.mxu0 0.0
    %832 = vmatpush1.msra.mxu0 0.0
    %833 = vmatprep.subr.mxu0 0.0
    %834 = vmatpush1.msra.mxu0 0.0
    %835 = vmatprep.subr.mxu0 0.0
    %836 = vmatpush1.msra.mxu0 0.0
    %837 = vmatprep.subr.mxu0 0.0
    %838 = vmatpush1.msra.mxu0 0.0
    %839 = vmatprep.subr.mxu0 0.0
    %840 = vmatpush1.msra.mxu0 0.0
    %841 = vmatprep.subr.mxu0 0.0
    %842 = vmatpush1.msra.mxu0 0.0
    %843 = vmatprep.subr.mxu0 0.0
    %844 = vmatpush1.msra.mxu0 0.0
    %845 = vmatprep.subr.mxu0 0.0
    %846 = vmatpush1.msra.mxu0 0.0
    %847 = vmatprep.subr.mxu0 0.0
    %848 = vmatpush1.msra.mxu0 0.0
    %849 = vmatprep.subr.mxu0 0.0
    %850 = vmatpush1.msra.mxu0 0.0
    %851 = vmatprep.subr.mxu0 0.0
    %852 = vmatpush1.msra.mxu0 0.0
    %853 = vmatprep.subr.mxu0 0.0
    %854 = vmatpush1.msra.mxu0 0.0
    %855 = vmatprep.subr.mxu0 0.0
    %856 = vmatpush1.msra.mxu0 0.0
    %857 = vmatprep.subr.mxu0 0.0
    %858 = vmatpush1.msra.mxu0 0.0
    %859 = vmatprep.subr.mxu0 0.0
    %860 = vmatpush1.msra.mxu0 0.0
    %861 = vmatprep.subr.mxu0 0.0
    %862 = vmatpush1.msra.mxu0 0.0
    %863 = vmatprep.subr.mxu0 0.0
    %864 = vmatpush1.msra.mxu0 0.0
    %865 = vmatprep.subr.mxu0 0.0
    %866 = vmatpush1.msra.mxu0 0.0
    %867 = vmatprep.subr.mxu0 0.0
    %868 = vmatpush1.msra.mxu0 0.0
    %869 = vmatprep.subr.mxu0 0.0
    %870 = vmatpush1.msra.mxu0 0.0
    %871 = vmatprep.subr.mxu0 0.0
    %872 = vmatpush1.msra.mxu0 0.0
    %873 = vmatprep.subr.mxu0 0.0
    %874 = vmatpush1.msra.mxu0 0.0
    %875 = vmatprep.subr.mxu0 0.0
    %876 = vmatpush1.msra.mxu0 0.0
    %877 = vmatprep.subr.mxu0 0.0
    %878 = vmatpush1.msra.mxu0 0.0
    %879 = vmatprep.subr.mxu0 0.0
    %880 = vmatpush1.msra.mxu0 0.0
    %881 = vmatprep.subr.mxu0 0.0
    %882 = vmatpush1.msra.mxu0 0.0
    %883 = vmatprep.mubr.f32.mxu0 0.0
    %884 = vmatmul.mubr.f32.gmra.mrb[0].mxu0 %v701
    %v885 = vpop.f32.mrb[0].mxu0
    %v886 = vadd.f32 0.0, %v885
    %v887 = vpop.f32.mrb[0].mxu0
    %v888 = vadd.f32 0.0, %v887
    %889 = vmatprep.mubr.f32.mxu0 0.0
    %890 = vmatmul.mubr.f32.gmra.mrb[0].mxu0 %v704
    %v891 = vpop.f32.mrb[0].mxu0
    %v892 = vadd.f32 0.0, %v891
    %v893 = vpop.f32.mrb[0].mxu0
    %v894 = vadd.f32 0.0, %v893
    %895 = vmatprep.mubr.f32.mxu0 0.0
    %896 = vmatmul.mubr.f32.gmra.mrb[0].mxu0 %v707
    %v897 = vpop.f32.mrb[0].mxu0
    %v898 = vadd.f32 0.0, %v897
    %v899 = vpop.f32.mrb[0].mxu0
    %v900 = vadd.f32 0.0, %v899
    %901 = vmatprep.mubr.f32.mxu0 0.0
    %902 = vmatmul.mubr.f32.gmra.mrb[0].mxu0 %v710
    %v903 = vpop.f32.mrb[0].mxu0
    %v904 = vadd.f32 0.0, %v903
    %v905 = vpop.f32.mrb[0].mxu0
    %v906 = vadd.f32 0.0, %v905
    %907 = vdwg.mxu0
    %908 = vmatprep.subr.mxu0 %v728
    %909 = vmatpush1.msra.mxu0 %v725
    %910 = vmatprep.subr.mxu0 0.0
    %911 = vmatpush1.msra.mxu0 0.0
    %912 = vmatprep.subr.mxu0 0.0
    %913 = vmatpush1.msra.mxu0 0.0
    %914 = vmatprep.subr.mxu0 0.0
    %915 = vmatpush1.msra.mxu0 0.0
    %916 = vmatprep.subr.mxu0 0.0
    %917 = vmatpush1.msra.mxu0 0.0
    %918 = vmatprep.subr.mxu0 0.0
    %919 = vmatpush1.msra.mxu0 0.0
    %920 = vmatprep.subr.mxu0 0.0
    %921 = vmatpush1.msra.mxu0 0.0
    %922 = vmatprep.subr.mxu0 0.0
    %923 = vmatpush1.msra.mxu0 0.0
    %924 = vmatprep.subr.mxu0 0.0
    %925 = vmatpush1.msra.mxu0 0.0
    %926 = vmatprep.subr.mxu0 0.0
    %927 = vmatpush1.msra.mxu0 0.0
    %928 = vmatprep.subr.mxu0 0.0
    %929 = vmatpush1.msra.mxu0 0.0
    %930 = vmatprep.subr.mxu0 0.0
    %931 = vmatpush1.msra.mxu0 0.0
    %932 = vmatprep.subr.mxu0 0.0
    %933 = vmatpush1.msra.mxu0 0.0
    %934 = vmatprep.subr.mxu0 0.0
    %935 = vmatpush1.msra.mxu0 0.0
    %936 = vmatprep.subr.mxu0 0.0
    %937 = vmatpush1.msra.mxu0 0.0
    %938 = vmatprep.subr.mxu0 0.0
    %939 = vmatpush1.msra.mxu0 0.0
    %940 = vmatprep.subr.mxu0 0.0
    %941 = vmatpush1.msra.mxu0 0.0
    %942 = vmatprep.subr.mxu0 0.0
    %943 = vmatpush1.msra.mxu0 0.0
    %944 = vmatprep.subr.mxu0 0.0
    %945 = vmatpush1.msra.mxu0 0.0
    %946 = vmatprep.subr.mxu0 0.0
    %947 = vmatpush1.msra.mxu0 0.0
    %948 = vmatprep.subr.mxu0 0.0
    %949 = vmatpush1.msra.mxu0 0.0
    %950 = vmatprep.subr.mxu0 0.0
    %951 = vmatpush1.msra.mxu0 0.0
    %952 = vmatprep.subr.mxu0 0.0
    %953 = vmatpush1.msra.mxu0 0.0
    %954 = vmatprep.subr.mxu0 0.0
    %955 = vmatpush1.msra.mxu0 0.0
    %956 = vmatprep.subr.mxu0 0.0
    %957 = vmatpush1.msra.mxu0 0.0
    %958 = vmatprep.subr.mxu0 0.0
    %959 = vmatpush1.msra.mxu0 0.0
    %960 = vmatprep.subr.mxu0 0.0
    %961 = vmatpush1.msra.mxu0 0.0
    %962 = vmatprep.subr.mxu0 0.0
    %963 = vmatpush1.msra.mxu0 0.0
    %964 = vmatprep.subr.mxu0 0.0
    %965 = vmatpush1.msra.mxu0 0.0
    %966 = vmatprep.subr.mxu0 0.0
    %967 = vmatpush1.msra.mxu0 0.0
    %968 = vmatprep.subr.mxu0 0.0
    %969 = vmatpush1.msra.mxu0 0.0
    %970 = vmatprep.subr.mxu0 0.0
    %971 = vmatpush1.msra.mxu0 0.0
    %972 = vmatprep.mubr.f32.mxu0 0.0
    %973 = vmatmul.mubr.f32.gmra.mrb[0].mxu0 %v701
    %v974 = vpop.f32.mrb[0].mxu0
    %v975 = vadd.f32 0.0, %v974
    %v976 = vpop.f32.mrb[0].mxu0
    %v977 = vadd.f32 0.0, %v976
    %978 = vmatprep.mubr.f32.mxu0 0.0
    %979 = vmatmul.mubr.f32.gmra.mrb[0].mxu0 %v704
    %v980 = vpop.f32.mrb[0].mxu0
    %v981 = vadd.f32 0.0, %v980
    %v982 = vpop.f32.mrb[0].mxu0
    %v983 = vadd.f32 0.0, %v982
    %984 = vmatprep.mubr.f32.mxu0 0.0
    %985 = vmatmul.mubr.f32.gmra.mrb[0].mxu0 %v707
    %v986 = vpop.f32.mrb[0].mxu0
    %v987 = vadd.f32 0.0, %v986
    %v988 = vpop.f32.mrb[0].mxu0
    %v989 = vadd.f32 0.0, %v988
    %990 = vmatprep.mubr.f32.mxu0 0.0
    %991 = vmatmul.mubr.f32.gmra.mrb[0].mxu0 %v710
    %v992 = vpop.f32.mrb[0].mxu0
    %v993 = vadd.f32 0.0, %v992
    %v994 = vpop.f32.mrb[0].mxu0
    %v995 = vadd.f32 0.0, %v994
    %996 = vdwg.mxu0
    %v997 = vadd.f32 %v476, %v797
    %v998 = vadd.f32 %v478, %v799
    %v999 = vadd.f32 %v565, %v886
    %v1000 = vadd.f32 %v567, %v888
    %v1001 = vadd.f32 %v654, %v975
    %v1002 = vadd.f32 %v656, %v977
    %v1003 = vadd.f32 %v482, %v803
    %v1004 = vadd.f32 %v484, %v805
    %v1005 = vadd.f32 %v571, %v892
    %v1006 = vadd.f32 %v573, %v894
    %v1007 = vadd.f32 %v660, %v981
    %v1008 = vadd.f32 %v662, %v983
    %v1009 = vadd.f32 %v488, %v809
    %v1010 = vadd.f32 %v490, %v811
    %v1011 = vadd.f32 %v577, %v898
    %v1012 = vadd.f32 %v579, %v900
    %v1013 = vadd.f32 %v666, %v987
    %v1014 = vadd.f32 %v668, %v989
    %v1015 = vadd.f32 %v494, %v815
    %v1016 = vadd.f32 %v496, %v817
    %v1017 = vadd.f32 %v583, %v904
    %v1018 = vadd.f32 %v585, %v906
    %v1019 = vadd.f32 %v672, %v993
    %v1020 = vadd.f32 %v674, %v995
    %1021 = vrot.lane.b32.xlu0 %v18, 1
    %v1022 = vpop.permute.xlu0 %1021
    %1023 = vrot.lane.b32.xlu0 %v25, 1
    %v1024 = vpop.permute.xlu0 %1023
    %1025 = vrot.lane.b32.xlu0 %v19, 1
    %v1026 = vpop.permute.xlu0 %1025
    %1027 = vrot.lane.b32.xlu0 %v26, 1
    %v1028 = vpop.permute.xlu0 %1027
    %1029 = vrot.lane.b32.xlu0 %v20, 1
    %v1030 = vpop.permute.xlu0 %1029
    %1031 = vrot.lane.b32.xlu0 %v27, 1
    %v1032 = vpop.permute.xlu0 %1031
    %vm1033 = vcmp.lt.s32.totalorder %v44, 1
    %v1034 = vsel %vm1033, %v1030, %v1032
    %v1035 = vsel %vm1033, %v1028, %v1030
    %v1036 = vsel %vm1033, %v1026, %v1028
    %v1037 = vsel %vm1033, %v1024, %v1026
    %v1038 = vsel %vm1033, %v1022, %v1024
    %v1039 = vsel %vm1033, %v1032, %v1022
    %s1040 = scalar_lea.vmem %s1, 96
    %v1041 = vld [vmem:[%s1040] sm:$0xff]
    %v1042 = vld [vmem:[%s1040 + $0x8] sm:$0xff]
    %v1043 = vld [vmem:[%s1040 + $0x10] sm:$0xff]
    %v1044 = vld [vmem:[%s1040 + $0x18] sm:$0xff]
    %v1046 = vsel %vm80, %v1041, 0
    %v1049 = vsel %vm80, %v1042, 0
    %v1052 = vsel %vm80, %v1043, 0
    %v1055 = vsel %vm80, %v1044, 0
    %v1058 = vsel %vm93, %v1039, 0
    %v1061 = vsel %vm93, %v1038, 0
    %v1064 = vsel %vm93, %v1037, 0
    %v1067 = vsel %vm93, %v1036, 0
    %v1070 = vsel %vm93, %v1035, 0
    %v1073 = vsel %vm93, %v1034, 0
    %1075 = vmatprep.subr.mxu0 %v1061
    %1076 = vmatpush1.msra.mxu0 %v1058
    %1077 = vmatprep.subr.mxu0 0.0
    %1078 = vmatpush1.msra.mxu0 0.0
    %1079 = vmatprep.subr.mxu0 0.0
    %1080 = vmatpush1.msra.mxu0 0.0
    %1081 = vmatprep.subr.mxu0 0.0
    %1082 = vmatpush1.msra.mxu0 0.0
    %1083 = vmatprep.subr.mxu0 0.0
    %1084 = vmatpush1.msra.mxu0 0.0
    %1085 = vmatprep.subr.mxu0 0.0
    %1086 = vmatpush1.msra.mxu0 0.0
    %1087 = vmatprep.subr.mxu0 0.0
    %1088 = vmatpush1.msra.mxu0 0.0
    %1089 = vmatprep.subr.mxu0 0.0
    %1090 = vmatpush1.msra.mxu0 0.0
    %1091 = vmatprep.subr.mxu0 0.0
    %1092 = vmatpush1.msra.mxu0 0.0
    %1093 = vmatprep.subr.mxu0 0.0
    %1094 = vmatpush1.msra.mxu0 0.0
    %1095 = vmatprep.subr.mxu0 0.0
    %1096 = vmatpush1.msra.mxu0 0.0
    %1097 = vmatprep.subr.mxu0 0.0
    %1098 = vmatpush1.msra.mxu0 0.0
    %1099 = vmatprep.subr.mxu0 0.0
    %1100 = vmatpush1.msra.mxu0 0.0
    %1101 = vmatprep.subr.mxu0 0.0
    %1102 = vmatpush1.msra.mxu0 0.0
    %1103 = vmatprep.subr.mxu0 0.0
    %1104 = vmatpush1.msra.mxu0 0.0
    %1105 = vmatprep.subr.mxu0 0.0
    %1106 = vmatpush1.msra.mxu0 0.0
    %1107 = vmatprep.subr.mxu0 0.0
    %1108 = vmatpush1.msra.mxu0 0.0
    %1109 = vmatprep.subr.mxu0 0.0
    %1110 = vmatpush1.msra.mxu0 0.0
    %1111 = vmatprep.subr.mxu0 0.0
    %1112 = vmatpush1.msra.mxu0 0.0
    %1113 = vmatprep.subr.mxu0 0.0
    %1114 = vmatpush1.msra.mxu0 0.0
    %1115 = vmatprep.subr.mxu0 0.0
    %1116 = vmatpush1.msra.mxu0 0.0
    %1117 = vmatprep.subr.mxu0 0.0
    %1118 = vmatpush1.msra.mxu0 0.0
    %1119 = vmatprep.subr.mxu0 0.0
    %1120 = vmatpush1.msra.mxu0 0.0
    %1121 = vmatprep.subr.mxu0 0.0
    %1122 = vmatpush1.msra.mxu0 0.0
    %1123 = vmatprep.subr.mxu0 0.0
    %1124 = vmatpush1.msra.mxu0 0.0
    %1125 = vmatprep.subr.mxu0 0.0
    %1126 = vmatpush1.msra.mxu0 0.0
    %1127 = vmatprep.subr.mxu0 0.0
    %1128 = vmatpush1.msra.mxu0 0.0
    %1129 = vmatprep.subr.mxu0 0.0
    %1130 = vmatpush1.msra.mxu0 0.0
    %1131 = vmatprep.subr.mxu0 0.0
    %1132 = vmatpush1.msra.mxu0 0.0
    %1133 = vmatprep.subr.mxu0 0.0
    %1134 = vmatpush1.msra.mxu0 0.0
    %1135 = vmatprep.subr.mxu0 0.0
    %1136 = vmatpush1.msra.mxu0 0.0
    %1137 = vmatprep.subr.mxu0 0.0
    %1138 = vmatpush1.msra.mxu0 0.0
    %1139 = vmatprep.mubr.f32.mxu0 0.0
    %1140 = vmatmul.mubr.f32.gmra.mrb[0].mxu0 %v1046
    %v1141 = vpop.f32.mrb[0].mxu0
    %v1142 = vadd.f32 0.0, %v1141
    %v1143 = vpop.f32.mrb[0].mxu0
    %v1144 = vadd.f32 0.0, %v1143
    %1145 = vmatprep.mubr.f32.mxu0 0.0
    %1146 = vmatmul.mubr.f32.gmra.mrb[0].mxu0 %v1049
    %v1147 = vpop.f32.mrb[0].mxu0
    %v1148 = vadd.f32 0.0, %v1147
    %v1149 = vpop.f32.mrb[0].mxu0
    %v1150 = vadd.f32 0.0, %v1149
    %1151 = vmatprep.mubr.f32.mxu0 0.0
    %1152 = vmatmul.mubr.f32.gmra.mrb[0].mxu0 %v1052
    %v1153 = vpop.f32.mrb[0].mxu0
    %v1154 = vadd.f32 0.0, %v1153
    %v1155 = vpop.f32.mrb[0].mxu0
    %v1156 = vadd.f32 0.0, %v1155
    %1157 = vmatprep.mubr.f32.mxu0 0.0
    %1158 = vmatmul.mubr.f32.gmra.mrb[0].mxu0 %v1055
    %v1159 = vpop.f32.mrb[0].mxu0
    %v1160 = vadd.f32 0.0, %v1159
    %v1161 = vpop.f32.mrb[0].mxu0
    %v1162 = vadd.f32 0.0, %v1161
    %1163 = vdwg.mxu0
    %1164 = vmatprep.subr.mxu0 %v1067
    %1165 = vmatpush1.msra.mxu0 %v1064
    %1166 = vmatprep.subr.mxu0 0.0
    %1167 = vmatpush1.msra.mxu0 0.0
    %1168 = vmatprep.subr.mxu0 0.0
    %1169 = vmatpush1.msra.mxu0 0.0
    %1170 = vmatprep.subr.mxu0 0.0
    %1171 = vmatpush1.msra.mxu0 0.0
    %1172 = vmatprep.subr.mxu0 0.0
    %1173 = vmatpush1.msra.mxu0 0.0
    %1174 = vmatprep.subr.mxu0 0.0
    %1175 = vmatpush1.msra.mxu0 0.0
    %1176 = vmatprep.subr.mxu0 0.0
    %1177 = vmatpush1.msra.mxu0 0.0
    %1178 = vmatprep.subr.mxu0 0.0
    %1179 = vmatpush1.msra.mxu0 0.0
    %1180 = vmatprep.subr.mxu0 0.0
    %1181 = vmatpush1.msra.mxu0 0.0
    %1182 = vmatprep.subr.mxu0 0.0
    %1183 = vmatpush1.msra.mxu0 0.0
    %1184 = vmatprep.subr.mxu0 0.0
    %1185 = vmatpush1.msra.mxu0 0.0
    %1186 = vmatprep.subr.mxu0 0.0
    %1187 = vmatpush1.msra.mxu0 0.0
    %1188 = vmatprep.subr.mxu0 0.0
    %1189 = vmatpush1.msra.mxu0 0.0
    %1190 = vmatprep.subr.mxu0 0.0
    %1191 = vmatpush1.msra.mxu0 0.0
    %1192 = vmatprep.subr.mxu0 0.0
    %1193 = vmatpush1.msra.mxu0 0.0
    %1194 = vmatprep.subr.mxu0 0.0
    %1195 = vmatpush1.msra.mxu0 0.0
    %1196 = vmatprep.subr.mxu0 0.0
    %1197 = vmatpush1.msra.mxu0 0.0
    %1198 = vmatprep.subr.mxu0 0.0
    %1199 = vmatpush1.msra.mxu0 0.0
    %1200 = vmatprep.subr.mxu0 0.0
    %1201 = vmatpush1.msra.mxu0 0.0
    %1202 = vmatprep.subr.mxu0 0.0
    %1203 = vmatpush1.msra.mxu0 0.0
    %1204 = vmatprep.subr.mxu0 0.0
    %1205 = vmatpush1.msra.mxu0 0.0
    %1206 = vmatprep.subr.mxu0 0.0
    %1207 = vmatpush1.msra.mxu0 0.0
    %1208 = vmatprep.subr.mxu0 0.0
    %1209 = vmatpush1.msra.mxu0 0.0
    %1210 = vmatprep.subr.mxu0 0.0
    %1211 = vmatpush1.msra.mxu0 0.0
    %1212 = vmatprep.subr.mxu0 0.0
    %1213 = vmatpush1.msra.mxu0 0.0
    %1214 = vmatprep.subr.mxu0 0.0
    %1215 = vmatpush1.msra.mxu0 0.0
    %1216 = vmatprep.subr.mxu0 0.0
    %1217 = vmatpush1.msra.mxu0 0.0
    %1218 = vmatprep.subr.mxu0 0.0
    %1219 = vmatpush1.msra.mxu0 0.0
    %1220 = vmatprep.subr.mxu0 0.0
    %1221 = vmatpush1.msra.mxu0 0.0
    %1222 = vmatprep.subr.mxu0 0.0
    %1223 = vmatpush1.msra.mxu0 0.0
    %1224 = vmatprep.subr.mxu0 0.0
    %1225 = vmatpush1.msra.mxu0 0.0
    %1226 = vmatprep.subr.mxu0 0.0
    %1227 = vmatpush1.msra.mxu0 0.0
    %1228 = vmatprep.mubr.f32.mxu0 0.0
    %1229 = vmatmul.mubr.f32.gmra.mrb[0].mxu0 %v1046
    %v1230 = vpop.f32.mrb[0].mxu0
    %v1231 = vadd.f32 0.0, %v1230
    %v1232 = vpop.f32.mrb[0].mxu0
    %v1233 = vadd.f32 0.0, %v1232
    %1234 = vmatprep.mubr.f32.mxu0 0.0
    %1235 = vmatmul.mubr.f32.gmra.mrb[0].mxu0 %v1049
    %v1236 = vpop.f32.mrb[0].mxu0
    %v1237 = vadd.f32 0.0, %v1236
    %v1238 = vpop.f32.mrb[0].mxu0
    %v1239 = vadd.f32 0.0, %v1238
    %1240 = vmatprep.mubr.f32.mxu0 0.0
    %1241 = vmatmul.mubr.f32.gmra.mrb[0].mxu0 %v1052
    %v1242 = vpop.f32.mrb[0].mxu0
    %v1243 = vadd.f32 0.0, %v1242
    %v1244 = vpop.f32.mrb[0].mxu0
    %v1245 = vadd.f32 0.0, %v1244
    %1246 = vmatprep.mubr.f32.mxu0 0.0
    %1247 = vmatmul.mubr.f32.gmra.mrb[0].mxu0 %v1055
    %v1248 = vpop.f32.mrb[0].mxu0
    %v1249 = vadd.f32 0.0, %v1248
    %v1250 = vpop.f32.mrb[0].mxu0
    %v1251 = vadd.f32 0.0, %v1250
    %1252 = vdwg.mxu0
    %1253 = vmatprep.subr.mxu0 %v1073
    %1254 = vmatpush1.msra.mxu0 %v1070
    %1255 = vmatprep.subr.mxu0 0.0
    %1256 = vmatpush1.msra.mxu0 0.0
    %1257 = vmatprep.subr.mxu0 0.0
    %1258 = vmatpush1.msra.mxu0 0.0
    %1259 = vmatprep.subr.mxu0 0.0
    %1260 = vmatpush1.msra.mxu0 0.0
    %1261 = vmatprep.subr.mxu0 0.0
    %1262 = vmatpush1.msra.mxu0 0.0
    %1263 = vmatprep.subr.mxu0 0.0
    %1264 = vmatpush1.msra.mxu0 0.0
    %1265 = vmatprep.subr.mxu0 0.0
    %1266 = vmatpush1.msra.mxu0 0.0
    %1267 = vmatprep.subr.mxu0 0.0
    %1268 = vmatpush1.msra.mxu0 0.0
    %1269 = vmatprep.subr.mxu0 0.0
    %1270 = vmatpush1.msra.mxu0 0.0
    %1271 = vmatprep.subr.mxu0 0.0
    %1272 = vmatpush1.msra.mxu0 0.0
    %1273 = vmatprep.subr.mxu0 0.0
    %1274 = vmatpush1.msra.mxu0 0.0
    %1275 = vmatprep.subr.mxu0 0.0
    %1276 = vmatpush1.msra.mxu0 0.0
    %1277 = vmatprep.subr.mxu0 0.0
    %1278 = vmatpush1.msra.mxu0 0.0
    %1279 = vmatprep.subr.mxu0 0.0
    %1280 = vmatpush1.msra.mxu0 0.0
    %1281 = vmatprep.subr.mxu0 0.0
    %1282 = vmatpush1.msra.mxu0 0.0
    %1283 = vmatprep.subr.mxu0 0.0
    %1284 = vmatpush1.msra.mxu0 0.0
    %1285 = vmatprep.subr.mxu0 0.0
    %1286 = vmatpush1.msra.mxu0 0.0
    %1287 = vmatprep.subr.mxu0 0.0
    %1288 = vmatpush1.msra.mxu0 0.0
    %1289 = vmatprep.subr.mxu0 0.0
    %1290 = vmatpush1.msra.mxu0 0.0
    %1291 = vmatprep.subr.mxu0 0.0
    %1292 = vmatpush1.msra.mxu0 0.0
    %1293 = vmatprep.subr.mxu0 0.0
    %1294 = vmatpush1.msra.mxu0 0.0
    %1295 = vmatprep.subr.mxu0 0.0
    %1296 = vmatpush1.msra.mxu0 0.0
    %1297 = vmatprep.subr.mxu0 0.0
    %1298 = vmatpush1.msra.mxu0 0.0
    %1299 = vmatprep.subr.mxu0 0.0
    %1300 = vmatpush1.msra.mxu0 0.0
    %1301 = vmatprep.subr.mxu0 0.0
    %1302 = vmatpush1.msra.mxu0 0.0
    %1303 = vmatprep.subr.mxu0 0.0
    %1304 = vmatpush1.msra.mxu0 0.0
    %1305 = vmatprep.subr.mxu0 0.0
    %1306 = vmatpush1.msra.mxu0 0.0
    %1307 = vmatprep.subr.mxu0 0.0
    %1308 = vmatpush1.msra.mxu0 0.0
    %1309 = vmatprep.subr.mxu0 0.0
    %1310 = vmatpush1.msra.mxu0 0.0
    %1311 = vmatprep.subr.mxu0 0.0
    %1312 = vmatpush1.msra.mxu0 0.0
    %1313 = vmatprep.subr.mxu0 0.0
    %1314 = vmatpush1.msra.mxu0 0.0
    %1315 = vmatprep.subr.mxu0 0.0
    %1316 = vmatpush1.msra.mxu0 0.0
    %1317 = vmatprep.mubr.f32.mxu0 0.0
    %1318 = vmatmul.mubr.f32.gmra.mrb[0].mxu0 %v1046
    %v1319 = vpop.f32.mrb[0].mxu0
    %v1320 = vadd.f32 0.0, %v1319
    %v1321 = vpop.f32.mrb[0].mxu0
    %v1322 = vadd.f32 0.0, %v1321
    %1323 = vmatprep.mubr.f32.mxu0 0.0
    %1324 = vmatmul.mubr.f32.gmra.mrb[0].mxu0 %v1049
    %v1325 = vpop.f32.mrb[0].mxu0
    %v1326 = vadd.f32 0.0, %v1325
    %v1327 = vpop.f32.mrb[0].mxu0
    %v1328 = vadd.f32 0.0, %v1327
    %1329 = vmatprep.mubr.f32.mxu0 0.0
    %1330 = vmatmul.mubr.f32.gmra.mrb[0].mxu0 %v1052
    %v1331 = vpop.f32.mrb[0].mxu0
    %v1332 = vadd.f32 0.0, %v1331
    %v1333 = vpop.f32.mrb[0].mxu0
    %v1334 = vadd.f32 0.0, %v1333
    %1335 = vmatprep.mubr.f32.mxu0 0.0
    %1336 = vmatmul.mubr.f32.gmra.mrb[0].mxu0 %v1055
    %v1337 = vpop.f32.mrb[0].mxu0
    %v1338 = vadd.f32 0.0, %v1337
    %v1339 = vpop.f32.mrb[0].mxu0
    %v1340 = vadd.f32 0.0, %v1339
    %1341 = vdwg.mxu0
    %v1342 = vadd.f32 %v997, %v1142
    %v1343 = vadd.f32 %v998, %v1144
    %v1344 = vadd.f32 %v999, %v1231
    %v1345 = vadd.f32 %v1000, %v1233
    %v1346 = vadd.f32 %v1001, %v1320
    %v1347 = vadd.f32 %v1002, %v1322
    %v1348 = vadd.f32 %v1003, %v1148
    %v1349 = vadd.f32 %v1004, %v1150
    %v1350 = vadd.f32 %v1005, %v1237
    %v1351 = vadd.f32 %v1006, %v1239
    %v1352 = vadd.f32 %v1007, %v1326
    %v1353 = vadd.f32 %v1008, %v1328
    %v1354 = vadd.f32 %v1009, %v1154
    %v1355 = vadd.f32 %v1010, %v1156
    %v1356 = vadd.f32 %v1011, %v1243
    %v1357 = vadd.f32 %v1012, %v1245
    %v1358 = vadd.f32 %v1013, %v1332
    %v1359 = vadd.f32 %v1014, %v1334
    %v1360 = vadd.f32 %v1015, %v1160
    %v1361 = vadd.f32 %v1016, %v1162
    %v1362 = vadd.f32 %v1017, %v1249
    %v1363 = vadd.f32 %v1018, %v1251
    %v1364 = vadd.f32 %v1019, %v1338
    %v1365 = vadd.f32 %v1020, %v1340
    %s1366 = scalar_lea.vmem %s1, 128
    %v1367 = vld [vmem:[%s1366] sm:$0xff]
    %v1368 = vld [vmem:[%s1366 + $0x8] sm:$0xff]
    %v1369 = vld [vmem:[%s1366 + $0x10] sm:$0xff]
    %v1370 = vld [vmem:[%s1366 + $0x18] sm:$0xff]
    %v1372 = vsel %vm80, %v1367, 0
    %v1375 = vsel %vm80, %v1368, 0
    %v1378 = vsel %vm80, %v1369, 0
    %v1381 = vsel %vm80, %v1370, 0
    %v1383 = vsel %vm93, %v18, 0
    %v1385 = vsel %vm93, %v25, 0
    %v1387 = vsel %vm93, %v19, 0
    %v1389 = vsel %vm93, %v26, 0
    %v1391 = vsel %vm93, %v20, 0
    %v1393 = vsel %vm93, %v27, 0
    %1395 = vmatprep.subr.mxu0 %v1385
    %1396 = vmatpush1.msra.mxu0 %v1383
    %1397 = vmatprep.subr.mxu0 0.0
    %1398 = vmatpush1.msra.mxu0 0.0
    %1399 = vmatprep.subr.mxu0 0.0
    %1400 = vmatpush1.msra.mxu0 0.0
    %1401 = vmatprep.subr.mxu0 0.0
    %1402 = vmatpush1.msra.mxu0 0.0
    %1403 = vmatprep.subr.mxu0 0.0
    %1404 = vmatpush1.msra.mxu0 0.0
    %1405 = vmatprep.subr.mxu0 0.0
    %1406 = vmatpush1.msra.mxu0 0.0
    %1407 = vmatprep.subr.mxu0 0.0
    %1408 = vmatpush1.msra.mxu0 0.0
    %1409 = vmatprep.subr.mxu0 0.0
    %1410 = vmatpush1.msra.mxu0 0.0
    %1411 = vmatprep.subr.mxu0 0.0
    %1412 = vmatpush1.msra.mxu0 0.0
    %1413 = vmatprep.subr.mxu0 0.0
    %1414 = vmatpush1.msra.mxu0 0.0
    %1415 = vmatprep.subr.mxu0 0.0
    %1416 = vmatpush1.msra.mxu0 0.0
    %1417 = vmatprep.subr.mxu0 0.0
    %1418 = vmatpush1.msra.mxu0 0.0
    %1419 = vmatprep.subr.mxu0 0.0
    %1420 = vmatpush1.msra.mxu0 0.0
    %1421 = vmatprep.subr.mxu0 0.0
    %1422 = vmatpush1.msra.mxu0 0.0
    %1423 = vmatprep.subr.mxu0 0.0
    %1424 = vmatpush1.msra.mxu0 0.0
    %1425 = vmatprep.subr.mxu0 0.0
    %1426 = vmatpush1.msra.mxu0 0.0
    %1427 = vmatprep.subr.mxu0 0.0
    %1428 = vmatpush1.msra.mxu0 0.0
    %1429 = vmatprep.subr.mxu0 0.0
    %1430 = vmatpush1.msra.mxu0 0.0
    %1431 = vmatprep.subr.mxu0 0.0
    %1432 = vmatpush1.msra.mxu0 0.0
    %1433 = vmatprep.subr.mxu0 0.0
    %1434 = vmatpush1.msra.mxu0 0.0
    %1435 = vmatprep.subr.mxu0 0.0
    %1436 = vmatpush1.msra.mxu0 0.0
    %1437 = vmatprep.subr.mxu0 0.0
    %1438 = vmatpush1.msra.mxu0 0.0
    %1439 = vmatprep.subr.mxu0 0.0
    %1440 = vmatpush1.msra.mxu0 0.0
    %1441 = vmatprep.subr.mxu0 0.0
    %1442 = vmatpush1.msra.mxu0 0.0
    %1443 = vmatprep.subr.mxu0 0.0
    %1444 = vmatpush1.msra.mxu0 0.0
    %1445 = vmatprep.subr.mxu0 0.0
    %1446 = vmatpush1.msra.mxu0 0.0
    %1447 = vmatprep.subr.mxu0 0.0
    %1448 = vmatpush1.msra.mxu0 0.0
    %1449 = vmatprep.subr.mxu0 0.0
    %1450 = vmatpush1.msra.mxu0 0.0
    %1451 = vmatprep.subr.mxu0 0.0
    %1452 = vmatpush1.msra.mxu0 0.0
    %1453 = vmatprep.subr.mxu0 0.0
    %1454 = vmatpush1.msra.mxu0 0.0
    %1455 = vmatprep.subr.mxu0 0.0
    %1456 = vmatpush1.msra.mxu0 0.0
    %1457 = vmatprep.subr.mxu0 0.0
    %1458 = vmatpush1.msra.mxu0 0.0
    %1459 = vmatprep.mubr.f32.mxu0 0.0
    %1460 = vmatmul.mubr.f32.gmra.mrb[0].mxu0 %v1372
    %v1461 = vpop.f32.mrb[0].mxu0
    %v1462 = vadd.f32 0.0, %v1461
    %v1463 = vpop.f32.mrb[0].mxu0
    %v1464 = vadd.f32 0.0, %v1463
    %1465 = vmatprep.mubr.f32.mxu0 0.0
    %1466 = vmatmul.mubr.f32.gmra.mrb[0].mxu0 %v1375
    %v1467 = vpop.f32.mrb[0].mxu0
    %v1468 = vadd.f32 0.0, %v1467
    %v1469 = vpop.f32.mrb[0].mxu0
    %v1470 = vadd.f32 0.0, %v1469
    %1471 = vmatprep.mubr.f32.mxu0 0.0
    %1472 = vmatmul.mubr.f32.gmra.mrb[0].mxu0 %v1378
    %v1473 = vpop.f32.mrb[0].mxu0
    %v1474 = vadd.f32 0.0, %v1473
    %v1475 = vpop.f32.mrb[0].mxu0
    %v1476 = vadd.f32 0.0, %v1475
    %1477 = vmatprep.mubr.f32.mxu0 0.0
    %1478 = vmatmul.mubr.f32.gmra.mrb[0].mxu0 %v1381
    %v1479 = vpop.f32.mrb[0].mxu0
    %v1480 = vadd.f32 0.0, %v1479
    %v1481 = vpop.f32.mrb[0].mxu0
    %v1482 = vadd.f32 0.0, %v1481
    %1483 = vdwg.mxu0
    %1484 = vmatprep.subr.mxu0 %v1389
    %1485 = vmatpush1.msra.mxu0 %v1387
    %1486 = vmatprep.subr.mxu0 0.0
    %1487 = vmatpush1.msra.mxu0 0.0
    %1488 = vmatprep.subr.mxu0 0.0
    %1489 = vmatpush1.msra.mxu0 0.0
    %1490 = vmatprep.subr.mxu0 0.0
    %1491 = vmatpush1.msra.mxu0 0.0
    %1492 = vmatprep.subr.mxu0 0.0
    %1493 = vmatpush1.msra.mxu0 0.0
    %1494 = vmatprep.subr.mxu0 0.0
    %1495 = vmatpush1.msra.mxu0 0.0
    %1496 = vmatprep.subr.mxu0 0.0
    %1497 = vmatpush1.msra.mxu0 0.0
    %1498 = vmatprep.subr.mxu0 0.0
    %1499 = vmatpush1.msra.mxu0 0.0
    %1500 = vmatprep.subr.mxu0 0.0
    %1501 = vmatpush1.msra.mxu0 0.0
    %1502 = vmatprep.subr.mxu0 0.0
    %1503 = vmatpush1.msra.mxu0 0.0
    %1504 = vmatprep.subr.mxu0 0.0
    %1505 = vmatpush1.msra.mxu0 0.0
    %1506 = vmatprep.subr.mxu0 0.0
    %1507 = vmatpush1.msra.mxu0 0.0
    %1508 = vmatprep.subr.mxu0 0.0
    %1509 = vmatpush1.msra.mxu0 0.0
    %1510 = vmatprep.subr.mxu0 0.0
    %1511 = vmatpush1.msra.mxu0 0.0
    %1512 = vmatprep.subr.mxu0 0.0
    %1513 = vmatpush1.msra.mxu0 0.0
    %1514 = vmatprep.subr.mxu0 0.0
    %1515 = vmatpush1.msra.mxu0 0.0
    %1516 = vmatprep.subr.mxu0 0.0
    %1517 = vmatpush1.msra.mxu0 0.0
    %1518 = vmatprep.subr.mxu0 0.0
    %1519 = vmatpush1.msra.mxu0 0.0
    %1520 = vmatprep.subr.mxu0 0.0
    %1521 = vmatpush1.msra.mxu0 0.0
    %1522 = vmatprep.subr.mxu0 0.0
    %1523 = vmatpush1.msra.mxu0 0.0
    %1524 = vmatprep.subr.mxu0 0.0
    %1525 = vmatpush1.msra.mxu0 0.0
    %1526 = vmatprep.subr.mxu0 0.0
    %1527 = vmatpush1.msra.mxu0 0.0
    %1528 = vmatprep.subr.mxu0 0.0
    %1529 = vmatpush1.msra.mxu0 0.0
    %1530 = vmatprep.subr.mxu0 0.0
    %1531 = vmatpush1.msra.mxu0 0.0
    %1532 = vmatprep.subr.mxu0 0.0
    %1533 = vmatpush1.msra.mxu0 0.0
    %1534 = vmatprep.subr.mxu0 0.0
    %1535 = vmatpush1.msra.mxu0 0.0
    %1536 = vmatprep.subr.mxu0 0.0
    %1537 = vmatpush1.msra.mxu0 0.0
    %1538 = vmatprep.subr.mxu0 0.0
    %1539 = vmatpush1.msra.mxu0 0.0
    %1540 = vmatprep.subr.mxu0 0.0
    %1541 = vmatpush1.msra.mxu0 0.0
    %1542 = vmatprep.subr.mxu0 0.0
    %1543 = vmatpush1.msra.mxu0 0.0
    %1544 = vmatprep.subr.mxu0 0.0
    %1545 = vmatpush1.msra.mxu0 0.0
    %1546 = vmatprep.subr.mxu0 0.0
    %1547 = vmatpush1.msra.mxu0 0.0
    %1548 = vmatprep.mubr.f32.mxu0 0.0
    %1549 = vmatmul.mubr.f32.gmra.mrb[0].mxu0 %v1372
    %v1550 = vpop.f32.mrb[0].mxu0
    %v1551 = vadd.f32 0.0, %v1550
    %v1552 = vpop.f32.mrb[0].mxu0
    %v1553 = vadd.f32 0.0, %v1552
    %1554 = vmatprep.mubr.f32.mxu0 0.0
    %1555 = vmatmul.mubr.f32.gmra.mrb[0].mxu0 %v1375
    %v1556 = vpop.f32.mrb[0].mxu0
    %v1557 = vadd.f32 0.0, %v1556
    %v1558 = vpop.f32.mrb[0].mxu0
    %v1559 = vadd.f32 0.0, %v1558
    %1560 = vmatprep.mubr.f32.mxu0 0.0
    %1561 = vmatmul.mubr.f32.gmra.mrb[0].mxu0 %v1378
    %v1562 = vpop.f32.mrb[0].mxu0
    %v1563 = vadd.f32 0.0, %v1562
    %v1564 = vpop.f32.mrb[0].mxu0
    %v1565 = vadd.f32 0.0, %v1564
    %1566 = vmatprep.mubr.f32.mxu0 0.0
    %1567 = vmatmul.mubr.f32.gmra.mrb[0].mxu0 %v1381
    %v1568 = vpop.f32.mrb[0].mxu0
    %v1569 = vadd.f32 0.0, %v1568
    %v1570 = vpop.f32.mrb[0].mxu0
    %v1571 = vadd.f32 0.0, %v1570
    %1572 = vdwg.mxu0
    %1573 = vmatprep.subr.mxu0 %v1393
    %1574 = vmatpush1.msra.mxu0 %v1391
    %1575 = vmatprep.subr.mxu0 0.0
    %1576 = vmatpush1.msra.mxu0 0.0
    %1577 = vmatprep.subr.mxu0 0.0
    %1578 = vmatpush1.msra.mxu0 0.0
    %1579 = vmatprep.subr.mxu0 0.0
    %1580 = vmatpush1.msra.mxu0 0.0
    %1581 = vmatprep.subr.mxu0 0.0
    %1582 = vmatpush1.msra.mxu0 0.0
    %1583 = vmatprep.subr.mxu0 0.0
    %1584 = vmatpush1.msra.mxu0 0.0
    %1585 = vmatprep.subr.mxu0 0.0
    %1586 = vmatpush1.msra.mxu0 0.0
    %1587 = vmatprep.subr.mxu0 0.0
    %1588 = vmatpush1.msra.mxu0 0.0
    %1589 = vmatprep.subr.mxu0 0.0
    %1590 = vmatpush1.msra.mxu0 0.0
    %1591 = vmatprep.subr.mxu0 0.0
    %1592 = vmatpush1.msra.mxu0 0.0
    %1593 = vmatprep.subr.mxu0 0.0
    %1594 = vmatpush1.msra.mxu0 0.0
    %1595 = vmatprep.subr.mxu0 0.0
    %1596 = vmatpush1.msra.mxu0 0.0
    %1597 = vmatprep.subr.mxu0 0.0
    %1598 = vmatpush1.msra.mxu0 0.0
    %1599 = vmatprep.subr.mxu0 0.0
    %1600 = vmatpush1.msra.mxu0 0.0
    %1601 = vmatprep.subr.mxu0 0.0
    %1602 = vmatpush1.msra.mxu0 0.0
    %1603 = vmatprep.subr.mxu0 0.0
    %1604 = vmatpush1.msra.mxu0 0.0
    %1605 = vmatprep.subr.mxu0 0.0
    %1606 = vmatpush1.msra.mxu0 0.0
    %1607 = vmatprep.subr.mxu0 0.0
    %1608 = vmatpush1.msra.mxu0 0.0
    %1609 = vmatprep.subr.mxu0 0.0
    %1610 = vmatpush1.msra.mxu0 0.0
    %1611 = vmatprep.subr.mxu0 0.0
    %1612 = vmatpush1.msra.mxu0 0.0
    %1613 = vmatprep.subr.mxu0 0.0
    %1614 = vmatpush1.msra.mxu0 0.0
    %1615 = vmatprep.subr.mxu0 0.0
    %1616 = vmatpush1.msra.mxu0 0.0
    %1617 = vmatprep.subr.mxu0 0.0
    %1618 = vmatpush1.msra.mxu0 0.0
    %1619 = vmatprep.subr.mxu0 0.0
    %1620 = vmatpush1.msra.mxu0 0.0
    %1621 = vmatprep.subr.mxu0 0.0
    %1622 = vmatpush1.msra.mxu0 0.0
    %1623 = vmatprep.subr.mxu0 0.0
    %1624 = vmatpush1.msra.mxu0 0.0
    %1625 = vmatprep.subr.mxu0 0.0
    %1626 = vmatpush1.msra.mxu0 0.0
    %1627 = vmatprep.subr.mxu0 0.0
    %1628 = vmatpush1.msra.mxu0 0.0
    %1629 = vmatprep.subr.mxu0 0.0
    %1630 = vmatpush1.msra.mxu0 0.0
    %1631 = vmatprep.subr.mxu0 0.0
    %1632 = vmatpush1.msra.mxu0 0.0
    %1633 = vmatprep.subr.mxu0 0.0
    %1634 = vmatpush1.msra.mxu0 0.0
    %1635 = vmatprep.subr.mxu0 0.0
    %1636 = vmatpush1.msra.mxu0 0.0
    %1637 = vmatprep.mubr.f32.mxu0 0.0
    %1638 = vmatmul.mubr.f32.gmra.mrb[0].mxu0 %v1372
    %v1639 = vpop.f32.mrb[0].mxu0
    %v1640 = vadd.f32 0.0, %v1639
    %v1641 = vpop.f32.mrb[0].mxu0
    %v1642 = vadd.f32 0.0, %v1641
    %1643 = vmatprep.mubr.f32.mxu0 0.0
    %1644 = vmatmul.mubr.f32.gmra.mrb[0].mxu0 %v1375
    %v1645 = vpop.f32.mrb[0].mxu0
    %v1646 = vadd.f32 0.0, %v1645
    %v1647 = vpop.f32.mrb[0].mxu0
    %v1648 = vadd.f32 0.0, %v1647
    %1649 = vmatprep.mubr.f32.mxu0 0.0
    %1650 = vmatmul.mubr.f32.gmra.mrb[0].mxu0 %v1378
    %v1651 = vpop.f32.mrb[0].mxu0
    %v1652 = vadd.f32 0.0, %v1651
    %v1653 = vpop.f32.mrb[0].mxu0
    %v1654 = vadd.f32 0.0, %v1653
    %1655 = vmatprep.mubr.f32.mxu0 0.0
    %1656 = vmatmul.mubr.f32.gmra.mrb[0].mxu0 %v1381
    %v1657 = vpop.f32.mrb[0].mxu0
    %v1658 = vadd.f32 0.0, %v1657
    %v1659 = vpop.f32.mrb[0].mxu0
    %v1660 = vadd.f32 0.0, %v1659
    %1661 = vdwg.mxu0
    %v1662 = vadd.f32 %v1342, %v1462
    %v1663 = vadd.f32 %v1343, %v1464
    %v1664 = vadd.f32 %v1344, %v1551
    %v1665 = vadd.f32 %v1345, %v1553
    %v1666 = vadd.f32 %v1346, %v1640
    %v1667 = vadd.f32 %v1347, %v1642
    %v1668 = vadd.f32 %v1348, %v1468
    %v1669 = vadd.f32 %v1349, %v1470
    %v1670 = vadd.f32 %v1350, %v1557
    %v1671 = vadd.f32 %v1351, %v1559
    %v1672 = vadd.f32 %v1352, %v1646
    %v1673 = vadd.f32 %v1353, %v1648
    %v1674 = vadd.f32 %v1354, %v1474
    %v1675 = vadd.f32 %v1355, %v1476
    %v1676 = vadd.f32 %v1356, %v1563
    %v1677 = vadd.f32 %v1357, %v1565
    %v1678 = vadd.f32 %v1358, %v1652
    %v1679 = vadd.f32 %v1359, %v1654
    %v1680 = vadd.f32 %v1360, %v1480
    %v1681 = vadd.f32 %v1361, %v1482
    %v1682 = vadd.f32 %v1362, %v1569
    %v1683 = vadd.f32 %v1363, %v1571
    %v1684 = vadd.f32 %v1364, %v1658
    %v1685 = vadd.f32 %v1365, %v1660
    %1686 = vrot.lane.b32.xlu0 %v18, 127
    %v1687 = vpop.permute.xlu0 %1686
    %1688 = vrot.lane.b32.xlu0 %v25, 127
    %v1689 = vpop.permute.xlu0 %1688
    %1690 = vrot.lane.b32.xlu0 %v19, 127
    %v1691 = vpop.permute.xlu0 %1690
    %1692 = vrot.lane.b32.xlu0 %v26, 127
    %v1693 = vpop.permute.xlu0 %1692
    %1694 = vrot.lane.b32.xlu0 %v20, 127
    %v1695 = vpop.permute.xlu0 %1694
    %1696 = vrot.lane.b32.xlu0 %v27, 127
    %v1697 = vpop.permute.xlu0 %1696
    %vm1698 = vcmp.lt.s32.totalorder %v44, 127
    %v1699 = vsel %vm1698, %v1695, %v1697
    %v1700 = vsel %vm1698, %v1693, %v1695
    %v1701 = vsel %vm1698, %v1691, %v1693
    %v1702 = vsel %vm1698, %v1689, %v1691
    %v1703 = vsel %vm1698, %v1687, %v1689
    %v1704 = vsel %vm1698, %v1697, %v1687
    %s1705 = scalar_lea.vmem %s1, 160
    %v1706 = vld [vmem:[%s1705] sm:$0xff]
    %v1707 = vld [vmem:[%s1705 + $0x8] sm:$0xff]
    %v1708 = vld [vmem:[%s1705 + $0x10] sm:$0xff]
    %v1709 = vld [vmem:[%s1705 + $0x18] sm:$0xff]
    %v1711 = vsel %vm80, %v1706, 0
    %v1714 = vsel %vm80, %v1707, 0
    %v1717 = vsel %vm80, %v1708, 0
    %v1720 = vsel %vm80, %v1709, 0
    %v1723 = vsel %vm93, %v1703, 0
    %v1726 = vsel %vm93, %v1702, 0
    %v1729 = vsel %vm93, %v1701, 0
    %v1732 = vsel %vm93, %v1700, 0
    %v1735 = vsel %vm93, %v1699, 0
    %v1738 = vsel %vm93, %v1704, 0
    %1740 = vmatprep.subr.mxu0 %v1726
    %1741 = vmatpush1.msra.mxu0 %v1723
    %1742 = vmatprep.subr.mxu0 0.0
    %1743 = vmatpush1.msra.mxu0 0.0
    %1744 = vmatprep.subr.mxu0 0.0
    %1745 = vmatpush1.msra.mxu0 0.0
    %1746 = vmatprep.subr.mxu0 0.0
    %1747 = vmatpush1.msra.mxu0 0.0
    %1748 = vmatprep.subr.mxu0 0.0
    %1749 = vmatpush1.msra.mxu0 0.0
    %1750 = vmatprep.subr.mxu0 0.0
    %1751 = vmatpush1.msra.mxu0 0.0
    %1752 = vmatprep.subr.mxu0 0.0
    %1753 = vmatpush1.msra.mxu0 0.0
    %1754 = vmatprep.subr.mxu0 0.0
    %1755 = vmatpush1.msra.mxu0 0.0
    %1756 = vmatprep.subr.mxu0 0.0
    %1757 = vmatpush1.msra.mxu0 0.0
    %1758 = vmatprep.subr.mxu0 0.0
    %1759 = vmatpush1.msra.mxu0 0.0
    %1760 = vmatprep.subr.mxu0 0.0
    %1761 = vmatpush1.msra.mxu0 0.0
    %1762 = vmatprep.subr.mxu0 0.0
    %1763 = vmatpush1.msra.mxu0 0.0
    %1764 = vmatprep.subr.mxu0 0.0
    %1765 = vmatpush1.msra.mxu0 0.0
    %1766 = vmatprep.subr.mxu0 0.0
    %1767 = vmatpush1.msra.mxu0 0.0
    %1768 = vmatprep.subr.mxu0 0.0
    %1769 = vmatpush1.msra.mxu0 0.0
    %1770 = vmatprep.subr.mxu0 0.0
    %1771 = vmatpush1.msra.mxu0 0.0
    %1772 = vmatprep.subr.mxu0 0.0
    %1773 = vmatpush1.msra.mxu0 0.0
    %1774 = vmatprep.subr.mxu0 0.0
    %1775 = vmatpush1.msra.mxu0 0.0
    %1776 = vmatprep.subr.mxu0 0.0
    %1777 = vmatpush1.msra.mxu0 0.0
    %1778 = vmatprep.subr.mxu0 0.0
    %1779 = vmatpush1.msra.mxu0 0.0
    %1780 = vmatprep.subr.mxu0 0.0
    %1781 = vmatpush1.msra.mxu0 0.0
    %1782 = vmatprep.subr.mxu0 0.0
    %1783 = vmatpush1.msra.mxu0 0.0
    %1784 = vmatprep.subr.mxu0 0.0
    %1785 = vmatpush1.msra.mxu0 0.0
    %1786 = vmatprep.subr.mxu0 0.0
    %1787 = vmatpush1.msra.mxu0 0.0
    %1788 = vmatprep.subr.mxu0 0.0
    %1789 = vmatpush1.msra.mxu0 0.0
    %1790 = vmatprep.subr.mxu0 0.0
    %1791 = vmatpush1.msra.mxu0 0.0
    %1792 = vmatprep.subr.mxu0 0.0
    %1793 = vmatpush1.msra.mxu0 0.0
    %1794 = vmatprep.subr.mxu0 0.0
    %1795 = vmatpush1.msra.mxu0 0.0
    %1796 = vmatprep.subr.mxu0 0.0
    %1797 = vmatpush1.msra.mxu0 0.0
    %1798 = vmatprep.subr.mxu0 0.0
    %1799 = vmatpush1.msra.mxu0 0.0
    %1800 = vmatprep.subr.mxu0 0.0
    %1801 = vmatpush1.msra.mxu0 0.0
    %1802 = vmatprep.subr.mxu0 0.0
    %1803 = vmatpush1.msra.mxu0 0.0
    %1804 = vmatprep.mubr.f32.mxu0 0.0
    %1805 = vmatmul.mubr.f32.gmra.mrb[0].mxu0 %v1711
    %v1806 = vpop.f32.mrb[0].mxu0
    %v1807 = vadd.f32 0.0, %v1806
    %v1808 = vpop.f32.mrb[0].mxu0
    %v1809 = vadd.f32 0.0, %v1808
    %1810 = vmatprep.mubr.f32.mxu0 0.0
    %1811 = vmatmul.mubr.f32.gmra.mrb[0].mxu0 %v1714
    %v1812 = vpop.f32.mrb[0].mxu0
    %v1813 = vadd.f32 0.0, %v1812
    %v1814 = vpop.f32.mrb[0].mxu0
    %v1815 = vadd.f32 0.0, %v1814
    %1816 = vmatprep.mubr.f32.mxu0 0.0
    %1817 = vmatmul.mubr.f32.gmra.mrb[0].mxu0 %v1717
    %v1818 = vpop.f32.mrb[0].mxu0
    %v1819 = vadd.f32 0.0, %v1818
    %v1820 = vpop.f32.mrb[0].mxu0
    %v1821 = vadd.f32 0.0, %v1820
    %1822 = vmatprep.mubr.f32.mxu0 0.0
    %1823 = vmatmul.mubr.f32.gmra.mrb[0].mxu0 %v1720
    %v1824 = vpop.f32.mrb[0].mxu0
    %v1825 = vadd.f32 0.0, %v1824
    %v1826 = vpop.f32.mrb[0].mxu0
    %v1827 = vadd.f32 0.0, %v1826
    %1828 = vdwg.mxu0
    %1829 = vmatprep.subr.mxu0 %v1732
    %1830 = vmatpush1.msra.mxu0 %v1729
    %1831 = vmatprep.subr.mxu0 0.0
    %1832 = vmatpush1.msra.mxu0 0.0
    %1833 = vmatprep.subr.mxu0 0.0
    %1834 = vmatpush1.msra.mxu0 0.0
    %1835 = vmatprep.subr.mxu0 0.0
    %1836 = vmatpush1.msra.mxu0 0.0
    %1837 = vmatprep.subr.mxu0 0.0
    %1838 = vmatpush1.msra.mxu0 0.0
    %1839 = vmatprep.subr.mxu0 0.0
    %1840 = vmatpush1.msra.mxu0 0.0
    %1841 = vmatprep.subr.mxu0 0.0
    %1842 = vmatpush1.msra.mxu0 0.0
    %1843 = vmatprep.subr.mxu0 0.0
    %1844 = vmatpush1.msra.mxu0 0.0
    %1845 = vmatprep.subr.mxu0 0.0
    %1846 = vmatpush1.msra.mxu0 0.0
    %1847 = vmatprep.subr.mxu0 0.0
    %1848 = vmatpush1.msra.mxu0 0.0
    %1849 = vmatprep.subr.mxu0 0.0
    %1850 = vmatpush1.msra.mxu0 0.0
    %1851 = vmatprep.subr.mxu0 0.0
    %1852 = vmatpush1.msra.mxu0 0.0
    %1853 = vmatprep.subr.mxu0 0.0
    %1854 = vmatpush1.msra.mxu0 0.0
    %1855 = vmatprep.subr.mxu0 0.0
    %1856 = vmatpush1.msra.mxu0 0.0
    %1857 = vmatprep.subr.mxu0 0.0
    %1858 = vmatpush1.msra.mxu0 0.0
    %1859 = vmatprep.subr.mxu0 0.0
    %1860 = vmatpush1.msra.mxu0 0.0
    %1861 = vmatprep.subr.mxu0 0.0
    %1862 = vmatpush1.msra.mxu0 0.0
    %1863 = vmatprep.subr.mxu0 0.0
    %1864 = vmatpush1.msra.mxu0 0.0
    %1865 = vmatprep.subr.mxu0 0.0
    %1866 = vmatpush1.msra.mxu0 0.0
    %1867 = vmatprep.subr.mxu0 0.0
    %1868 = vmatpush1.msra.mxu0 0.0
    %1869 = vmatprep.subr.mxu0 0.0
    %1870 = vmatpush1.msra.mxu0 0.0
    %1871 = vmatprep.subr.mxu0 0.0
    %1872 = vmatpush1.msra.mxu0 0.0
    %1873 = vmatprep.subr.mxu0 0.0
    %1874 = vmatpush1.msra.mxu0 0.0
    %1875 = vmatprep.subr.mxu0 0.0
    %1876 = vmatpush1.msra.mxu0 0.0
    %1877 = vmatprep.subr.mxu0 0.0
    %1878 = vmatpush1.msra.mxu0 0.0
    %1879 = vmatprep.subr.mxu0 0.0
    %1880 = vmatpush1.msra.mxu0 0.0
    %1881 = vmatprep.subr.mxu0 0.0
    %1882 = vmatpush1.msra.mxu0 0.0
    %1883 = vmatprep.subr.mxu0 0.0
    %1884 = vmatpush1.msra.mxu0 0.0
    %1885 = vmatprep.subr.mxu0 0.0
    %1886 = vmatpush1.msra.mxu0 0.0
    %1887 = vmatprep.subr.mxu0 0.0
    %1888 = vmatpush1.msra.mxu0 0.0
    %1889 = vmatprep.subr.mxu0 0.0
    %1890 = vmatpush1.msra.mxu0 0.0
    %1891 = vmatprep.subr.mxu0 0.0
    %1892 = vmatpush1.msra.mxu0 0.0
    %1893 = vmatprep.mubr.f32.mxu0 0.0
    %1894 = vmatmul.mubr.f32.gmra.mrb[0].mxu0 %v1711
    %v1895 = vpop.f32.mrb[0].mxu0
    %v1896 = vadd.f32 0.0, %v1895
    %v1897 = vpop.f32.mrb[0].mxu0
    %v1898 = vadd.f32 0.0, %v1897
    %1899 = vmatprep.mubr.f32.mxu0 0.0
    %1900 = vmatmul.mubr.f32.gmra.mrb[0].mxu0 %v1714
    %v1901 = vpop.f32.mrb[0].mxu0
    %v1902 = vadd.f32 0.0, %v1901
    %v1903 = vpop.f32.mrb[0].mxu0
    %v1904 = vadd.f32 0.0, %v1903
    %1905 = vmatprep.mubr.f32.mxu0 0.0
    %1906 = vmatmul.mubr.f32.gmra.mrb[0].mxu0 %v1717
    %v1907 = vpop.f32.mrb[0].mxu0
    %v1908 = vadd.f32 0.0, %v1907
    %v1909 = vpop.f32.mrb[0].mxu0
    %v1910 = vadd.f32 0.0, %v1909
    %1911 = vmatprep.mubr.f32.mxu0 0.0
    %1912 = vmatmul.mubr.f32.gmra.mrb[0].mxu0 %v1720
    %v1913 = vpop.f32.mrb[0].mxu0
    %v1914 = vadd.f32 0.0, %v1913
    %v1915 = vpop.f32.mrb[0].mxu0
    %v1916 = vadd.f32 0.0, %v1915
    %1917 = vdwg.mxu0
    %1918 = vmatprep.subr.mxu0 %v1738
    %1919 = vmatpush1.msra.mxu0 %v1735
    %1920 = vmatprep.subr.mxu0 0.0
    %1921 = vmatpush1.msra.mxu0 0.0
    %1922 = vmatprep.subr.mxu0 0.0
    %1923 = vmatpush1.msra.mxu0 0.0
    %1924 = vmatprep.subr.mxu0 0.0
    %1925 = vmatpush1.msra.mxu0 0.0
    %1926 = vmatprep.subr.mxu0 0.0
    %1927 = vmatpush1.msra.mxu0 0.0
    %1928 = vmatprep.subr.mxu0 0.0
    %1929 = vmatpush1.msra.mxu0 0.0
    %1930 = vmatprep.subr.mxu0 0.0
    %1931 = vmatpush1.msra.mxu0 0.0
    %1932 = vmatprep.subr.mxu0 0.0
    %1933 = vmatpush1.msra.mxu0 0.0
    %1934 = vmatprep.subr.mxu0 0.0
    %1935 = vmatpush1.msra.mxu0 0.0
    %1936 = vmatprep.subr.mxu0 0.0
    %1937 = vmatpush1.msra.mxu0 0.0
    %1938 = vmatprep.subr.mxu0 0.0
    %1939 = vmatpush1.msra.mxu0 0.0
    %1940 = vmatprep.subr.mxu0 0.0
    %1941 = vmatpush1.msra.mxu0 0.0
    %1942 = vmatprep.subr.mxu0 0.0
    %1943 = vmatpush1.msra.mxu0 0.0
    %1944 = vmatprep.subr.mxu0 0.0
    %1945 = vmatpush1.msra.mxu0 0.0
    %1946 = vmatprep.subr.mxu0 0.0
    %1947 = vmatpush1.msra.mxu0 0.0
    %1948 = vmatprep.subr.mxu0 0.0
    %1949 = vmatpush1.msra.mxu0 0.0
    %1950 = vmatprep.subr.mxu0 0.0
    %1951 = vmatpush1.msra.mxu0 0.0
    %1952 = vmatprep.subr.mxu0 0.0
    %1953 = vmatpush1.msra.mxu0 0.0
    %1954 = vmatprep.subr.mxu0 0.0
    %1955 = vmatpush1.msra.mxu0 0.0
    %1956 = vmatprep.subr.mxu0 0.0
    %1957 = vmatpush1.msra.mxu0 0.0
    %1958 = vmatprep.subr.mxu0 0.0
    %1959 = vmatpush1.msra.mxu0 0.0
    %1960 = vmatprep.subr.mxu0 0.0
    %1961 = vmatpush1.msra.mxu0 0.0
    %1962 = vmatprep.subr.mxu0 0.0
    %1963 = vmatpush1.msra.mxu0 0.0
    %1964 = vmatprep.subr.mxu0 0.0
    %1965 = vmatpush1.msra.mxu0 0.0
    %1966 = vmatprep.subr.mxu0 0.0
    %1967 = vmatpush1.msra.mxu0 0.0
    %1968 = vmatprep.subr.mxu0 0.0
    %1969 = vmatpush1.msra.mxu0 0.0
    %1970 = vmatprep.subr.mxu0 0.0
    %1971 = vmatpush1.msra.mxu0 0.0
    %1972 = vmatprep.subr.mxu0 0.0
    %1973 = vmatpush1.msra.mxu0 0.0
    %1974 = vmatprep.subr.mxu0 0.0
    %1975 = vmatpush1.msra.mxu0 0.0
    %1976 = vmatprep.subr.mxu0 0.0
    %1977 = vmatpush1.msra.mxu0 0.0
    %1978 = vmatprep.subr.mxu0 0.0
    %1979 = vmatpush1.msra.mxu0 0.0
    %1980 = vmatprep.subr.mxu0 0.0
    %1981 = vmatpush1.msra.mxu0 0.0
    %1982 = vmatprep.mubr.f32.mxu0 0.0
    %1983 = vmatmul.mubr.f32.gmra.mrb[0].mxu0 %v1711
    %v1984 = vpop.f32.mrb[0].mxu0
    %v1985 = vadd.f32 0.0, %v1984
    %v1986 = vpop.f32.mrb[0].mxu0
    %v1987 = vadd.f32 0.0, %v1986
    %1988 = vmatprep.mubr.f32.mxu0 0.0
    %1989 = vmatmul.mubr.f32.gmra.mrb[0].mxu0 %v1714
    %v1990 = vpop.f32.mrb[0].mxu0
    %v1991 = vadd.f32 0.0, %v1990
    %v1992 = vpop.f32.mrb[0].mxu0
    %v1993 = vadd.f32 0.0, %v1992
    %1994 = vmatprep.mubr.f32.mxu0 0.0
    %1995 = vmatmul.mubr.f32.gmra.mrb[0].mxu0 %v1717
    %v1996 = vpop.f32.mrb[0].mxu0
    %v1997 = vadd.f32 0.0, %v1996
    %v1998 = vpop.f32.mrb[0].mxu0
    %v1999 = vadd.f32 0.0, %v1998
    %2000 = vmatprep.mubr.f32.mxu0 0.0
    %2001 = vmatmul.mubr.f32.gmra.mrb[0].mxu0 %v1720
    %v2002 = vpop.f32.mrb[0].mxu0
    %v2003 = vadd.f32 0.0, %v2002
    %v2004 = vpop.f32.mrb[0].mxu0
    %v2005 = vadd.f32 0.0, %v2004
    %2006 = vdwg.mxu0
    %v2007 = vadd.f32 %v1662, %v1807
    %v2008 = vadd.f32 %v1663, %v1809
    %v2009 = vadd.f32 %v1664, %v1896
    %v2010 = vadd.f32 %v1665, %v1898
    %v2011 = vadd.f32 %v1666, %v1985
    %v2012 = vadd.f32 %v1667, %v1987
    %v2013 = vadd.f32 %v1668, %v1813
    %v2014 = vadd.f32 %v1669, %v1815
    %v2015 = vadd.f32 %v1670, %v1902
    %v2016 = vadd.f32 %v1671, %v1904
    %v2017 = vadd.f32 %v1672, %v1991
    %v2018 = vadd.f32 %v1673, %v1993
    %v2019 = vadd.f32 %v1674, %v1819
    %v2020 = vadd.f32 %v1675, %v1821
    %v2021 = vadd.f32 %v1676, %v1908
    %v2022 = vadd.f32 %v1677, %v1910
    %v2023 = vadd.f32 %v1678, %v1997
    %v2024 = vadd.f32 %v1679, %v1999
    %v2025 = vadd.f32 %v1680, %v1825
    %v2026 = vadd.f32 %v1681, %v1827
    %v2027 = vadd.f32 %v1682, %v1914
    %v2028 = vadd.f32 %v1683, %v1916
    %v2029 = vadd.f32 %v1684, %v2003
    %v2030 = vadd.f32 %v1685, %v2005
    %2031 = vrot.lane.b32.xlu0 %v18, 111
    %v2032 = vpop.permute.xlu0 %2031
    %2033 = vrot.lane.b32.xlu0 %v25, 111
    %v2034 = vpop.permute.xlu0 %2033
    %2035 = vrot.lane.b32.xlu0 %v19, 111
    %v2036 = vpop.permute.xlu0 %2035
    %2037 = vrot.lane.b32.xlu0 %v26, 111
    %v2038 = vpop.permute.xlu0 %2037
    %2039 = vrot.lane.b32.xlu0 %v20, 111
    %v2040 = vpop.permute.xlu0 %2039
    %2041 = vrot.lane.b32.xlu0 %v27, 111
    %v2042 = vpop.permute.xlu0 %2041
    %vm2043 = vcmp.lt.s32.totalorder %v44, 111
    %v2044 = vsel %vm2043, %v2040, %v2042
    %v2045 = vsel %vm2043, %v2038, %v2040
    %v2046 = vsel %vm2043, %v2036, %v2038
    %v2047 = vsel %vm2043, %v2034, %v2036
    %v2048 = vsel %vm2043, %v2032, %v2034
    %v2049 = vsel %vm2043, %v2042, %v2032
    %s2050 = scalar_lea.vmem %s1, 192
    %v2051 = vld [vmem:[%s2050] sm:$0xff]
    %v2052 = vld [vmem:[%s2050 + $0x8] sm:$0xff]
    %v2053 = vld [vmem:[%s2050 + $0x10] sm:$0xff]
    %v2054 = vld [vmem:[%s2050 + $0x18] sm:$0xff]
    %v2056 = vsel %vm80, %v2051, 0
    %v2059 = vsel %vm80, %v2052, 0
    %v2062 = vsel %vm80, %v2053, 0
    %v2065 = vsel %vm80, %v2054, 0
    %v2068 = vsel %vm93, %v2048, 0
    %v2071 = vsel %vm93, %v2047, 0
    %v2074 = vsel %vm93, %v2046, 0
    %v2077 = vsel %vm93, %v2045, 0
    %v2080 = vsel %vm93, %v2044, 0
    %v2083 = vsel %vm93, %v2049, 0
    %2085 = vmatprep.subr.mxu0 %v2071
    %2086 = vmatpush1.msra.mxu0 %v2068
    %2087 = vmatprep.subr.mxu0 0.0
    %2088 = vmatpush1.msra.mxu0 0.0
    %2089 = vmatprep.subr.mxu0 0.0
    %2090 = vmatpush1.msra.mxu0 0.0
    %2091 = vmatprep.subr.mxu0 0.0
    %2092 = vmatpush1.msra.mxu0 0.0
    %2093 = vmatprep.subr.mxu0 0.0
    %2094 = vmatpush1.msra.mxu0 0.0
    %2095 = vmatprep.subr.mxu0 0.0
    %2096 = vmatpush1.msra.mxu0 0.0
    %2097 = vmatprep.subr.mxu0 0.0
    %2098 = vmatpush1.msra.mxu0 0.0
    %2099 = vmatprep.subr.mxu0 0.0
    %2100 = vmatpush1.msra.mxu0 0.0
    %2101 = vmatprep.subr.mxu0 0.0
    %2102 = vmatpush1.msra.mxu0 0.0
    %2103 = vmatprep.subr.mxu0 0.0
    %2104 = vmatpush1.msra.mxu0 0.0
    %2105 = vmatprep.subr.mxu0 0.0
    %2106 = vmatpush1.msra.mxu0 0.0
    %2107 = vmatprep.subr.mxu0 0.0
    %2108 = vmatpush1.msra.mxu0 0.0
    %2109 = vmatprep.subr.mxu0 0.0
    %2110 = vmatpush1.msra.mxu0 0.0
    %2111 = vmatprep.subr.mxu0 0.0
    %2112 = vmatpush1.msra.mxu0 0.0
    %2113 = vmatprep.subr.mxu0 0.0
    %2114 = vmatpush1.msra.mxu0 0.0
    %2115 = vmatprep.subr.mxu0 0.0
    %2116 = vmatpush1.msra.mxu0 0.0
    %2117 = vmatprep.subr.mxu0 0.0
    %2118 = vmatpush1.msra.mxu0 0.0
    %2119 = vmatprep.subr.mxu0 0.0
    %2120 = vmatpush1.msra.mxu0 0.0
    %2121 = vmatprep.subr.mxu0 0.0
    %2122 = vmatpush1.msra.mxu0 0.0
    %2123 = vmatprep.subr.mxu0 0.0
    %2124 = vmatpush1.msra.mxu0 0.0
    %2125 = vmatprep.subr.mxu0 0.0
    %2126 = vmatpush1.msra.mxu0 0.0
    %2127 = vmatprep.subr.mxu0 0.0
    %2128 = vmatpush1.msra.mxu0 0.0
    %2129 = vmatprep.subr.mxu0 0.0
    %2130 = vmatpush1.msra.mxu0 0.0
    %2131 = vmatprep.subr.mxu0 0.0
    %2132 = vmatpush1.msra.mxu0 0.0
    %2133 = vmatprep.subr.mxu0 0.0
    %2134 = vmatpush1.msra.mxu0 0.0
    %2135 = vmatprep.subr.mxu0 0.0
    %2136 = vmatpush1.msra.mxu0 0.0
    %2137 = vmatprep.subr.mxu0 0.0
    %2138 = vmatpush1.msra.mxu0 0.0
    %2139 = vmatprep.subr.mxu0 0.0
    %2140 = vmatpush1.msra.mxu0 0.0
    %2141 = vmatprep.subr.mxu0 0.0
    %2142 = vmatpush1.msra.mxu0 0.0
    %2143 = vmatprep.subr.mxu0 0.0
    %2144 = vmatpush1.msra.mxu0 0.0
    %2145 = vmatprep.subr.mxu0 0.0
    %2146 = vmatpush1.msra.mxu0 0.0
    %2147 = vmatprep.subr.mxu0 0.0
    %2148 = vmatpush1.msra.mxu0 0.0
    %2149 = vmatprep.mubr.f32.mxu0 0.0
    %2150 = vmatmul.mubr.f32.gmra.mrb[0].mxu0 %v2056
    %v2151 = vpop.f32.mrb[0].mxu0
    %v2152 = vadd.f32 0.0, %v2151
    %v2153 = vpop.f32.mrb[0].mxu0
    %v2154 = vadd.f32 0.0, %v2153
    %2155 = vmatprep.mubr.f32.mxu0 0.0
    %2156 = vmatmul.mubr.f32.gmra.mrb[0].mxu0 %v2059
    %v2157 = vpop.f32.mrb[0].mxu0
    %v2158 = vadd.f32 0.0, %v2157
    %v2159 = vpop.f32.mrb[0].mxu0
    %v2160 = vadd.f32 0.0, %v2159
    %2161 = vmatprep.mubr.f32.mxu0 0.0
    %2162 = vmatmul.mubr.f32.gmra.mrb[0].mxu0 %v2062
    %v2163 = vpop.f32.mrb[0].mxu0
    %v2164 = vadd.f32 0.0, %v2163
    %v2165 = vpop.f32.mrb[0].mxu0
    %v2166 = vadd.f32 0.0, %v2165
    %2167 = vmatprep.mubr.f32.mxu0 0.0
    %2168 = vmatmul.mubr.f32.gmra.mrb[0].mxu0 %v2065
    %v2169 = vpop.f32.mrb[0].mxu0
    %v2170 = vadd.f32 0.0, %v2169
    %v2171 = vpop.f32.mrb[0].mxu0
    %v2172 = vadd.f32 0.0, %v2171
    %2173 = vdwg.mxu0
    %2174 = vmatprep.subr.mxu0 %v2077
    %2175 = vmatpush1.msra.mxu0 %v2074
    %2176 = vmatprep.subr.mxu0 0.0
    %2177 = vmatpush1.msra.mxu0 0.0
    %2178 = vmatprep.subr.mxu0 0.0
    %2179 = vmatpush1.msra.mxu0 0.0
    %2180 = vmatprep.subr.mxu0 0.0
    %2181 = vmatpush1.msra.mxu0 0.0
    %2182 = vmatprep.subr.mxu0 0.0
    %2183 = vmatpush1.msra.mxu0 0.0
    %2184 = vmatprep.subr.mxu0 0.0
    %2185 = vmatpush1.msra.mxu0 0.0
    %2186 = vmatprep.subr.mxu0 0.0
    %2187 = vmatpush1.msra.mxu0 0.0
    %2188 = vmatprep.subr.mxu0 0.0
    %2189 = vmatpush1.msra.mxu0 0.0
    %2190 = vmatprep.subr.mxu0 0.0
    %2191 = vmatpush1.msra.mxu0 0.0
    %2192 = vmatprep.subr.mxu0 0.0
    %2193 = vmatpush1.msra.mxu0 0.0
    %2194 = vmatprep.subr.mxu0 0.0
    %2195 = vmatpush1.msra.mxu0 0.0
    %2196 = vmatprep.subr.mxu0 0.0
    %2197 = vmatpush1.msra.mxu0 0.0
    %2198 = vmatprep.subr.mxu0 0.0
    %2199 = vmatpush1.msra.mxu0 0.0
    %2200 = vmatprep.subr.mxu0 0.0
    %2201 = vmatpush1.msra.mxu0 0.0
    %2202 = vmatprep.subr.mxu0 0.0
    %2203 = vmatpush1.msra.mxu0 0.0
    %2204 = vmatprep.subr.mxu0 0.0
    %2205 = vmatpush1.msra.mxu0 0.0
    %2206 = vmatprep.subr.mxu0 0.0
    %2207 = vmatpush1.msra.mxu0 0.0
    %2208 = vmatprep.subr.mxu0 0.0
    %2209 = vmatpush1.msra.mxu0 0.0
    %2210 = vmatprep.subr.mxu0 0.0
    %2211 = vmatpush1.msra.mxu0 0.0
    %2212 = vmatprep.subr.mxu0 0.0
    %2213 = vmatpush1.msra.mxu0 0.0
    %2214 = vmatprep.subr.mxu0 0.0
    %2215 = vmatpush1.msra.mxu0 0.0
    %2216 = vmatprep.subr.mxu0 0.0
    %2217 = vmatpush1.msra.mxu0 0.0
    %2218 = vmatprep.subr.mxu0 0.0
    %2219 = vmatpush1.msra.mxu0 0.0
    %2220 = vmatprep.subr.mxu0 0.0
    %2221 = vmatpush1.msra.mxu0 0.0
    %2222 = vmatprep.subr.mxu0 0.0
    %2223 = vmatpush1.msra.mxu0 0.0
    %2224 = vmatprep.subr.mxu0 0.0
    %2225 = vmatpush1.msra.mxu0 0.0
    %2226 = vmatprep.subr.mxu0 0.0
    %2227 = vmatpush1.msra.mxu0 0.0
    %2228 = vmatprep.subr.mxu0 0.0
    %2229 = vmatpush1.msra.mxu0 0.0
    %2230 = vmatprep.subr.mxu0 0.0
    %2231 = vmatpush1.msra.mxu0 0.0
    %2232 = vmatprep.subr.mxu0 0.0
    %2233 = vmatpush1.msra.mxu0 0.0
    %2234 = vmatprep.subr.mxu0 0.0
    %2235 = vmatpush1.msra.mxu0 0.0
    %2236 = vmatprep.subr.mxu0 0.0
    %2237 = vmatpush1.msra.mxu0 0.0
    %2238 = vmatprep.mubr.f32.mxu0 0.0
    %2239 = vmatmul.mubr.f32.gmra.mrb[0].mxu0 %v2056
    %v2240 = vpop.f32.mrb[0].mxu0
    %v2241 = vadd.f32 0.0, %v2240
    %v2242 = vpop.f32.mrb[0].mxu0
    %v2243 = vadd.f32 0.0, %v2242
    %2244 = vmatprep.mubr.f32.mxu0 0.0
    %2245 = vmatmul.mubr.f32.gmra.mrb[0].mxu0 %v2059
    %v2246 = vpop.f32.mrb[0].mxu0
    %v2247 = vadd.f32 0.0, %v2246
    %v2248 = vpop.f32.mrb[0].mxu0
    %v2249 = vadd.f32 0.0, %v2248
    %2250 = vmatprep.mubr.f32.mxu0 0.0
    %2251 = vmatmul.mubr.f32.gmra.mrb[0].mxu0 %v2062
    %v2252 = vpop.f32.mrb[0].mxu0
    %v2253 = vadd.f32 0.0, %v2252
    %v2254 = vpop.f32.mrb[0].mxu0
    %v2255 = vadd.f32 0.0, %v2254
    %2256 = vmatprep.mubr.f32.mxu0 0.0
    %2257 = vmatmul.mubr.f32.gmra.mrb[0].mxu0 %v2065
    %v2258 = vpop.f32.mrb[0].mxu0
    %v2259 = vadd.f32 0.0, %v2258
    %v2260 = vpop.f32.mrb[0].mxu0
    %v2261 = vadd.f32 0.0, %v2260
    %2262 = vdwg.mxu0
    %2263 = vmatprep.subr.mxu0 %v2083
    %2264 = vmatpush1.msra.mxu0 %v2080
    %2265 = vmatprep.subr.mxu0 0.0
    %2266 = vmatpush1.msra.mxu0 0.0
    %2267 = vmatprep.subr.mxu0 0.0
    %2268 = vmatpush1.msra.mxu0 0.0
    %2269 = vmatprep.subr.mxu0 0.0
    %2270 = vmatpush1.msra.mxu0 0.0
    %2271 = vmatprep.subr.mxu0 0.0
    %2272 = vmatpush1.msra.mxu0 0.0
    %2273 = vmatprep.subr.mxu0 0.0
    %2274 = vmatpush1.msra.mxu0 0.0
    %2275 = vmatprep.subr.mxu0 0.0
    %2276 = vmatpush1.msra.mxu0 0.0
    %2277 = vmatprep.subr.mxu0 0.0
    %2278 = vmatpush1.msra.mxu0 0.0
    %2279 = vmatprep.subr.mxu0 0.0
    %2280 = vmatpush1.msra.mxu0 0.0
    %2281 = vmatprep.subr.mxu0 0.0
    %2282 = vmatpush1.msra.mxu0 0.0
    %2283 = vmatprep.subr.mxu0 0.0
    %2284 = vmatpush1.msra.mxu0 0.0
    %2285 = vmatprep.subr.mxu0 0.0
    %2286 = vmatpush1.msra.mxu0 0.0
    %2287 = vmatprep.subr.mxu0 0.0
    %2288 = vmatpush1.msra.mxu0 0.0
    %2289 = vmatprep.subr.mxu0 0.0
    %2290 = vmatpush1.msra.mxu0 0.0
    %2291 = vmatprep.subr.mxu0 0.0
    %2292 = vmatpush1.msra.mxu0 0.0
    %2293 = vmatprep.subr.mxu0 0.0
    %2294 = vmatpush1.msra.mxu0 0.0
    %2295 = vmatprep.subr.mxu0 0.0
    %2296 = vmatpush1.msra.mxu0 0.0
    %2297 = vmatprep.subr.mxu0 0.0
    %2298 = vmatpush1.msra.mxu0 0.0
    %2299 = vmatprep.subr.mxu0 0.0
    %2300 = vmatpush1.msra.mxu0 0.0
    %2301 = vmatprep.subr.mxu0 0.0
    %2302 = vmatpush1.msra.mxu0 0.0
    %2303 = vmatprep.subr.mxu0 0.0
    %2304 = vmatpush1.msra.mxu0 0.0
    %2305 = vmatprep.subr.mxu0 0.0
    %2306 = vmatpush1.msra.mxu0 0.0
    %2307 = vmatprep.subr.mxu0 0.0
    %2308 = vmatpush1.msra.mxu0 0.0
    %2309 = vmatprep.subr.mxu0 0.0
    %2310 = vmatpush1.msra.mxu0 0.0
    %2311 = vmatprep.subr.mxu0 0.0
    %2312 = vmatpush1.msra.mxu0 0.0
    %2313 = vmatprep.subr.mxu0 0.0
    %2314 = vmatpush1.msra.mxu0 0.0
    %2315 = vmatprep.subr.mxu0 0.0
    %2316 = vmatpush1.msra.mxu0 0.0
    %2317 = vmatprep.subr.mxu0 0.0
    %2318 = vmatpush1.msra.mxu0 0.0
    %2319 = vmatprep.subr.mxu0 0.0
    %2320 = vmatpush1.msra.mxu0 0.0
    %2321 = vmatprep.subr.mxu0 0.0
    %2322 = vmatpush1.msra.mxu0 0.0
    %2323 = vmatprep.subr.mxu0 0.0
    %2324 = vmatpush1.msra.mxu0 0.0
    %2325 = vmatprep.subr.mxu0 0.0
    %2326 = vmatpush1.msra.mxu0 0.0
    %2327 = vmatprep.mubr.f32.mxu0 0.0
    %2328 = vmatmul.mubr.f32.gmra.mrb[0].mxu0 %v2056
    %v2329 = vpop.f32.mrb[0].mxu0
    %v2330 = vadd.f32 0.0, %v2329
    %v2331 = vpop.f32.mrb[0].mxu0
    %v2332 = vadd.f32 0.0, %v2331
    %2333 = vmatprep.mubr.f32.mxu0 0.0
    %2334 = vmatmul.mubr.f32.gmra.mrb[0].mxu0 %v2059
    %v2335 = vpop.f32.mrb[0].mxu0
    %v2336 = vadd.f32 0.0, %v2335
    %v2337 = vpop.f32.mrb[0].mxu0
    %v2338 = vadd.f32 0.0, %v2337
    %2339 = vmatprep.mubr.f32.mxu0 0.0
    %2340 = vmatmul.mubr.f32.gmra.mrb[0].mxu0 %v2062
    %v2341 = vpop.f32.mrb[0].mxu0
    %v2342 = vadd.f32 0.0, %v2341
    %v2343 = vpop.f32.mrb[0].mxu0
    %v2344 = vadd.f32 0.0, %v2343
    %2345 = vmatprep.mubr.f32.mxu0 0.0
    %2346 = vmatmul.mubr.f32.gmra.mrb[0].mxu0 %v2065
    %v2347 = vpop.f32.mrb[0].mxu0
    %v2348 = vadd.f32 0.0, %v2347
    %v2349 = vpop.f32.mrb[0].mxu0
    %v2350 = vadd.f32 0.0, %v2349
    %2351 = vdwg.mxu0
    %v2352 = vadd.f32 %v2007, %v2152
    %v2353 = vadd.f32 %v2008, %v2154
    %v2354 = vadd.f32 %v2009, %v2241
    %v2355 = vadd.f32 %v2010, %v2243
    %v2356 = vadd.f32 %v2011, %v2330
    %v2357 = vadd.f32 %v2012, %v2332
    %v2358 = vadd.f32 %v2013, %v2158
    %v2359 = vadd.f32 %v2014, %v2160
    %v2360 = vadd.f32 %v2015, %v2247
    %v2361 = vadd.f32 %v2016, %v2249
    %v2362 = vadd.f32 %v2017, %v2336
    %v2363 = vadd.f32 %v2018, %v2338
    %v2364 = vadd.f32 %v2019, %v2164
    %v2365 = vadd.f32 %v2020, %v2166
    %v2366 = vadd.f32 %v2021, %v2253
    %v2367 = vadd.f32 %v2022, %v2255
    %v2368 = vadd.f32 %v2023, %v2342
    %v2369 = vadd.f32 %v2024, %v2344
    %v2370 = vadd.f32 %v2025, %v2170
    %v2371 = vadd.f32 %v2026, %v2172
    %v2372 = vadd.f32 %v2027, %v2259
    %v2373 = vadd.f32 %v2028, %v2261
    %v2374 = vadd.f32 %v2029, %v2348
    %v2375 = vadd.f32 %v2030, %v2350
    %2376 = vrot.lane.b32.xlu0 %v18, 110
    %v2377 = vpop.permute.xlu0 %2376
    %2378 = vrot.lane.b32.xlu0 %v25, 110
    %v2379 = vpop.permute.xlu0 %2378
    %2380 = vrot.lane.b32.xlu0 %v19, 110
    %v2381 = vpop.permute.xlu0 %2380
    %2382 = vrot.lane.b32.xlu0 %v26, 110
    %v2383 = vpop.permute.xlu0 %2382
    %2384 = vrot.lane.b32.xlu0 %v20, 110
    %v2385 = vpop.permute.xlu0 %2384
    %2386 = vrot.lane.b32.xlu0 %v27, 110
    %v2387 = vpop.permute.xlu0 %2386
    %vm2388 = vcmp.lt.s32.totalorder %v44, 110
    %v2389 = vsel %vm2388, %v2385, %v2387
    %v2390 = vsel %vm2388, %v2383, %v2385
    %v2391 = vsel %vm2388, %v2381, %v2383
    %v2392 = vsel %vm2388, %v2379, %v2381
    %v2393 = vsel %vm2388, %v2377, %v2379
    %v2394 = vsel %vm2388, %v2387, %v2377
    %s2395 = scalar_lea.vmem %s1, 224
    %v2396 = vld [vmem:[%s2395] sm:$0xff]
    %v2397 = vld [vmem:[%s2395 + $0x8] sm:$0xff]
    %v2398 = vld [vmem:[%s2395 + $0x10] sm:$0xff]
    %v2399 = vld [vmem:[%s2395 + $0x18] sm:$0xff]
    %v2401 = vsel %vm80, %v2396, 0
    %v2404 = vsel %vm80, %v2397, 0
    %v2407 = vsel %vm80, %v2398, 0
    %v2410 = vsel %vm80, %v2399, 0
    %v2413 = vsel %vm93, %v2393, 0
    %v2416 = vsel %vm93, %v2392, 0
    %v2419 = vsel %vm93, %v2391, 0
    %v2422 = vsel %vm93, %v2390, 0
    %v2425 = vsel %vm93, %v2389, 0
    %v2428 = vsel %vm93, %v2394, 0
    %2430 = vmatprep.subr.mxu0 %v2416
    %2431 = vmatpush1.msra.mxu0 %v2413
    %2432 = vmatprep.subr.mxu0 0.0
    %2433 = vmatpush1.msra.mxu0 0.0
    %2434 = vmatprep.subr.mxu0 0.0
    %2435 = vmatpush1.msra.mxu0 0.0
    %2436 = vmatprep.subr.mxu0 0.0
    %2437 = vmatpush1.msra.mxu0 0.0
    %2438 = vmatprep.subr.mxu0 0.0
    %2439 = vmatpush1.msra.mxu0 0.0
    %2440 = vmatprep.subr.mxu0 0.0
    %2441 = vmatpush1.msra.mxu0 0.0
    %2442 = vmatprep.subr.mxu0 0.0
    %2443 = vmatpush1.msra.mxu0 0.0
    %2444 = vmatprep.subr.mxu0 0.0
    %2445 = vmatpush1.msra.mxu0 0.0
    %2446 = vmatprep.subr.mxu0 0.0
    %2447 = vmatpush1.msra.mxu0 0.0
    %2448 = vmatprep.subr.mxu0 0.0
    %2449 = vmatpush1.msra.mxu0 0.0
    %2450 = vmatprep.subr.mxu0 0.0
    %2451 = vmatpush1.msra.mxu0 0.0
    %2452 = vmatprep.subr.mxu0 0.0
    %2453 = vmatpush1.msra.mxu0 0.0
    %2454 = vmatprep.subr.mxu0 0.0
    %2455 = vmatpush1.msra.mxu0 0.0
    %2456 = vmatprep.subr.mxu0 0.0
    %2457 = vmatpush1.msra.mxu0 0.0
    %2458 = vmatprep.subr.mxu0 0.0
    %2459 = vmatpush1.msra.mxu0 0.0
    %2460 = vmatprep.subr.mxu0 0.0
    %2461 = vmatpush1.msra.mxu0 0.0
    %2462 = vmatprep.subr.mxu0 0.0
    %2463 = vmatpush1.msra.mxu0 0.0
    %2464 = vmatprep.subr.mxu0 0.0
    %2465 = vmatpush1.msra.mxu0 0.0
    %2466 = vmatprep.subr.mxu0 0.0
    %2467 = vmatpush1.msra.mxu0 0.0
    %2468 = vmatprep.subr.mxu0 0.0
    %2469 = vmatpush1.msra.mxu0 0.0
    %2470 = vmatprep.subr.mxu0 0.0
    %2471 = vmatpush1.msra.mxu0 0.0
    %2472 = vmatprep.subr.mxu0 0.0
    %2473 = vmatpush1.msra.mxu0 0.0
    %2474 = vmatprep.subr.mxu0 0.0
    %2475 = vmatpush1.msra.mxu0 0.0
    %2476 = vmatprep.subr.mxu0 0.0
    %2477 = vmatpush1.msra.mxu0 0.0
    %2478 = vmatprep.subr.mxu0 0.0
    %2479 = vmatpush1.msra.mxu0 0.0
    %2480 = vmatprep.subr.mxu0 0.0
    %2481 = vmatpush1.msra.mxu0 0.0
    %2482 = vmatprep.subr.mxu0 0.0
    %2483 = vmatpush1.msra.mxu0 0.0
    %2484 = vmatprep.subr.mxu0 0.0
    %2485 = vmatpush1.msra.mxu0 0.0
    %2486 = vmatprep.subr.mxu0 0.0
    %2487 = vmatpush1.msra.mxu0 0.0
    %2488 = vmatprep.subr.mxu0 0.0
    %2489 = vmatpush1.msra.mxu0 0.0
    %2490 = vmatprep.subr.mxu0 0.0
    %2491 = vmatpush1.msra.mxu0 0.0
    %2492 = vmatprep.subr.mxu0 0.0
    %2493 = vmatpush1.msra.mxu0 0.0
    %2494 = vmatprep.mubr.f32.mxu0 0.0
    %2495 = vmatmul.mubr.f32.gmra.mrb[0].mxu0 %v2401
    %v2496 = vpop.f32.mrb[0].mxu0
    %v2497 = vadd.f32 0.0, %v2496
    %v2498 = vpop.f32.mrb[0].mxu0
    %v2499 = vadd.f32 0.0, %v2498
    %2500 = vmatprep.mubr.f32.mxu0 0.0
    %2501 = vmatmul.mubr.f32.gmra.mrb[0].mxu0 %v2404
    %v2502 = vpop.f32.mrb[0].mxu0
    %v2503 = vadd.f32 0.0, %v2502
    %v2504 = vpop.f32.mrb[0].mxu0
    %v2505 = vadd.f32 0.0, %v2504
    %2506 = vmatprep.mubr.f32.mxu0 0.0
    %2507 = vmatmul.mubr.f32.gmra.mrb[0].mxu0 %v2407
    %v2508 = vpop.f32.mrb[0].mxu0
    %v2509 = vadd.f32 0.0, %v2508
    %v2510 = vpop.f32.mrb[0].mxu0
    %v2511 = vadd.f32 0.0, %v2510
    %2512 = vmatprep.mubr.f32.mxu0 0.0
    %2513 = vmatmul.mubr.f32.gmra.mrb[0].mxu0 %v2410
    %v2514 = vpop.f32.mrb[0].mxu0
    %v2515 = vadd.f32 0.0, %v2514
    %v2516 = vpop.f32.mrb[0].mxu0
    %v2517 = vadd.f32 0.0, %v2516
    %2518 = vdwg.mxu0
    %2519 = vmatprep.subr.mxu0 %v2422
    %2520 = vmatpush1.msra.mxu0 %v2419
    %2521 = vmatprep.subr.mxu0 0.0
    %2522 = vmatpush1.msra.mxu0 0.0
    %2523 = vmatprep.subr.mxu0 0.0
    %2524 = vmatpush1.msra.mxu0 0.0
    %2525 = vmatprep.subr.mxu0 0.0
    %2526 = vmatpush1.msra.mxu0 0.0
    %2527 = vmatprep.subr.mxu0 0.0
    %2528 = vmatpush1.msra.mxu0 0.0
    %2529 = vmatprep.subr.mxu0 0.0
    %2530 = vmatpush1.msra.mxu0 0.0
    %2531 = vmatprep.subr.mxu0 0.0
    %2532 = vmatpush1.msra.mxu0 0.0
    %2533 = vmatprep.subr.mxu0 0.0
    %2534 = vmatpush1.msra.mxu0 0.0
    %2535 = vmatprep.subr.mxu0 0.0
    %2536 = vmatpush1.msra.mxu0 0.0
    %2537 = vmatprep.subr.mxu0 0.0
    %2538 = vmatpush1.msra.mxu0 0.0
    %2539 = vmatprep.subr.mxu0 0.0
    %2540 = vmatpush1.msra.mxu0 0.0
    %2541 = vmatprep.subr.mxu0 0.0
    %2542 = vmatpush1.msra.mxu0 0.0
    %2543 = vmatprep.subr.mxu0 0.0
    %2544 = vmatpush1.msra.mxu0 0.0
    %2545 = vmatprep.subr.mxu0 0.0
    %2546 = vmatpush1.msra.mxu0 0.0
    %2547 = vmatprep.subr.mxu0 0.0
    %2548 = vmatpush1.msra.mxu0 0.0
    %2549 = vmatprep.subr.mxu0 0.0
    %2550 = vmatpush1.msra.mxu0 0.0
    %2551 = vmatprep.subr.mxu0 0.0
    %2552 = vmatpush1.msra.mxu0 0.0
    %2553 = vmatprep.subr.mxu0 0.0
    %2554 = vmatpush1.msra.mxu0 0.0
    %2555 = vmatprep.subr.mxu0 0.0
    %2556 = vmatpush1.msra.mxu0 0.0
    %2557 = vmatprep.subr.mxu0 0.0
    %2558 = vmatpush1.msra.mxu0 0.0
    %2559 = vmatprep.subr.mxu0 0.0
    %2560 = vmatpush1.msra.mxu0 0.0
    %2561 = vmatprep.subr.mxu0 0.0
    %2562 = vmatpush1.msra.mxu0 0.0
    %2563 = vmatprep.subr.mxu0 0.0
    %2564 = vmatpush1.msra.mxu0 0.0
    %2565 = vmatprep.subr.mxu0 0.0
    %2566 = vmatpush1.msra.mxu0 0.0
    %2567 = vmatprep.subr.mxu0 0.0
    %2568 = vmatpush1.msra.mxu0 0.0
    %2569 = vmatprep.subr.mxu0 0.0
    %2570 = vmatpush1.msra.mxu0 0.0
    %2571 = vmatprep.subr.mxu0 0.0
    %2572 = vmatpush1.msra.mxu0 0.0
    %2573 = vmatprep.subr.mxu0 0.0
    %2574 = vmatpush1.msra.mxu0 0.0
    %2575 = vmatprep.subr.mxu0 0.0
    %2576 = vmatpush1.msra.mxu0 0.0
    %2577 = vmatprep.subr.mxu0 0.0
    %2578 = vmatpush1.msra.mxu0 0.0
    %2579 = vmatprep.subr.mxu0 0.0
    %2580 = vmatpush1.msra.mxu0 0.0
    %2581 = vmatprep.subr.mxu0 0.0
    %2582 = vmatpush1.msra.mxu0 0.0
    %2583 = vmatprep.mubr.f32.mxu0 0.0
    %2584 = vmatmul.mubr.f32.gmra.mrb[0].mxu0 %v2401
    %v2585 = vpop.f32.mrb[0].mxu0
    %v2586 = vadd.f32 0.0, %v2585
    %v2587 = vpop.f32.mrb[0].mxu0
    %v2588 = vadd.f32 0.0, %v2587
    %2589 = vmatprep.mubr.f32.mxu0 0.0
    %2590 = vmatmul.mubr.f32.gmra.mrb[0].mxu0 %v2404
    %v2591 = vpop.f32.mrb[0].mxu0
    %v2592 = vadd.f32 0.0, %v2591
    %v2593 = vpop.f32.mrb[0].mxu0
    %v2594 = vadd.f32 0.0, %v2593
    %2595 = vmatprep.mubr.f32.mxu0 0.0
    %2596 = vmatmul.mubr.f32.gmra.mrb[0].mxu0 %v2407
    %v2597 = vpop.f32.mrb[0].mxu0
    %v2598 = vadd.f32 0.0, %v2597
    %v2599 = vpop.f32.mrb[0].mxu0
    %v2600 = vadd.f32 0.0, %v2599
    %2601 = vmatprep.mubr.f32.mxu0 0.0
    %2602 = vmatmul.mubr.f32.gmra.mrb[0].mxu0 %v2410
    %v2603 = vpop.f32.mrb[0].mxu0
    %v2604 = vadd.f32 0.0, %v2603
    %v2605 = vpop.f32.mrb[0].mxu0
    %v2606 = vadd.f32 0.0, %v2605
    %2607 = vdwg.mxu0
    %2608 = vmatprep.subr.mxu0 %v2428
    %2609 = vmatpush1.msra.mxu0 %v2425
    %2610 = vmatprep.subr.mxu0 0.0
    %2611 = vmatpush1.msra.mxu0 0.0
    %2612 = vmatprep.subr.mxu0 0.0
    %2613 = vmatpush1.msra.mxu0 0.0
    %2614 = vmatprep.subr.mxu0 0.0
    %2615 = vmatpush1.msra.mxu0 0.0
    %2616 = vmatprep.subr.mxu0 0.0
    %2617 = vmatpush1.msra.mxu0 0.0
    %2618 = vmatprep.subr.mxu0 0.0
    %2619 = vmatpush1.msra.mxu0 0.0
    %2620 = vmatprep.subr.mxu0 0.0
    %2621 = vmatpush1.msra.mxu0 0.0
    %2622 = vmatprep.subr.mxu0 0.0
    %2623 = vmatpush1.msra.mxu0 0.0
    %2624 = vmatprep.subr.mxu0 0.0
    %2625 = vmatpush1.msra.mxu0 0.0
    %2626 = vmatprep.subr.mxu0 0.0
    %2627 = vmatpush1.msra.mxu0 0.0
    %2628 = vmatprep.subr.mxu0 0.0
    %2629 = vmatpush1.msra.mxu0 0.0
    %2630 = vmatprep.subr.mxu0 0.0
    %2631 = vmatpush1.msra.mxu0 0.0
    %2632 = vmatprep.subr.mxu0 0.0
    %2633 = vmatpush1.msra.mxu0 0.0
    %2634 = vmatprep.subr.mxu0 0.0
    %2635 = vmatpush1.msra.mxu0 0.0
    %2636 = vmatprep.subr.mxu0 0.0
    %2637 = vmatpush1.msra.mxu0 0.0
    %2638 = vmatprep.subr.mxu0 0.0
    %2639 = vmatpush1.msra.mxu0 0.0
    %2640 = vmatprep.subr.mxu0 0.0
    %2641 = vmatpush1.msra.mxu0 0.0
    %2642 = vmatprep.subr.mxu0 0.0
    %2643 = vmatpush1.msra.mxu0 0.0
    %2644 = vmatprep.subr.mxu0 0.0
    %2645 = vmatpush1.msra.mxu0 0.0
    %2646 = vmatprep.subr.mxu0 0.0
    %2647 = vmatpush1.msra.mxu0 0.0
    %2648 = vmatprep.subr.mxu0 0.0
    %2649 = vmatpush1.msra.mxu0 0.0
    %2650 = vmatprep.subr.mxu0 0.0
    %2651 = vmatpush1.msra.mxu0 0.0
    %2652 = vmatprep.subr.mxu0 0.0
    %2653 = vmatpush1.msra.mxu0 0.0
    %2654 = vmatprep.subr.mxu0 0.0
    %2655 = vmatpush1.msra.mxu0 0.0
    %2656 = vmatprep.subr.mxu0 0.0
    %2657 = vmatpush1.msra.mxu0 0.0
    %2658 = vmatprep.subr.mxu0 0.0
    %2659 = vmatpush1.msra.mxu0 0.0
    %2660 = vmatprep.subr.mxu0 0.0
    %2661 = vmatpush1.msra.mxu0 0.0
    %2662 = vmatprep.subr.mxu0 0.0
    %2663 = vmatpush1.msra.mxu0 0.0
    %2664 = vmatprep.subr.mxu0 0.0
    %2665 = vmatpush1.msra.mxu0 0.0
    %2666 = vmatprep.subr.mxu0 0.0
    %2667 = vmatpush1.msra.mxu0 0.0
    %2668 = vmatprep.subr.mxu0 0.0
    %2669 = vmatpush1.msra.mxu0 0.0
    %2670 = vmatprep.subr.mxu0 0.0
    %2671 = vmatpush1.msra.mxu0 0.0
    %2672 = vmatprep.mubr.f32.mxu0 0.0
    %2673 = vmatmul.mubr.f32.gmra.mrb[0].mxu0 %v2401
    %v2674 = vpop.f32.mrb[0].mxu0
    %v2675 = vadd.f32 0.0, %v2674
    %v2676 = vpop.f32.mrb[0].mxu0
    %v2677 = vadd.f32 0.0, %v2676
    %2678 = vmatprep.mubr.f32.mxu0 0.0
    %2679 = vmatmul.mubr.f32.gmra.mrb[0].mxu0 %v2404
    %v2680 = vpop.f32.mrb[0].mxu0
    %v2681 = vadd.f32 0.0, %v2680
    %v2682 = vpop.f32.mrb[0].mxu0
    %v2683 = vadd.f32 0.0, %v2682
    %2684 = vmatprep.mubr.f32.mxu0 0.0
    %2685 = vmatmul.mubr.f32.gmra.mrb[0].mxu0 %v2407
    %v2686 = vpop.f32.mrb[0].mxu0
    %v2687 = vadd.f32 0.0, %v2686
    %v2688 = vpop.f32.mrb[0].mxu0
    %v2689 = vadd.f32 0.0, %v2688
    %2690 = vmatprep.mubr.f32.mxu0 0.0
    %2691 = vmatmul.mubr.f32.gmra.mrb[0].mxu0 %v2410
    %v2692 = vpop.f32.mrb[0].mxu0
    %v2693 = vadd.f32 0.0, %v2692
    %v2694 = vpop.f32.mrb[0].mxu0
    %v2695 = vadd.f32 0.0, %v2694
    %2696 = vdwg.mxu0
    %v2697 = vadd.f32 %v2352, %v2497
    %v2698 = vadd.f32 %v2353, %v2499
    %v2699 = vadd.f32 %v2354, %v2586
    %v2700 = vadd.f32 %v2355, %v2588
    %v2701 = vadd.f32 %v2356, %v2675
    %v2702 = vadd.f32 %v2357, %v2677
    %v2703 = vadd.f32 %v2358, %v2503
    %v2704 = vadd.f32 %v2359, %v2505
    %v2705 = vadd.f32 %v2360, %v2592
    %v2706 = vadd.f32 %v2361, %v2594
    %v2707 = vadd.f32 %v2362, %v2681
    %v2708 = vadd.f32 %v2363, %v2683
    %v2709 = vadd.f32 %v2364, %v2509
    %v2710 = vadd.f32 %v2365, %v2511
    %v2711 = vadd.f32 %v2366, %v2598
    %v2712 = vadd.f32 %v2367, %v2600
    %v2713 = vadd.f32 %v2368, %v2687
    %v2714 = vadd.f32 %v2369, %v2689
    %v2715 = vadd.f32 %v2370, %v2515
    %v2716 = vadd.f32 %v2371, %v2517
    %v2717 = vadd.f32 %v2372, %v2604
    %v2718 = vadd.f32 %v2373, %v2606
    %v2719 = vadd.f32 %v2374, %v2693
    %v2720 = vadd.f32 %v2375, %v2695
    %2721 = vrot.lane.b32.xlu0 %v18, 109
    %v2722 = vpop.permute.xlu0 %2721
    %2723 = vrot.lane.b32.xlu0 %v25, 109
    %v2724 = vpop.permute.xlu0 %2723
    %2725 = vrot.lane.b32.xlu0 %v19, 109
    %v2726 = vpop.permute.xlu0 %2725
    %2727 = vrot.lane.b32.xlu0 %v26, 109
    %v2728 = vpop.permute.xlu0 %2727
    %2729 = vrot.lane.b32.xlu0 %v20, 109
    %v2730 = vpop.permute.xlu0 %2729
    %2731 = vrot.lane.b32.xlu0 %v27, 109
    %v2732 = vpop.permute.xlu0 %2731
    %vm2733 = vcmp.lt.s32.totalorder %v44, 109
    %v2734 = vsel %vm2733, %v2730, %v2732
    %v2735 = vsel %vm2733, %v2728, %v2730
    %v2736 = vsel %vm2733, %v2726, %v2728
    %v2737 = vsel %vm2733, %v2724, %v2726
    %v2738 = vsel %vm2733, %v2722, %v2724
    %v2739 = vsel %vm2733, %v2732, %v2722
    %s2740 = scalar_lea.vmem %s1, 256
    %v2741 = vld [vmem:[%s2740] sm:$0xff]
    %v2742 = vld [vmem:[%s2740 + $0x8] sm:$0xff]
    %v2743 = vld [vmem:[%s2740 + $0x10] sm:$0xff]
    %v2744 = vld [vmem:[%s2740 + $0x18] sm:$0xff]
    %v2746 = vsel %vm80, %v2741, 0
    %v2749 = vsel %vm80, %v2742, 0
    %v2752 = vsel %vm80, %v2743, 0
    %v2755 = vsel %vm80, %v2744, 0
    %v2758 = vsel %vm93, %v2738, 0
    %v2761 = vsel %vm93, %v2737, 0
    %v2764 = vsel %vm93, %v2736, 0
    %v2767 = vsel %vm93, %v2735, 0
    %v2770 = vsel %vm93, %v2734, 0
    %v2773 = vsel %vm93, %v2739, 0
    %2775 = vmatprep.subr.mxu0 %v2761
    %2776 = vmatpush1.msra.mxu0 %v2758
    %2777 = vmatprep.subr.mxu0 0.0
    %2778 = vmatpush1.msra.mxu0 0.0
    %2779 = vmatprep.subr.mxu0 0.0
    %2780 = vmatpush1.msra.mxu0 0.0
    %2781 = vmatprep.subr.mxu0 0.0
    %2782 = vmatpush1.msra.mxu0 0.0
    %2783 = vmatprep.subr.mxu0 0.0
    %2784 = vmatpush1.msra.mxu0 0.0
    %2785 = vmatprep.subr.mxu0 0.0
    %2786 = vmatpush1.msra.mxu0 0.0
    %2787 = vmatprep.subr.mxu0 0.0
    %2788 = vmatpush1.msra.mxu0 0.0
    %2789 = vmatprep.subr.mxu0 0.0
    %2790 = vmatpush1.msra.mxu0 0.0
    %2791 = vmatprep.subr.mxu0 0.0
    %2792 = vmatpush1.msra.mxu0 0.0
    %2793 = vmatprep.subr.mxu0 0.0
    %2794 = vmatpush1.msra.mxu0 0.0
    %2795 = vmatprep.subr.mxu0 0.0
    %2796 = vmatpush1.msra.mxu0 0.0
    %2797 = vmatprep.subr.mxu0 0.0
    %2798 = vmatpush1.msra.mxu0 0.0
    %2799 = vmatprep.subr.mxu0 0.0
    %2800 = vmatpush1.msra.mxu0 0.0
    %2801 = vmatprep.subr.mxu0 0.0
    %2802 = vmatpush1.msra.mxu0 0.0
    %2803 = vmatprep.subr.mxu0 0.0
    %2804 = vmatpush1.msra.mxu0 0.0
    %2805 = vmatprep.subr.mxu0 0.0
    %2806 = vmatpush1.msra.mxu0 0.0
    %2807 = vmatprep.subr.mxu0 0.0
    %2808 = vmatpush1.msra.mxu0 0.0
    %2809 = vmatprep.subr.mxu0 0.0
    %2810 = vmatpush1.msra.mxu0 0.0
    %2811 = vmatprep.subr.mxu0 0.0
    %2812 = vmatpush1.msra.mxu0 0.0
    %2813 = vmatprep.subr.mxu0 0.0
    %2814 = vmatpush1.msra.mxu0 0.0
    %2815 = vmatprep.subr.mxu0 0.0
    %2816 = vmatpush1.msra.mxu0 0.0
    %2817 = vmatprep.subr.mxu0 0.0
    %2818 = vmatpush1.msra.mxu0 0.0
    %2819 = vmatprep.subr.mxu0 0.0
    %2820 = vmatpush1.msra.mxu0 0.0
    %2821 = vmatprep.subr.mxu0 0.0
    %2822 = vmatpush1.msra.mxu0 0.0
    %2823 = vmatprep.subr.mxu0 0.0
    %2824 = vmatpush1.msra.mxu0 0.0
    %2825 = vmatprep.subr.mxu0 0.0
    %2826 = vmatpush1.msra.mxu0 0.0
    %2827 = vmatprep.subr.mxu0 0.0
    %2828 = vmatpush1.msra.mxu0 0.0
    %2829 = vmatprep.subr.mxu0 0.0
    %2830 = vmatpush1.msra.mxu0 0.0
    %2831 = vmatprep.subr.mxu0 0.0
    %2832 = vmatpush1.msra.mxu0 0.0
    %2833 = vmatprep.subr.mxu0 0.0
    %2834 = vmatpush1.msra.mxu0 0.0
    %2835 = vmatprep.subr.mxu0 0.0
    %2836 = vmatpush1.msra.mxu0 0.0
    %2837 = vmatprep.subr.mxu0 0.0
    %2838 = vmatpush1.msra.mxu0 0.0
    %2839 = vmatprep.mubr.f32.mxu0 0.0
    %2840 = vmatmul.mubr.f32.gmra.mrb[0].mxu0 %v2746
    %v2841 = vpop.f32.mrb[0].mxu0
    %v2842 = vadd.f32 0.0, %v2841
    %v2843 = vpop.f32.mrb[0].mxu0
    %v2844 = vadd.f32 0.0, %v2843
    %2845 = vmatprep.mubr.f32.mxu0 0.0
    %2846 = vmatmul.mubr.f32.gmra.mrb[0].mxu0 %v2749
    %v2847 = vpop.f32.mrb[0].mxu0
    %v2848 = vadd.f32 0.0, %v2847
    %v2849 = vpop.f32.mrb[0].mxu0
    %v2850 = vadd.f32 0.0, %v2849
    %2851 = vmatprep.mubr.f32.mxu0 0.0
    %2852 = vmatmul.mubr.f32.gmra.mrb[0].mxu0 %v2752
    %v2853 = vpop.f32.mrb[0].mxu0
    %v2854 = vadd.f32 0.0, %v2853
    %v2855 = vpop.f32.mrb[0].mxu0
    %v2856 = vadd.f32 0.0, %v2855
    %2857 = vmatprep.mubr.f32.mxu0 0.0
    %2858 = vmatmul.mubr.f32.gmra.mrb[0].mxu0 %v2755
    %v2859 = vpop.f32.mrb[0].mxu0
    %v2860 = vadd.f32 0.0, %v2859
    %v2861 = vpop.f32.mrb[0].mxu0
    %v2862 = vadd.f32 0.0, %v2861
    %2863 = vdwg.mxu0
    %2864 = vmatprep.subr.mxu0 %v2767
    %2865 = vmatpush1.msra.mxu0 %v2764
    %2866 = vmatprep.subr.mxu0 0.0
    %2867 = vmatpush1.msra.mxu0 0.0
    %2868 = vmatprep.subr.mxu0 0.0
    %2869 = vmatpush1.msra.mxu0 0.0
    %2870 = vmatprep.subr.mxu0 0.0
    %2871 = vmatpush1.msra.mxu0 0.0
    %2872 = vmatprep.subr.mxu0 0.0
    %2873 = vmatpush1.msra.mxu0 0.0
    %2874 = vmatprep.subr.mxu0 0.0
    %2875 = vmatpush1.msra.mxu0 0.0
    %2876 = vmatprep.subr.mxu0 0.0
    %2877 = vmatpush1.msra.mxu0 0.0
    %2878 = vmatprep.subr.mxu0 0.0
    %2879 = vmatpush1.msra.mxu0 0.0
    %2880 = vmatprep.subr.mxu0 0.0
    %2881 = vmatpush1.msra.mxu0 0.0
    %2882 = vmatprep.subr.mxu0 0.0
    %2883 = vmatpush1.msra.mxu0 0.0
    %2884 = vmatprep.subr.mxu0 0.0
    %2885 = vmatpush1.msra.mxu0 0.0
    %2886 = vmatprep.subr.mxu0 0.0
    %2887 = vmatpush1.msra.mxu0 0.0
    %2888 = vmatprep.subr.mxu0 0.0
    %2889 = vmatpush1.msra.mxu0 0.0
    %2890 = vmatprep.subr.mxu0 0.0
    %2891 = vmatpush1.msra.mxu0 0.0
    %2892 = vmatprep.subr.mxu0 0.0
    %2893 = vmatpush1.msra.mxu0 0.0
    %2894 = vmatprep.subr.mxu0 0.0
    %2895 = vmatpush1.msra.mxu0 0.0
    %2896 = vmatprep.subr.mxu0 0.0
    %2897 = vmatpush1.msra.mxu0 0.0
    %2898 = vmatprep.subr.mxu0 0.0
    %2899 = vmatpush1.msra.mxu0 0.0
    %2900 = vmatprep.subr.mxu0 0.0
    %2901 = vmatpush1.msra.mxu0 0.0
    %2902 = vmatprep.subr.mxu0 0.0
    %2903 = vmatpush1.msra.mxu0 0.0
    %2904 = vmatprep.subr.mxu0 0.0
    %2905 = vmatpush1.msra.mxu0 0.0
    %2906 = vmatprep.subr.mxu0 0.0
    %2907 = vmatpush1.msra.mxu0 0.0
    %2908 = vmatprep.subr.mxu0 0.0
    %2909 = vmatpush1.msra.mxu0 0.0
    %2910 = vmatprep.subr.mxu0 0.0
    %2911 = vmatpush1.msra.mxu0 0.0
    %2912 = vmatprep.subr.mxu0 0.0
    %2913 = vmatpush1.msra.mxu0 0.0
    %2914 = vmatprep.subr.mxu0 0.0
    %2915 = vmatpush1.msra.mxu0 0.0
    %2916 = vmatprep.subr.mxu0 0.0
    %2917 = vmatpush1.msra.mxu0 0.0
    %2918 = vmatprep.subr.mxu0 0.0
    %2919 = vmatpush1.msra.mxu0 0.0
    %2920 = vmatprep.subr.mxu0 0.0
    %2921 = vmatpush1.msra.mxu0 0.0
    %2922 = vmatprep.subr.mxu0 0.0
    %2923 = vmatpush1.msra.mxu0 0.0
    %2924 = vmatprep.subr.mxu0 0.0
    %2925 = vmatpush1.msra.mxu0 0.0
    %2926 = vmatprep.subr.mxu0 0.0
    %2927 = vmatpush1.msra.mxu0 0.0
    %2928 = vmatprep.mubr.f32.mxu0 0.0
    %2929 = vmatmul.mubr.f32.gmra.mrb[0].mxu0 %v2746
    %v2930 = vpop.f32.mrb[0].mxu0
    %v2931 = vadd.f32 0.0, %v2930
    %v2932 = vpop.f32.mrb[0].mxu0
    %v2933 = vadd.f32 0.0, %v2932
    %2934 = vmatprep.mubr.f32.mxu0 0.0
    %2935 = vmatmul.mubr.f32.gmra.mrb[0].mxu0 %v2749
    %v2936 = vpop.f32.mrb[0].mxu0
    %v2937 = vadd.f32 0.0, %v2936
    %v2938 = vpop.f32.mrb[0].mxu0
    %v2939 = vadd.f32 0.0, %v2938
    %2940 = vmatprep.mubr.f32.mxu0 0.0
    %2941 = vmatmul.mubr.f32.gmra.mrb[0].mxu0 %v2752
    %v2942 = vpop.f32.mrb[0].mxu0
    %v2943 = vadd.f32 0.0, %v2942
    %v2944 = vpop.f32.mrb[0].mxu0
    %v2945 = vadd.f32 0.0, %v2944
    %2946 = vmatprep.mubr.f32.mxu0 0.0
    %2947 = vmatmul.mubr.f32.gmra.mrb[0].mxu0 %v2755
    %v2948 = vpop.f32.mrb[0].mxu0
    %v2949 = vadd.f32 0.0, %v2948
    %v2950 = vpop.f32.mrb[0].mxu0
    %v2951 = vadd.f32 0.0, %v2950
    %2952 = vdwg.mxu0
    %2953 = vmatprep.subr.mxu0 %v2773
    %2954 = vmatpush1.msra.mxu0 %v2770
    %2955 = vmatprep.subr.mxu0 0.0
    %2956 = vmatpush1.msra.mxu0 0.0
    %2957 = vmatprep.subr.mxu0 0.0
    %2958 = vmatpush1.msra.mxu0 0.0
    %2959 = vmatprep.subr.mxu0 0.0
    %2960 = vmatpush1.msra.mxu0 0.0
    %2961 = vmatprep.subr.mxu0 0.0
    %2962 = vmatpush1.msra.mxu0 0.0
    %2963 = vmatprep.subr.mxu0 0.0
    %2964 = vmatpush1.msra.mxu0 0.0
    %2965 = vmatprep.subr.mxu0 0.0
    %2966 = vmatpush1.msra.mxu0 0.0
    %2967 = vmatprep.subr.mxu0 0.0
    %2968 = vmatpush1.msra.mxu0 0.0
    %2969 = vmatprep.subr.mxu0 0.0
    %2970 = vmatpush1.msra.mxu0 0.0
    %2971 = vmatprep.subr.mxu0 0.0
    %2972 = vmatpush1.msra.mxu0 0.0
    %2973 = vmatprep.subr.mxu0 0.0
    %2974 = vmatpush1.msra.mxu0 0.0
    %2975 = vmatprep.subr.mxu0 0.0
    %2976 = vmatpush1.msra.mxu0 0.0
    %2977 = vmatprep.subr.mxu0 0.0
    %2978 = vmatpush1.msra.mxu0 0.0
    %2979 = vmatprep.subr.mxu0 0.0
    %2980 = vmatpush1.msra.mxu0 0.0
    %2981 = vmatprep.subr.mxu0 0.0
    %2982 = vmatpush1.msra.mxu0 0.0
    %2983 = vmatprep.subr.mxu0 0.0
    %2984 = vmatpush1.msra.mxu0 0.0
    %2985 = vmatprep.subr.mxu0 0.0
    %2986 = vmatpush1.msra.mxu0 0.0
    %2987 = vmatprep.subr.mxu0 0.0
    %2988 = vmatpush1.msra.mxu0 0.0
    %2989 = vmatprep.subr.mxu0 0.0
    %2990 = vmatpush1.msra.mxu0 0.0
    %2991 = vmatprep.subr.mxu0 0.0
    %2992 = vmatpush1.msra.mxu0 0.0
    %2993 = vmatprep.subr.mxu0 0.0
    %2994 = vmatpush1.msra.mxu0 0.0
    %2995 = vmatprep.subr.mxu0 0.0
    %2996 = vmatpush1.msra.mxu0 0.0
    %2997 = vmatprep.subr.mxu0 0.0
    %2998 = vmatpush1.msra.mxu0 0.0
    %2999 = vmatprep.subr.mxu0 0.0
    %3000 = vmatpush1.msra.mxu0 0.0
    %3001 = vmatprep.subr.mxu0 0.0
    %3002 = vmatpush1.msra.mxu0 0.0
    %3003 = vmatprep.subr.mxu0 0.0
    %3004 = vmatpush1.msra.mxu0 0.0
    %3005 = vmatprep.subr.mxu0 0.0
    %3006 = vmatpush1.msra.mxu0 0.0
    %3007 = vmatprep.subr.mxu0 0.0
    %3008 = vmatpush1.msra.mxu0 0.0
    %3009 = vmatprep.subr.mxu0 0.0
    %3010 = vmatpush1.msra.mxu0 0.0
    %3011 = vmatprep.subr.mxu0 0.0
    %3012 = vmatpush1.msra.mxu0 0.0
    %3013 = vmatprep.subr.mxu0 0.0
    %3014 = vmatpush1.msra.mxu0 0.0
    %3015 = vmatprep.subr.mxu0 0.0
    %3016 = vmatpush1.msra.mxu0 0.0
    %3017 = vmatprep.mubr.f32.mxu0 0.0
    %3018 = vmatmul.mubr.f32.gmra.mrb[0].mxu0 %v2746
    %v3019 = vpop.f32.mrb[0].mxu0
    %v3020 = vadd.f32 0.0, %v3019
    %v3021 = vpop.f32.mrb[0].mxu0
    %v3022 = vadd.f32 0.0, %v3021
    %3023 = vmatprep.mubr.f32.mxu0 0.0
    %3024 = vmatmul.mubr.f32.gmra.mrb[0].mxu0 %v2749
    %v3025 = vpop.f32.mrb[0].mxu0
    %v3026 = vadd.f32 0.0, %v3025
    %v3027 = vpop.f32.mrb[0].mxu0
    %v3028 = vadd.f32 0.0, %v3027
    %3029 = vmatprep.mubr.f32.mxu0 0.0
    %3030 = vmatmul.mubr.f32.gmra.mrb[0].mxu0 %v2752
    %v3031 = vpop.f32.mrb[0].mxu0
    %v3032 = vadd.f32 0.0, %v3031
    %v3033 = vpop.f32.mrb[0].mxu0
    %v3034 = vadd.f32 0.0, %v3033
    %3035 = vmatprep.mubr.f32.mxu0 0.0
    %3036 = vmatmul.mubr.f32.gmra.mrb[0].mxu0 %v2755
    %v3037 = vpop.f32.mrb[0].mxu0
    %v3038 = vadd.f32 0.0, %v3037
    %v3039 = vpop.f32.mrb[0].mxu0
    %v3040 = vadd.f32 0.0, %v3039
    %3041 = vdwg.mxu0
    %v3042 = vadd.f32 %v2697, %v2842
    %v3043 = vadd.f32 %v2698, %v2844
    %v3044 = vadd.f32 %v2699, %v2931
    %v3045 = vadd.f32 %v2700, %v2933
    %v3046 = vadd.f32 %v2701, %v3020
    %v3047 = vadd.f32 %v2702, %v3022
    %v3048 = vadd.f32 %v2703, %v2848
    %v3049 = vadd.f32 %v2704, %v2850
    %v3050 = vadd.f32 %v2705, %v2937
    %v3051 = vadd.f32 %v2706, %v2939
    %v3052 = vadd.f32 %v2707, %v3026
    %v3053 = vadd.f32 %v2708, %v3028
    %v3054 = vadd.f32 %v2709, %v2854
    %v3055 = vadd.f32 %v2710, %v2856
    %v3056 = vadd.f32 %v2711, %v2943
    %v3057 = vadd.f32 %v2712, %v2945
    %v3058 = vadd.f32 %v2713, %v3032
    %v3059 = vadd.f32 %v2714, %v3034
    %v3060 = vadd.f32 %v2715, %v2860
    %v3061 = vadd.f32 %v2716, %v2862
    %v3062 = vadd.f32 %v2717, %v2949
    %v3063 = vadd.f32 %v2718, %v2951
    %v3064 = vadd.f32 %v2719, %v3038
    %v3065 = vadd.f32 %v2720, %v3040
    %v3066 = vmax.f32 %v3042, 0.0
    %v3067 = vmax.f32 %v3043, 0.0
    %v3068 = vmax.f32 %v3044, 0.0
    %v3069 = vmax.f32 %v3045, 0.0
    %v3070 = vmax.f32 %v3046, 0.0
    %v3071 = vmax.f32 %v3047, 0.0
    %v3072 = vmax.f32 %v3048, 0.0
    %v3073 = vmax.f32 %v3049, 0.0
    %v3074 = vmax.f32 %v3050, 0.0
    %v3075 = vmax.f32 %v3051, 0.0
    %v3076 = vmax.f32 %v3052, 0.0
    %v3077 = vmax.f32 %v3053, 0.0
    %v3078 = vmax.f32 %v3054, 0.0
    %v3079 = vmax.f32 %v3055, 0.0
    %v3080 = vmax.f32 %v3056, 0.0
    %v3081 = vmax.f32 %v3057, 0.0
    %v3082 = vmax.f32 %v3058, 0.0
    %v3083 = vmax.f32 %v3059, 0.0
    %v3084 = vmax.f32 %v3060, 0.0
    %v3085 = vmax.f32 %v3061, 0.0
    %v3086 = vmax.f32 %v3062, 0.0
    %v3087 = vmax.f32 %v3063, 0.0
    %v3088 = vmax.f32 %v3064, 0.0
    %v3089 = vmax.f32 %v3065, 0.0
    %v3091 = vlaneseq
    %v3092 = vshrl.u32 %v3091, 7
    %v3093 = vsub.s32 0, %v3092
    %v3094 = vrot.slane %v21, %v3093
    %v3095 = vlaneseq
    %v3096 = vshrl.u32 %v3095, 7
    %v3097 = vsub.s32 1, %v3096
    %v3098 = vrot.slane %v21, %v3097
    %v3099 = vlaneseq
    %v3100 = vshrl.u32 %v3099, 7
    %v3101 = vsub.s32 2, %v3100
    %v3102 = vrot.slane %v21, %v3101
    %v3103 = vlaneseq
    %v3104 = vshrl.u32 %v3103, 7
    %v3105 = vsub.s32 3, %v3104
    %v3106 = vrot.slane %v21, %v3105
    %v3107 = vlaneseq
    %v3108 = vshrl.u32 %v3107, 7
    %v3109 = vsub.s32 4, %v3108
    %v3110 = vrot.slane %v21, %v3109
    %v3111 = vlaneseq
    %v3112 = vshrl.u32 %v3111, 7
    %v3113 = vsub.s32 5, %v3112
    %v3114 = vrot.slane %v21, %v3113
    %v3121 = vmul.f32 %v3066, %v3094
    %v3122 = vmul.f32 %v3067, %v3098
    %v3123 = vmul.f32 %v3068, %v3102
    %v3124 = vmul.f32 %v3069, %v3106
    %v3125 = vmul.f32 %v3070, %v3110
    %v3126 = vmul.f32 %v3071, %v3114
    %v3127 = vmul.f32 %v3072, %v3094
    %v3128 = vmul.f32 %v3073, %v3098
    %v3129 = vmul.f32 %v3074, %v3102
    %v3130 = vmul.f32 %v3075, %v3106
    %v3131 = vmul.f32 %v3076, %v3110
    %v3132 = vmul.f32 %v3077, %v3114
    %v3133 = vmul.f32 %v3078, %v3094
    %v3134 = vmul.f32 %v3079, %v3098
    %v3135 = vmul.f32 %v3080, %v3102
    %v3136 = vmul.f32 %v3081, %v3106
    %v3137 = vmul.f32 %v3082, %v3110
    %v3138 = vmul.f32 %v3083, %v3114
    %v3139 = vmul.f32 %v3084, %v3094
    %v3140 = vmul.f32 %v3085, %v3098
    %v3141 = vmul.f32 %v3086, %v3102
    %v3142 = vmul.f32 %v3087, %v3106
    %v3143 = vmul.f32 %v3088, %v3110
    %v3144 = vmul.f32 %v3089, %v3114
    %v3145 = vld [vmem:[%s2] sm:$0xff]
    %vm3146 = vcmask 261120
    %v3148 = vsel %vm3146, %v3145, 0
    %3150 = vmatprep.subr.mxu0 %v3122
    %3151 = vmatpush1.msra.mxu0 %v3121
    %3152 = vmatprep.subr.mxu0 %v3128
    %3153 = vmatpush1.msra.mxu0 %v3127
    %3154 = vmatprep.subr.mxu0 %v3134
    %3155 = vmatpush1.msra.mxu0 %v3133
    %3156 = vmatprep.subr.mxu0 %v3140
    %3157 = vmatpush1.msra.mxu0 %v3139
    %3158 = vmatprep.subr.mxu0 0.0
    %3159 = vmatpush1.msra.mxu0 0.0
    %3160 = vmatprep.subr.mxu0 0.0
    %3161 = vmatpush1.msra.mxu0 0.0
    %3162 = vmatprep.subr.mxu0 0.0
    %3163 = vmatpush1.msra.mxu0 0.0
    %3164 = vmatprep.subr.mxu0 0.0
    %3165 = vmatpush1.msra.mxu0 0.0
    %3166 = vmatprep.subr.mxu0 0.0
    %3167 = vmatpush1.msra.mxu0 0.0
    %3168 = vmatprep.subr.mxu0 0.0
    %3169 = vmatpush1.msra.mxu0 0.0
    %3170 = vmatprep.subr.mxu0 0.0
    %3171 = vmatpush1.msra.mxu0 0.0
    %3172 = vmatprep.subr.mxu0 0.0
    %3173 = vmatpush1.msra.mxu0 0.0
    %3174 = vmatprep.subr.mxu0 0.0
    %3175 = vmatpush1.msra.mxu0 0.0
    %3176 = vmatprep.subr.mxu0 0.0
    %3177 = vmatpush1.msra.mxu0 0.0
    %3178 = vmatprep.subr.mxu0 0.0
    %3179 = vmatpush1.msra.mxu0 0.0
    %3180 = vmatprep.subr.mxu0 0.0
    %3181 = vmatpush1.msra.mxu0 0.0
    %3182 = vmatprep.subr.mxu0 0.0
    %3183 = vmatpush1.msra.mxu0 0.0
    %3184 = vmatprep.subr.mxu0 0.0
    %3185 = vmatpush1.msra.mxu0 0.0
    %3186 = vmatprep.subr.mxu0 0.0
    %3187 = vmatpush1.msra.mxu0 0.0
    %3188 = vmatprep.subr.mxu0 0.0
    %3189 = vmatpush1.msra.mxu0 0.0
    %3190 = vmatprep.subr.mxu0 0.0
    %3191 = vmatpush1.msra.mxu0 0.0
    %3192 = vmatprep.subr.mxu0 0.0
    %3193 = vmatpush1.msra.mxu0 0.0
    %3194 = vmatprep.subr.mxu0 0.0
    %3195 = vmatpush1.msra.mxu0 0.0
    %3196 = vmatprep.subr.mxu0 0.0
    %3197 = vmatpush1.msra.mxu0 0.0
    %3198 = vmatprep.subr.mxu0 0.0
    %3199 = vmatpush1.msra.mxu0 0.0
    %3200 = vmatprep.subr.mxu0 0.0
    %3201 = vmatpush1.msra.mxu0 0.0
    %3202 = vmatprep.subr.mxu0 0.0
    %3203 = vmatpush1.msra.mxu0 0.0
    %3204 = vmatprep.subr.mxu0 0.0
    %3205 = vmatpush1.msra.mxu0 0.0
    %3206 = vmatprep.subr.mxu0 0.0
    %3207 = vmatpush1.msra.mxu0 0.0
    %3208 = vmatprep.subr.mxu0 0.0
    %3209 = vmatpush1.msra.mxu0 0.0
    %3210 = vmatprep.subr.mxu0 0.0
    %3211 = vmatpush1.msra.mxu0 0.0
    %3212 = vmatprep.subr.mxu0 0.0
    %3213 = vmatpush1.msra.mxu0 0.0
    %3214 = vmatprep.mubr.f32.mxu0 0.0
    %3215 = vmatmul.mubr.f32.gmra.mrb[0].mxu0 %v3148
    %v3216 = vpop.f32.mrb[0].mxu0
    %v3217 = vadd.f32 0.0, %v3216
    %v3218 = vpop.f32.mrb[0].mxu0
    %v3219 = vadd.f32 0.0, %v3218
    %3220 = vdwg.mxu0
    %3221 = vmatprep.subr.mxu0 %v3124
    %3222 = vmatpush1.msra.mxu0 %v3123
    %3223 = vmatprep.subr.mxu0 %v3130
    %3224 = vmatpush1.msra.mxu0 %v3129
    %3225 = vmatprep.subr.mxu0 %v3136
    %3226 = vmatpush1.msra.mxu0 %v3135
    %3227 = vmatprep.subr.mxu0 %v3142
    %3228 = vmatpush1.msra.mxu0 %v3141
    %3229 = vmatprep.subr.mxu0 0.0
    %3230 = vmatpush1.msra.mxu0 0.0
    %3231 = vmatprep.subr.mxu0 0.0
    %3232 = vmatpush1.msra.mxu0 0.0
    %3233 = vmatprep.subr.mxu0 0.0
    %3234 = vmatpush1.msra.mxu0 0.0
    %3235 = vmatprep.subr.mxu0 0.0
    %3236 = vmatpush1.msra.mxu0 0.0
    %3237 = vmatprep.subr.mxu0 0.0
    %3238 = vmatpush1.msra.mxu0 0.0
    %3239 = vmatprep.subr.mxu0 0.0
    %3240 = vmatpush1.msra.mxu0 0.0
    %3241 = vmatprep.subr.mxu0 0.0
    %3242 = vmatpush1.msra.mxu0 0.0
    %3243 = vmatprep.subr.mxu0 0.0
    %3244 = vmatpush1.msra.mxu0 0.0
    %3245 = vmatprep.subr.mxu0 0.0
    %3246 = vmatpush1.msra.mxu0 0.0
    %3247 = vmatprep.subr.mxu0 0.0
    %3248 = vmatpush1.msra.mxu0 0.0
    %3249 = vmatprep.subr.mxu0 0.0
    %3250 = vmatpush1.msra.mxu0 0.0
    %3251 = vmatprep.subr.mxu0 0.0
    %3252 = vmatpush1.msra.mxu0 0.0
    %3253 = vmatprep.subr.mxu0 0.0
    %3254 = vmatpush1.msra.mxu0 0.0
    %3255 = vmatprep.subr.mxu0 0.0
    %3256 = vmatpush1.msra.mxu0 0.0
    %3257 = vmatprep.subr.mxu0 0.0
    %3258 = vmatpush1.msra.mxu0 0.0
    %3259 = vmatprep.subr.mxu0 0.0
    %3260 = vmatpush1.msra.mxu0 0.0
    %3261 = vmatprep.subr.mxu0 0.0
    %3262 = vmatpush1.msra.mxu0 0.0
    %3263 = vmatprep.subr.mxu0 0.0
    %3264 = vmatpush1.msra.mxu0 0.0
    %3265 = vmatprep.subr.mxu0 0.0
    %3266 = vmatpush1.msra.mxu0 0.0
    %3267 = vmatprep.subr.mxu0 0.0
    %3268 = vmatpush1.msra.mxu0 0.0
    %3269 = vmatprep.subr.mxu0 0.0
    %3270 = vmatpush1.msra.mxu0 0.0
    %3271 = vmatprep.subr.mxu0 0.0
    %3272 = vmatpush1.msra.mxu0 0.0
    %3273 = vmatprep.subr.mxu0 0.0
    %3274 = vmatpush1.msra.mxu0 0.0
    %3275 = vmatprep.subr.mxu0 0.0
    %3276 = vmatpush1.msra.mxu0 0.0
    %3277 = vmatprep.subr.mxu0 0.0
    %3278 = vmatpush1.msra.mxu0 0.0
    %3279 = vmatprep.subr.mxu0 0.0
    %3280 = vmatpush1.msra.mxu0 0.0
    %3281 = vmatprep.subr.mxu0 0.0
    %3282 = vmatpush1.msra.mxu0 0.0
    %3283 = vmatprep.subr.mxu0 0.0
    %3284 = vmatpush1.msra.mxu0 0.0
    %3285 = vmatprep.mubr.f32.mxu0 0.0
    %3286 = vmatmul.mubr.f32.gmra.mrb[0].mxu0 %v3148
    %v3287 = vpop.f32.mrb[0].mxu0
    %v3288 = vadd.f32 0.0, %v3287
    %v3289 = vpop.f32.mrb[0].mxu0
    %v3290 = vadd.f32 0.0, %v3289
    %3291 = vdwg.mxu0
    %3292 = vmatprep.subr.mxu0 %v3126
    %3293 = vmatpush1.msra.mxu0 %v3125
    %3294 = vmatprep.subr.mxu0 %v3132
    %3295 = vmatpush1.msra.mxu0 %v3131
    %3296 = vmatprep.subr.mxu0 %v3138
    %3297 = vmatpush1.msra.mxu0 %v3137
    %3298 = vmatprep.subr.mxu0 %v3144
    %3299 = vmatpush1.msra.mxu0 %v3143
    %3300 = vmatprep.subr.mxu0 0.0
    %3301 = vmatpush1.msra.mxu0 0.0
    %3302 = vmatprep.subr.mxu0 0.0
    %3303 = vmatpush1.msra.mxu0 0.0
    %3304 = vmatprep.subr.mxu0 0.0
    %3305 = vmatpush1.msra.mxu0 0.0
    %3306 = vmatprep.subr.mxu0 0.0
    %3307 = vmatpush1.msra.mxu0 0.0
    %3308 = vmatprep.subr.mxu0 0.0
    %3309 = vmatpush1.msra.mxu0 0.0
    %3310 = vmatprep.subr.mxu0 0.0
    %3311 = vmatpush1.msra.mxu0 0.0
    %3312 = vmatprep.subr.mxu0 0.0
    %3313 = vmatpush1.msra.mxu0 0.0
    %3314 = vmatprep.subr.mxu0 0.0
    %3315 = vmatpush1.msra.mxu0 0.0
    %3316 = vmatprep.subr.mxu0 0.0
    %3317 = vmatpush1.msra.mxu0 0.0
    %3318 = vmatprep.subr.mxu0 0.0
    %3319 = vmatpush1.msra.mxu0 0.0
    %3320 = vmatprep.subr.mxu0 0.0
    %3321 = vmatpush1.msra.mxu0 0.0
    %3322 = vmatprep.subr.mxu0 0.0
    %3323 = vmatpush1.msra.mxu0 0.0
    %3324 = vmatprep.subr.mxu0 0.0
    %3325 = vmatpush1.msra.mxu0 0.0
    %3326 = vmatprep.subr.mxu0 0.0
    %3327 = vmatpush1.msra.mxu0 0.0
    %3328 = vmatprep.subr.mxu0 0.0
    %3329 = vmatpush1.msra.mxu0 0.0
    %3330 = vmatprep.subr.mxu0 0.0
    %3331 = vmatpush1.msra.mxu0 0.0
    %3332 = vmatprep.subr.mxu0 0.0
    %3333 = vmatpush1.msra.mxu0 0.0
    %3334 = vmatprep.subr.mxu0 0.0
    %3335 = vmatpush1.msra.mxu0 0.0
    %3336 = vmatprep.subr.mxu0 0.0
    %3337 = vmatpush1.msra.mxu0 0.0
    %3338 = vmatprep.subr.mxu0 0.0
    %3339 = vmatpush1.msra.mxu0 0.0
    %3340 = vmatprep.subr.mxu0 0.0
    %3341 = vmatpush1.msra.mxu0 0.0
    %3342 = vmatprep.subr.mxu0 0.0
    %3343 = vmatpush1.msra.mxu0 0.0
    %3344 = vmatprep.subr.mxu0 0.0
    %3345 = vmatpush1.msra.mxu0 0.0
    %3346 = vmatprep.subr.mxu0 0.0
    %3347 = vmatpush1.msra.mxu0 0.0
    %3348 = vmatprep.subr.mxu0 0.0
    %3349 = vmatpush1.msra.mxu0 0.0
    %3350 = vmatprep.subr.mxu0 0.0
    %3351 = vmatpush1.msra.mxu0 0.0
    %3352 = vmatprep.subr.mxu0 0.0
    %3353 = vmatpush1.msra.mxu0 0.0
    %3354 = vmatprep.subr.mxu0 0.0
    %3355 = vmatpush1.msra.mxu0 0.0
    %3356 = vmatprep.mubr.f32.mxu0 0.0
    %3357 = vmatmul.mubr.f32.gmra.mrb[0].mxu0 %v3148
    %v3358 = vpop.f32.mrb[0].mxu0
    %v3359 = vadd.f32 0.0, %v3358
    %v3360 = vpop.f32.mrb[0].mxu0
    %v3361 = vadd.f32 0.0, %v3360
    %3362 = vdwg.mxu0
    %3363 = vrot.lane.b32.xlu0 %v3217, 19
    %v3364 = vpop.permute.xlu0 %3363
    %3365 = vrot.lane.b32.xlu0 %v3219, 19
    %v3366 = vpop.permute.xlu0 %3365
    %3367 = vrot.lane.b32.xlu0 %v3288, 19
    %v3368 = vpop.permute.xlu0 %3367
    %3369 = vrot.lane.b32.xlu0 %v3290, 19
    %v3370 = vpop.permute.xlu0 %3369
    %3371 = vrot.lane.b32.xlu0 %v3359, 19
    %v3372 = vpop.permute.xlu0 %3371
    %3373 = vrot.lane.b32.xlu0 %v3361, 19
    %v3374 = vpop.permute.xlu0 %3373
    %v3375 = vsel %vm45, %v3372, %v3374
    %v3376 = vsel %vm45, %v3370, %v3372
    %v3377 = vsel %vm45, %v3368, %v3370
    %v3378 = vsel %vm45, %v3366, %v3368
    %v3379 = vsel %vm45, %v3364, %v3366
    %v3380 = vsel %vm45, %v3374, %v3364
    %s3381 = scalar_lea.vmem %s2, 8
    %v3382 = vld [vmem:[%s3381] sm:$0xff]
    %v3384 = vsel %vm3146, %v3382, 0
    %3386 = vmatprep.subr.mxu0 %v3122
    %3387 = vmatpush1.msra.mxu0 %v3121
    %3388 = vmatprep.subr.mxu0 %v3128
    %3389 = vmatpush1.msra.mxu0 %v3127
    %3390 = vmatprep.subr.mxu0 %v3134
    %3391 = vmatpush1.msra.mxu0 %v3133
    %3392 = vmatprep.subr.mxu0 %v3140
    %3393 = vmatpush1.msra.mxu0 %v3139
    %3394 = vmatprep.subr.mxu0 0.0
    %3395 = vmatpush1.msra.mxu0 0.0
    %3396 = vmatprep.subr.mxu0 0.0
    %3397 = vmatpush1.msra.mxu0 0.0
    %3398 = vmatprep.subr.mxu0 0.0
    %3399 = vmatpush1.msra.mxu0 0.0
    %3400 = vmatprep.subr.mxu0 0.0
    %3401 = vmatpush1.msra.mxu0 0.0
    %3402 = vmatprep.subr.mxu0 0.0
    %3403 = vmatpush1.msra.mxu0 0.0
    %3404 = vmatprep.subr.mxu0 0.0
    %3405 = vmatpush1.msra.mxu0 0.0
    %3406 = vmatprep.subr.mxu0 0.0
    %3407 = vmatpush1.msra.mxu0 0.0
    %3408 = vmatprep.subr.mxu0 0.0
    %3409 = vmatpush1.msra.mxu0 0.0
    %3410 = vmatprep.subr.mxu0 0.0
    %3411 = vmatpush1.msra.mxu0 0.0
    %3412 = vmatprep.subr.mxu0 0.0
    %3413 = vmatpush1.msra.mxu0 0.0
    %3414 = vmatprep.subr.mxu0 0.0
    %3415 = vmatpush1.msra.mxu0 0.0
    %3416 = vmatprep.subr.mxu0 0.0
    %3417 = vmatpush1.msra.mxu0 0.0
    %3418 = vmatprep.subr.mxu0 0.0
    %3419 = vmatpush1.msra.mxu0 0.0
    %3420 = vmatprep.subr.mxu0 0.0
    %3421 = vmatpush1.msra.mxu0 0.0
    %3422 = vmatprep.subr.mxu0 0.0
    %3423 = vmatpush1.msra.mxu0 0.0
    %3424 = vmatprep.subr.mxu0 0.0
    %3425 = vmatpush1.msra.mxu0 0.0
    %3426 = vmatprep.subr.mxu0 0.0
    %3427 = vmatpush1.msra.mxu0 0.0
    %3428 = vmatprep.subr.mxu0 0.0
    %3429 = vmatpush1.msra.mxu0 0.0
    %3430 = vmatprep.subr.mxu0 0.0
    %3431 = vmatpush1.msra.mxu0 0.0
    %3432 = vmatprep.subr.mxu0 0.0
    %3433 = vmatpush1.msra.mxu0 0.0
    %3434 = vmatprep.subr.mxu0 0.0
    %3435 = vmatpush1.msra.mxu0 0.0
    %3436 = vmatprep.subr.mxu0 0.0
    %3437 = vmatpush1.msra.mxu0 0.0
    %3438 = vmatprep.subr.mxu0 0.0
    %3439 = vmatpush1.msra.mxu0 0.0
    %3440 = vmatprep.subr.mxu0 0.0
    %3441 = vmatpush1.msra.mxu0 0.0
    %3442 = vmatprep.subr.mxu0 0.0
    %3443 = vmatpush1.msra.mxu0 0.0
    %3444 = vmatprep.subr.mxu0 0.0
    %3445 = vmatpush1.msra.mxu0 0.0
    %3446 = vmatprep.subr.mxu0 0.0
    %3447 = vmatpush1.msra.mxu0 0.0
    %3448 = vmatprep.subr.mxu0 0.0
    %3449 = vmatpush1.msra.mxu0 0.0
    %3450 = vmatprep.mubr.f32.mxu0 0.0
    %3451 = vmatmul.mubr.f32.gmra.mrb[0].mxu0 %v3384
    %v3452 = vpop.f32.mrb[0].mxu0
    %v3453 = vadd.f32 0.0, %v3452
    %v3454 = vpop.f32.mrb[0].mxu0
    %v3455 = vadd.f32 0.0, %v3454
    %3456 = vdwg.mxu0
    %3457 = vmatprep.subr.mxu0 %v3124
    %3458 = vmatpush1.msra.mxu0 %v3123
    %3459 = vmatprep.subr.mxu0 %v3130
    %3460 = vmatpush1.msra.mxu0 %v3129
    %3461 = vmatprep.subr.mxu0 %v3136
    %3462 = vmatpush1.msra.mxu0 %v3135
    %3463 = vmatprep.subr.mxu0 %v3142
    %3464 = vmatpush1.msra.mxu0 %v3141
    %3465 = vmatprep.subr.mxu0 0.0
    %3466 = vmatpush1.msra.mxu0 0.0
    %3467 = vmatprep.subr.mxu0 0.0
    %3468 = vmatpush1.msra.mxu0 0.0
    %3469 = vmatprep.subr.mxu0 0.0
    %3470 = vmatpush1.msra.mxu0 0.0
    %3471 = vmatprep.subr.mxu0 0.0
    %3472 = vmatpush1.msra.mxu0 0.0
    %3473 = vmatprep.subr.mxu0 0.0
    %3474 = vmatpush1.msra.mxu0 0.0
    %3475 = vmatprep.subr.mxu0 0.0
    %3476 = vmatpush1.msra.mxu0 0.0
    %3477 = vmatprep.subr.mxu0 0.0
    %3478 = vmatpush1.msra.mxu0 0.0
    %3479 = vmatprep.subr.mxu0 0.0
    %3480 = vmatpush1.msra.mxu0 0.0
    %3481 = vmatprep.subr.mxu0 0.0
    %3482 = vmatpush1.msra.mxu0 0.0
    %3483 = vmatprep.subr.mxu0 0.0
    %3484 = vmatpush1.msra.mxu0 0.0
    %3485 = vmatprep.subr.mxu0 0.0
    %3486 = vmatpush1.msra.mxu0 0.0
    %3487 = vmatprep.subr.mxu0 0.0
    %3488 = vmatpush1.msra.mxu0 0.0
    %3489 = vmatprep.subr.mxu0 0.0
    %3490 = vmatpush1.msra.mxu0 0.0
    %3491 = vmatprep.subr.mxu0 0.0
    %3492 = vmatpush1.msra.mxu0 0.0
    %3493 = vmatprep.subr.mxu0 0.0
    %3494 = vmatpush1.msra.mxu0 0.0
    %3495 = vmatprep.subr.mxu0 0.0
    %3496 = vmatpush1.msra.mxu0 0.0
    %3497 = vmatprep.subr.mxu0 0.0
    %3498 = vmatpush1.msra.mxu0 0.0
    %3499 = vmatprep.subr.mxu0 0.0
    %3500 = vmatpush1.msra.mxu0 0.0
    %3501 = vmatprep.subr.mxu0 0.0
    %3502 = vmatpush1.msra.mxu0 0.0
    %3503 = vmatprep.subr.mxu0 0.0
    %3504 = vmatpush1.msra.mxu0 0.0
    %3505 = vmatprep.subr.mxu0 0.0
    %3506 = vmatpush1.msra.mxu0 0.0
    %3507 = vmatprep.subr.mxu0 0.0
    %3508 = vmatpush1.msra.mxu0 0.0
    %3509 = vmatprep.subr.mxu0 0.0
    %3510 = vmatpush1.msra.mxu0 0.0
    %3511 = vmatprep.subr.mxu0 0.0
    %3512 = vmatpush1.msra.mxu0 0.0
    %3513 = vmatprep.subr.mxu0 0.0
    %3514 = vmatpush1.msra.mxu0 0.0
    %3515 = vmatprep.subr.mxu0 0.0
    %3516 = vmatpush1.msra.mxu0 0.0
    %3517 = vmatprep.subr.mxu0 0.0
    %3518 = vmatpush1.msra.mxu0 0.0
    %3519 = vmatprep.subr.mxu0 0.0
    %3520 = vmatpush1.msra.mxu0 0.0
    %3521 = vmatprep.mubr.f32.mxu0 0.0
    %3522 = vmatmul.mubr.f32.gmra.mrb[0].mxu0 %v3384
    %v3523 = vpop.f32.mrb[0].mxu0
    %v3524 = vadd.f32 0.0, %v3523
    %v3525 = vpop.f32.mrb[0].mxu0
    %v3526 = vadd.f32 0.0, %v3525
    %3527 = vdwg.mxu0
    %3528 = vmatprep.subr.mxu0 %v3126
    %3529 = vmatpush1.msra.mxu0 %v3125
    %3530 = vmatprep.subr.mxu0 %v3132
    %3531 = vmatpush1.msra.mxu0 %v3131
    %3532 = vmatprep.subr.mxu0 %v3138
    %3533 = vmatpush1.msra.mxu0 %v3137
    %3534 = vmatprep.subr.mxu0 %v3144
    %3535 = vmatpush1.msra.mxu0 %v3143
    %3536 = vmatprep.subr.mxu0 0.0
    %3537 = vmatpush1.msra.mxu0 0.0
    %3538 = vmatprep.subr.mxu0 0.0
    %3539 = vmatpush1.msra.mxu0 0.0
    %3540 = vmatprep.subr.mxu0 0.0
    %3541 = vmatpush1.msra.mxu0 0.0
    %3542 = vmatprep.subr.mxu0 0.0
    %3543 = vmatpush1.msra.mxu0 0.0
    %3544 = vmatprep.subr.mxu0 0.0
    %3545 = vmatpush1.msra.mxu0 0.0
    %3546 = vmatprep.subr.mxu0 0.0
    %3547 = vmatpush1.msra.mxu0 0.0
    %3548 = vmatprep.subr.mxu0 0.0
    %3549 = vmatpush1.msra.mxu0 0.0
    %3550 = vmatprep.subr.mxu0 0.0
    %3551 = vmatpush1.msra.mxu0 0.0
    %3552 = vmatprep.subr.mxu0 0.0
    %3553 = vmatpush1.msra.mxu0 0.0
    %3554 = vmatprep.subr.mxu0 0.0
    %3555 = vmatpush1.msra.mxu0 0.0
    %3556 = vmatprep.subr.mxu0 0.0
    %3557 = vmatpush1.msra.mxu0 0.0
    %3558 = vmatprep.subr.mxu0 0.0
    %3559 = vmatpush1.msra.mxu0 0.0
    %3560 = vmatprep.subr.mxu0 0.0
    %3561 = vmatpush1.msra.mxu0 0.0
    %3562 = vmatprep.subr.mxu0 0.0
    %3563 = vmatpush1.msra.mxu0 0.0
    %3564 = vmatprep.subr.mxu0 0.0
    %3565 = vmatpush1.msra.mxu0 0.0
    %3566 = vmatprep.subr.mxu0 0.0
    %3567 = vmatpush1.msra.mxu0 0.0
    %3568 = vmatprep.subr.mxu0 0.0
    %3569 = vmatpush1.msra.mxu0 0.0
    %3570 = vmatprep.subr.mxu0 0.0
    %3571 = vmatpush1.msra.mxu0 0.0
    %3572 = vmatprep.subr.mxu0 0.0
    %3573 = vmatpush1.msra.mxu0 0.0
    %3574 = vmatprep.subr.mxu0 0.0
    %3575 = vmatpush1.msra.mxu0 0.0
    %3576 = vmatprep.subr.mxu0 0.0
    %3577 = vmatpush1.msra.mxu0 0.0
    %3578 = vmatprep.subr.mxu0 0.0
    %3579 = vmatpush1.msra.mxu0 0.0
    %3580 = vmatprep.subr.mxu0 0.0
    %3581 = vmatpush1.msra.mxu0 0.0
    %3582 = vmatprep.subr.mxu0 0.0
    %3583 = vmatpush1.msra.mxu0 0.0
    %3584 = vmatprep.subr.mxu0 0.0
    %3585 = vmatpush1.msra.mxu0 0.0
    %3586 = vmatprep.subr.mxu0 0.0
    %3587 = vmatpush1.msra.mxu0 0.0
    %3588 = vmatprep.subr.mxu0 0.0
    %3589 = vmatpush1.msra.mxu0 0.0
    %3590 = vmatprep.subr.mxu0 0.0
    %3591 = vmatpush1.msra.mxu0 0.0
    %3592 = vmatprep.mubr.f32.mxu0 0.0
    %3593 = vmatmul.mubr.f32.gmra.mrb[0].mxu0 %v3384
    %v3594 = vpop.f32.mrb[0].mxu0
    %v3595 = vadd.f32 0.0, %v3594
    %v3596 = vpop.f32.mrb[0].mxu0
    %v3597 = vadd.f32 0.0, %v3596
    %3598 = vdwg.mxu0
    %3599 = vrot.lane.b32.xlu0 %v3453, 18
    %v3600 = vpop.permute.xlu0 %3599
    %3601 = vrot.lane.b32.xlu0 %v3455, 18
    %v3602 = vpop.permute.xlu0 %3601
    %3603 = vrot.lane.b32.xlu0 %v3524, 18
    %v3604 = vpop.permute.xlu0 %3603
    %3605 = vrot.lane.b32.xlu0 %v3526, 18
    %v3606 = vpop.permute.xlu0 %3605
    %3607 = vrot.lane.b32.xlu0 %v3595, 18
    %v3608 = vpop.permute.xlu0 %3607
    %3609 = vrot.lane.b32.xlu0 %v3597, 18
    %v3610 = vpop.permute.xlu0 %3609
    %v3611 = vsel %vm68, %v3608, %v3610
    %v3612 = vsel %vm68, %v3606, %v3608
    %v3613 = vsel %vm68, %v3604, %v3606
    %v3614 = vsel %vm68, %v3602, %v3604
    %v3615 = vsel %vm68, %v3600, %v3602
    %v3616 = vsel %vm68, %v3610, %v3600
    %v3617 = vadd.f32 %v3380, %v3616
    %v3618 = vadd.f32 %v3379, %v3615
    %v3619 = vadd.f32 %v3378, %v3614
    %v3620 = vadd.f32 %v3377, %v3613
    %v3621 = vadd.f32 %v3376, %v3612
    %v3622 = vadd.f32 %v3375, %v3611
    %s3623 = scalar_lea.vmem %s2, 16
    %v3624 = vld [vmem:[%s3623] sm:$0xff]
    %v3626 = vsel %vm3146, %v3624, 0
    %3628 = vmatprep.subr.mxu0 %v3122
    %3629 = vmatpush1.msra.mxu0 %v3121
    %3630 = vmatprep.subr.mxu0 %v3128
    %3631 = vmatpush1.msra.mxu0 %v3127
    %3632 = vmatprep.subr.mxu0 %v3134
    %3633 = vmatpush1.msra.mxu0 %v3133
    %3634 = vmatprep.subr.mxu0 %v3140
    %3635 = vmatpush1.msra.mxu0 %v3139
    %3636 = vmatprep.subr.mxu0 0.0
    %3637 = vmatpush1.msra.mxu0 0.0
    %3638 = vmatprep.subr.mxu0 0.0
    %3639 = vmatpush1.msra.mxu0 0.0
    %3640 = vmatprep.subr.mxu0 0.0
    %3641 = vmatpush1.msra.mxu0 0.0
    %3642 = vmatprep.subr.mxu0 0.0
    %3643 = vmatpush1.msra.mxu0 0.0
    %3644 = vmatprep.subr.mxu0 0.0
    %3645 = vmatpush1.msra.mxu0 0.0
    %3646 = vmatprep.subr.mxu0 0.0
    %3647 = vmatpush1.msra.mxu0 0.0
    %3648 = vmatprep.subr.mxu0 0.0
    %3649 = vmatpush1.msra.mxu0 0.0
    %3650 = vmatprep.subr.mxu0 0.0
    %3651 = vmatpush1.msra.mxu0 0.0
    %3652 = vmatprep.subr.mxu0 0.0
    %3653 = vmatpush1.msra.mxu0 0.0
    %3654 = vmatprep.subr.mxu0 0.0
    %3655 = vmatpush1.msra.mxu0 0.0
    %3656 = vmatprep.subr.mxu0 0.0
    %3657 = vmatpush1.msra.mxu0 0.0
    %3658 = vmatprep.subr.mxu0 0.0
    %3659 = vmatpush1.msra.mxu0 0.0
    %3660 = vmatprep.subr.mxu0 0.0
    %3661 = vmatpush1.msra.mxu0 0.0
    %3662 = vmatprep.subr.mxu0 0.0
    %3663 = vmatpush1.msra.mxu0 0.0
    %3664 = vmatprep.subr.mxu0 0.0
    %3665 = vmatpush1.msra.mxu0 0.0
    %3666 = vmatprep.subr.mxu0 0.0
    %3667 = vmatpush1.msra.mxu0 0.0
    %3668 = vmatprep.subr.mxu0 0.0
    %3669 = vmatpush1.msra.mxu0 0.0
    %3670 = vmatprep.subr.mxu0 0.0
    %3671 = vmatpush1.msra.mxu0 0.0
    %3672 = vmatprep.subr.mxu0 0.0
    %3673 = vmatpush1.msra.mxu0 0.0
    %3674 = vmatprep.subr.mxu0 0.0
    %3675 = vmatpush1.msra.mxu0 0.0
    %3676 = vmatprep.subr.mxu0 0.0
    %3677 = vmatpush1.msra.mxu0 0.0
    %3678 = vmatprep.subr.mxu0 0.0
    %3679 = vmatpush1.msra.mxu0 0.0
    %3680 = vmatprep.subr.mxu0 0.0
    %3681 = vmatpush1.msra.mxu0 0.0
    %3682 = vmatprep.subr.mxu0 0.0
    %3683 = vmatpush1.msra.mxu0 0.0
    %3684 = vmatprep.subr.mxu0 0.0
    %3685 = vmatpush1.msra.mxu0 0.0
    %3686 = vmatprep.subr.mxu0 0.0
    %3687 = vmatpush1.msra.mxu0 0.0
    %3688 = vmatprep.subr.mxu0 0.0
    %3689 = vmatpush1.msra.mxu0 0.0
    %3690 = vmatprep.subr.mxu0 0.0
    %3691 = vmatpush1.msra.mxu0 0.0
    %3692 = vmatprep.mubr.f32.mxu0 0.0
    %3693 = vmatmul.mubr.f32.gmra.mrb[0].mxu0 %v3626
    %v3694 = vpop.f32.mrb[0].mxu0
    %v3695 = vadd.f32 0.0, %v3694
    %v3696 = vpop.f32.mrb[0].mxu0
    %v3697 = vadd.f32 0.0, %v3696
    %3698 = vdwg.mxu0
    %3699 = vmatprep.subr.mxu0 %v3124
    %3700 = vmatpush1.msra.mxu0 %v3123
    %3701 = vmatprep.subr.mxu0 %v3130
    %3702 = vmatpush1.msra.mxu0 %v3129
    %3703 = vmatprep.subr.mxu0 %v3136
    %3704 = vmatpush1.msra.mxu0 %v3135
    %3705 = vmatprep.subr.mxu0 %v3142
    %3706 = vmatpush1.msra.mxu0 %v3141
    %3707 = vmatprep.subr.mxu0 0.0
    %3708 = vmatpush1.msra.mxu0 0.0
    %3709 = vmatprep.subr.mxu0 0.0
    %3710 = vmatpush1.msra.mxu0 0.0
    %3711 = vmatprep.subr.mxu0 0.0
    %3712 = vmatpush1.msra.mxu0 0.0
    %3713 = vmatprep.subr.mxu0 0.0
    %3714 = vmatpush1.msra.mxu0 0.0
    %3715 = vmatprep.subr.mxu0 0.0
    %3716 = vmatpush1.msra.mxu0 0.0
    %3717 = vmatprep.subr.mxu0 0.0
    %3718 = vmatpush1.msra.mxu0 0.0
    %3719 = vmatprep.subr.mxu0 0.0
    %3720 = vmatpush1.msra.mxu0 0.0
    %3721 = vmatprep.subr.mxu0 0.0
    %3722 = vmatpush1.msra.mxu0 0.0
    %3723 = vmatprep.subr.mxu0 0.0
    %3724 = vmatpush1.msra.mxu0 0.0
    %3725 = vmatprep.subr.mxu0 0.0
    %3726 = vmatpush1.msra.mxu0 0.0
    %3727 = vmatprep.subr.mxu0 0.0
    %3728 = vmatpush1.msra.mxu0 0.0
    %3729 = vmatprep.subr.mxu0 0.0
    %3730 = vmatpush1.msra.mxu0 0.0
    %3731 = vmatprep.subr.mxu0 0.0
    %3732 = vmatpush1.msra.mxu0 0.0
    %3733 = vmatprep.subr.mxu0 0.0
    %3734 = vmatpush1.msra.mxu0 0.0
    %3735 = vmatprep.subr.mxu0 0.0
    %3736 = vmatpush1.msra.mxu0 0.0
    %3737 = vmatprep.subr.mxu0 0.0
    %3738 = vmatpush1.msra.mxu0 0.0
    %3739 = vmatprep.subr.mxu0 0.0
    %3740 = vmatpush1.msra.mxu0 0.0
    %3741 = vmatprep.subr.mxu0 0.0
    %3742 = vmatpush1.msra.mxu0 0.0
    %3743 = vmatprep.subr.mxu0 0.0
    %3744 = vmatpush1.msra.mxu0 0.0
    %3745 = vmatprep.subr.mxu0 0.0
    %3746 = vmatpush1.msra.mxu0 0.0
    %3747 = vmatprep.subr.mxu0 0.0
    %3748 = vmatpush1.msra.mxu0 0.0
    %3749 = vmatprep.subr.mxu0 0.0
    %3750 = vmatpush1.msra.mxu0 0.0
    %3751 = vmatprep.subr.mxu0 0.0
    %3752 = vmatpush1.msra.mxu0 0.0
    %3753 = vmatprep.subr.mxu0 0.0
    %3754 = vmatpush1.msra.mxu0 0.0
    %3755 = vmatprep.subr.mxu0 0.0
    %3756 = vmatpush1.msra.mxu0 0.0
    %3757 = vmatprep.subr.mxu0 0.0
    %3758 = vmatpush1.msra.mxu0 0.0
    %3759 = vmatprep.subr.mxu0 0.0
    %3760 = vmatpush1.msra.mxu0 0.0
    %3761 = vmatprep.subr.mxu0 0.0
    %3762 = vmatpush1.msra.mxu0 0.0
    %3763 = vmatprep.mubr.f32.mxu0 0.0
    %3764 = vmatmul.mubr.f32.gmra.mrb[0].mxu0 %v3626
    %v3765 = vpop.f32.mrb[0].mxu0
    %v3766 = vadd.f32 0.0, %v3765
    %v3767 = vpop.f32.mrb[0].mxu0
    %v3768 = vadd.f32 0.0, %v3767
    %3769 = vdwg.mxu0
    %3770 = vmatprep.subr.mxu0 %v3126
    %3771 = vmatpush1.msra.mxu0 %v3125
    %3772 = vmatprep.subr.mxu0 %v3132
    %3773 = vmatpush1.msra.mxu0 %v3131
    %3774 = vmatprep.subr.mxu0 %v3138
    %3775 = vmatpush1.msra.mxu0 %v3137
    %3776 = vmatprep.subr.mxu0 %v3144
    %3777 = vmatpush1.msra.mxu0 %v3143
    %3778 = vmatprep.subr.mxu0 0.0
    %3779 = vmatpush1.msra.mxu0 0.0
    %3780 = vmatprep.subr.mxu0 0.0
    %3781 = vmatpush1.msra.mxu0 0.0
    %3782 = vmatprep.subr.mxu0 0.0
    %3783 = vmatpush1.msra.mxu0 0.0
    %3784 = vmatprep.subr.mxu0 0.0
    %3785 = vmatpush1.msra.mxu0 0.0
    %3786 = vmatprep.subr.mxu0 0.0
    %3787 = vmatpush1.msra.mxu0 0.0
    %3788 = vmatprep.subr.mxu0 0.0
    %3789 = vmatpush1.msra.mxu0 0.0
    %3790 = vmatprep.subr.mxu0 0.0
    %3791 = vmatpush1.msra.mxu0 0.0
    %3792 = vmatprep.subr.mxu0 0.0
    %3793 = vmatpush1.msra.mxu0 0.0
    %3794 = vmatprep.subr.mxu0 0.0
    %3795 = vmatpush1.msra.mxu0 0.0
    %3796 = vmatprep.subr.mxu0 0.0
    %3797 = vmatpush1.msra.mxu0 0.0
    %3798 = vmatprep.subr.mxu0 0.0
    %3799 = vmatpush1.msra.mxu0 0.0
    %3800 = vmatprep.subr.mxu0 0.0
    %3801 = vmatpush1.msra.mxu0 0.0
    %3802 = vmatprep.subr.mxu0 0.0
    %3803 = vmatpush1.msra.mxu0 0.0
    %3804 = vmatprep.subr.mxu0 0.0
    %3805 = vmatpush1.msra.mxu0 0.0
    %3806 = vmatprep.subr.mxu0 0.0
    %3807 = vmatpush1.msra.mxu0 0.0
    %3808 = vmatprep.subr.mxu0 0.0
    %3809 = vmatpush1.msra.mxu0 0.0
    %3810 = vmatprep.subr.mxu0 0.0
    %3811 = vmatpush1.msra.mxu0 0.0
    %3812 = vmatprep.subr.mxu0 0.0
    %3813 = vmatpush1.msra.mxu0 0.0
    %3814 = vmatprep.subr.mxu0 0.0
    %3815 = vmatpush1.msra.mxu0 0.0
    %3816 = vmatprep.subr.mxu0 0.0
    %3817 = vmatpush1.msra.mxu0 0.0
    %3818 = vmatprep.subr.mxu0 0.0
    %3819 = vmatpush1.msra.mxu0 0.0
    %3820 = vmatprep.subr.mxu0 0.0
    %3821 = vmatpush1.msra.mxu0 0.0
    %3822 = vmatprep.subr.mxu0 0.0
    %3823 = vmatpush1.msra.mxu0 0.0
    %3824 = vmatprep.subr.mxu0 0.0
    %3825 = vmatpush1.msra.mxu0 0.0
    %3826 = vmatprep.subr.mxu0 0.0
    %3827 = vmatpush1.msra.mxu0 0.0
    %3828 = vmatprep.subr.mxu0 0.0
    %3829 = vmatpush1.msra.mxu0 0.0
    %3830 = vmatprep.subr.mxu0 0.0
    %3831 = vmatpush1.msra.mxu0 0.0
    %3832 = vmatprep.subr.mxu0 0.0
    %3833 = vmatpush1.msra.mxu0 0.0
    %3834 = vmatprep.mubr.f32.mxu0 0.0
    %3835 = vmatmul.mubr.f32.gmra.mrb[0].mxu0 %v3626
    %v3836 = vpop.f32.mrb[0].mxu0
    %v3837 = vadd.f32 0.0, %v3836
    %v3838 = vpop.f32.mrb[0].mxu0
    %v3839 = vadd.f32 0.0, %v3838
    %3840 = vdwg.mxu0
    %3841 = vrot.lane.b32.xlu0 %v3695, 17
    %v3842 = vpop.permute.xlu0 %3841
    %3843 = vrot.lane.b32.xlu0 %v3697, 17
    %v3844 = vpop.permute.xlu0 %3843
    %3845 = vrot.lane.b32.xlu0 %v3766, 17
    %v3846 = vpop.permute.xlu0 %3845
    %3847 = vrot.lane.b32.xlu0 %v3768, 17
    %v3848 = vpop.permute.xlu0 %3847
    %3849 = vrot.lane.b32.xlu0 %v3837, 17
    %v3850 = vpop.permute.xlu0 %3849
    %3851 = vrot.lane.b32.xlu0 %v3839, 17
    %v3852 = vpop.permute.xlu0 %3851
    %v3853 = vsel %vm688, %v3850, %v3852
    %v3854 = vsel %vm688, %v3848, %v3850
    %v3855 = vsel %vm688, %v3846, %v3848
    %v3856 = vsel %vm688, %v3844, %v3846
    %v3857 = vsel %vm688, %v3842, %v3844
    %v3858 = vsel %vm688, %v3852, %v3842
    %v3859 = vadd.f32 %v3617, %v3858
    %v3860 = vadd.f32 %v3618, %v3857
    %v3861 = vadd.f32 %v3619, %v3856
    %v3862 = vadd.f32 %v3620, %v3855
    %v3863 = vadd.f32 %v3621, %v3854
    %v3864 = vadd.f32 %v3622, %v3853
    %s3865 = scalar_lea.vmem %s2, 24
    %v3866 = vld [vmem:[%s3865] sm:$0xff]
    %v3868 = vsel %vm3146, %v3866, 0
    %3870 = vmatprep.subr.mxu0 %v3122
    %3871 = vmatpush1.msra.mxu0 %v3121
    %3872 = vmatprep.subr.mxu0 %v3128
    %3873 = vmatpush1.msra.mxu0 %v3127
    %3874 = vmatprep.subr.mxu0 %v3134
    %3875 = vmatpush1.msra.mxu0 %v3133
    %3876 = vmatprep.subr.mxu0 %v3140
    %3877 = vmatpush1.msra.mxu0 %v3139
    %3878 = vmatprep.subr.mxu0 0.0
    %3879 = vmatpush1.msra.mxu0 0.0
    %3880 = vmatprep.subr.mxu0 0.0
    %3881 = vmatpush1.msra.mxu0 0.0
    %3882 = vmatprep.subr.mxu0 0.0
    %3883 = vmatpush1.msra.mxu0 0.0
    %3884 = vmatprep.subr.mxu0 0.0
    %3885 = vmatpush1.msra.mxu0 0.0
    %3886 = vmatprep.subr.mxu0 0.0
    %3887 = vmatpush1.msra.mxu0 0.0
    %3888 = vmatprep.subr.mxu0 0.0
    %3889 = vmatpush1.msra.mxu0 0.0
    %3890 = vmatprep.subr.mxu0 0.0
    %3891 = vmatpush1.msra.mxu0 0.0
    %3892 = vmatprep.subr.mxu0 0.0
    %3893 = vmatpush1.msra.mxu0 0.0
    %3894 = vmatprep.subr.mxu0 0.0
    %3895 = vmatpush1.msra.mxu0 0.0
    %3896 = vmatprep.subr.mxu0 0.0
    %3897 = vmatpush1.msra.mxu0 0.0
    %3898 = vmatprep.subr.mxu0 0.0
    %3899 = vmatpush1.msra.mxu0 0.0
    %3900 = vmatprep.subr.mxu0 0.0
    %3901 = vmatpush1.msra.mxu0 0.0
    %3902 = vmatprep.subr.mxu0 0.0
    %3903 = vmatpush1.msra.mxu0 0.0
    %3904 = vmatprep.subr.mxu0 0.0
    %3905 = vmatpush1.msra.mxu0 0.0
    %3906 = vmatprep.subr.mxu0 0.0
    %3907 = vmatpush1.msra.mxu0 0.0
    %3908 = vmatprep.subr.mxu0 0.0
    %3909 = vmatpush1.msra.mxu0 0.0
    %3910 = vmatprep.subr.mxu0 0.0
    %3911 = vmatpush1.msra.mxu0 0.0
    %3912 = vmatprep.subr.mxu0 0.0
    %3913 = vmatpush1.msra.mxu0 0.0
    %3914 = vmatprep.subr.mxu0 0.0
    %3915 = vmatpush1.msra.mxu0 0.0
    %3916 = vmatprep.subr.mxu0 0.0
    %3917 = vmatpush1.msra.mxu0 0.0
    %3918 = vmatprep.subr.mxu0 0.0
    %3919 = vmatpush1.msra.mxu0 0.0
    %3920 = vmatprep.subr.mxu0 0.0
    %3921 = vmatpush1.msra.mxu0 0.0
    %3922 = vmatprep.subr.mxu0 0.0
    %3923 = vmatpush1.msra.mxu0 0.0
    %3924 = vmatprep.subr.mxu0 0.0
    %3925 = vmatpush1.msra.mxu0 0.0
    %3926 = vmatprep.subr.mxu0 0.0
    %3927 = vmatpush1.msra.mxu0 0.0
    %3928 = vmatprep.subr.mxu0 0.0
    %3929 = vmatpush1.msra.mxu0 0.0
    %3930 = vmatprep.subr.mxu0 0.0
    %3931 = vmatpush1.msra.mxu0 0.0
    %3932 = vmatprep.subr.mxu0 0.0
    %3933 = vmatpush1.msra.mxu0 0.0
    %3934 = vmatprep.mubr.f32.mxu0 0.0
    %3935 = vmatmul.mubr.f32.gmra.mrb[0].mxu0 %v3868
    %v3936 = vpop.f32.mrb[0].mxu0
    %v3937 = vadd.f32 0.0, %v3936
    %v3938 = vpop.f32.mrb[0].mxu0
    %v3939 = vadd.f32 0.0, %v3938
    %3940 = vdwg.mxu0
    %3941 = vmatprep.subr.mxu0 %v3124
    %3942 = vmatpush1.msra.mxu0 %v3123
    %3943 = vmatprep.subr.mxu0 %v3130
    %3944 = vmatpush1.msra.mxu0 %v3129
    %3945 = vmatprep.subr.mxu0 %v3136
    %3946 = vmatpush1.msra.mxu0 %v3135
    %3947 = vmatprep.subr.mxu0 %v3142
    %3948 = vmatpush1.msra.mxu0 %v3141
    %3949 = vmatprep.subr.mxu0 0.0
    %3950 = vmatpush1.msra.mxu0 0.0
    %3951 = vmatprep.subr.mxu0 0.0
    %3952 = vmatpush1.msra.mxu0 0.0
    %3953 = vmatprep.subr.mxu0 0.0
    %3954 = vmatpush1.msra.mxu0 0.0
    %3955 = vmatprep.subr.mxu0 0.0
    %3956 = vmatpush1.msra.mxu0 0.0
    %3957 = vmatprep.subr.mxu0 0.0
    %3958 = vmatpush1.msra.mxu0 0.0
    %3959 = vmatprep.subr.mxu0 0.0
    %3960 = vmatpush1.msra.mxu0 0.0
    %3961 = vmatprep.subr.mxu0 0.0
    %3962 = vmatpush1.msra.mxu0 0.0
    %3963 = vmatprep.subr.mxu0 0.0
    %3964 = vmatpush1.msra.mxu0 0.0
    %3965 = vmatprep.subr.mxu0 0.0
    %3966 = vmatpush1.msra.mxu0 0.0
    %3967 = vmatprep.subr.mxu0 0.0
    %3968 = vmatpush1.msra.mxu0 0.0
    %3969 = vmatprep.subr.mxu0 0.0
    %3970 = vmatpush1.msra.mxu0 0.0
    %3971 = vmatprep.subr.mxu0 0.0
    %3972 = vmatpush1.msra.mxu0 0.0
    %3973 = vmatprep.subr.mxu0 0.0
    %3974 = vmatpush1.msra.mxu0 0.0
    %3975 = vmatprep.subr.mxu0 0.0
    %3976 = vmatpush1.msra.mxu0 0.0
    %3977 = vmatprep.subr.mxu0 0.0
    %3978 = vmatpush1.msra.mxu0 0.0
    %3979 = vmatprep.subr.mxu0 0.0
    %3980 = vmatpush1.msra.mxu0 0.0
    %3981 = vmatprep.subr.mxu0 0.0
    %3982 = vmatpush1.msra.mxu0 0.0
    %3983 = vmatprep.subr.mxu0 0.0
    %3984 = vmatpush1.msra.mxu0 0.0
    %3985 = vmatprep.subr.mxu0 0.0
    %3986 = vmatpush1.msra.mxu0 0.0
    %3987 = vmatprep.subr.mxu0 0.0
    %3988 = vmatpush1.msra.mxu0 0.0
    %3989 = vmatprep.subr.mxu0 0.0
    %3990 = vmatpush1.msra.mxu0 0.0
    %3991 = vmatprep.subr.mxu0 0.0
    %3992 = vmatpush1.msra.mxu0 0.0
    %3993 = vmatprep.subr.mxu0 0.0
    %3994 = vmatpush1.msra.mxu0 0.0
    %3995 = vmatprep.subr.mxu0 0.0
    %3996 = vmatpush1.msra.mxu0 0.0
    %3997 = vmatprep.subr.mxu0 0.0
    %3998 = vmatpush1.msra.mxu0 0.0
    %3999 = vmatprep.subr.mxu0 0.0
    %4000 = vmatpush1.msra.mxu0 0.0
    %4001 = vmatprep.subr.mxu0 0.0
    %4002 = vmatpush1.msra.mxu0 0.0
    %4003 = vmatprep.subr.mxu0 0.0
    %4004 = vmatpush1.msra.mxu0 0.0
    %4005 = vmatprep.mubr.f32.mxu0 0.0
    %4006 = vmatmul.mubr.f32.gmra.mrb[0].mxu0 %v3868
    %v4007 = vpop.f32.mrb[0].mxu0
    %v4008 = vadd.f32 0.0, %v4007
    %v4009 = vpop.f32.mrb[0].mxu0
    %v4010 = vadd.f32 0.0, %v4009
    %4011 = vdwg.mxu0
    %4012 = vmatprep.subr.mxu0 %v3126
    %4013 = vmatpush1.msra.mxu0 %v3125
    %4014 = vmatprep.subr.mxu0 %v3132
    %4015 = vmatpush1.msra.mxu0 %v3131
    %4016 = vmatprep.subr.mxu0 %v3138
    %4017 = vmatpush1.msra.mxu0 %v3137
    %4018 = vmatprep.subr.mxu0 %v3144
    %4019 = vmatpush1.msra.mxu0 %v3143
    %4020 = vmatprep.subr.mxu0 0.0
    %4021 = vmatpush1.msra.mxu0 0.0
    %4022 = vmatprep.subr.mxu0 0.0
    %4023 = vmatpush1.msra.mxu0 0.0
    %4024 = vmatprep.subr.mxu0 0.0
    %4025 = vmatpush1.msra.mxu0 0.0
    %4026 = vmatprep.subr.mxu0 0.0
    %4027 = vmatpush1.msra.mxu0 0.0
    %4028 = vmatprep.subr.mxu0 0.0
    %4029 = vmatpush1.msra.mxu0 0.0
    %4030 = vmatprep.subr.mxu0 0.0
    %4031 = vmatpush1.msra.mxu0 0.0
    %4032 = vmatprep.subr.mxu0 0.0
    %4033 = vmatpush1.msra.mxu0 0.0
    %4034 = vmatprep.subr.mxu0 0.0
    %4035 = vmatpush1.msra.mxu0 0.0
    %4036 = vmatprep.subr.mxu0 0.0
    %4037 = vmatpush1.msra.mxu0 0.0
    %4038 = vmatprep.subr.mxu0 0.0
    %4039 = vmatpush1.msra.mxu0 0.0
    %4040 = vmatprep.subr.mxu0 0.0
    %4041 = vmatpush1.msra.mxu0 0.0
    %4042 = vmatprep.subr.mxu0 0.0
    %4043 = vmatpush1.msra.mxu0 0.0
    %4044 = vmatprep.subr.mxu0 0.0
    %4045 = vmatpush1.msra.mxu0 0.0
    %4046 = vmatprep.subr.mxu0 0.0
    %4047 = vmatpush1.msra.mxu0 0.0
    %4048 = vmatprep.subr.mxu0 0.0
    %4049 = vmatpush1.msra.mxu0 0.0
    %4050 = vmatprep.subr.mxu0 0.0
    %4051 = vmatpush1.msra.mxu0 0.0
    %4052 = vmatprep.subr.mxu0 0.0
    %4053 = vmatpush1.msra.mxu0 0.0
    %4054 = vmatprep.subr.mxu0 0.0
    %4055 = vmatpush1.msra.mxu0 0.0
    %4056 = vmatprep.subr.mxu0 0.0
    %4057 = vmatpush1.msra.mxu0 0.0
    %4058 = vmatprep.subr.mxu0 0.0
    %4059 = vmatpush1.msra.mxu0 0.0
    %4060 = vmatprep.subr.mxu0 0.0
    %4061 = vmatpush1.msra.mxu0 0.0
    %4062 = vmatprep.subr.mxu0 0.0
    %4063 = vmatpush1.msra.mxu0 0.0
    %4064 = vmatprep.subr.mxu0 0.0
    %4065 = vmatpush1.msra.mxu0 0.0
    %4066 = vmatprep.subr.mxu0 0.0
    %4067 = vmatpush1.msra.mxu0 0.0
    %4068 = vmatprep.subr.mxu0 0.0
    %4069 = vmatpush1.msra.mxu0 0.0
    %4070 = vmatprep.subr.mxu0 0.0
    %4071 = vmatpush1.msra.mxu0 0.0
    %4072 = vmatprep.subr.mxu0 0.0
    %4073 = vmatpush1.msra.mxu0 0.0
    %4074 = vmatprep.subr.mxu0 0.0
    %4075 = vmatpush1.msra.mxu0 0.0
    %4076 = vmatprep.mubr.f32.mxu0 0.0
    %4077 = vmatmul.mubr.f32.gmra.mrb[0].mxu0 %v3868
    %v4078 = vpop.f32.mrb[0].mxu0
    %v4079 = vadd.f32 0.0, %v4078
    %v4080 = vpop.f32.mrb[0].mxu0
    %v4081 = vadd.f32 0.0, %v4080
    %4082 = vdwg.mxu0
    %4083 = vrot.lane.b32.xlu0 %v3937, 1
    %v4084 = vpop.permute.xlu0 %4083
    %4085 = vrot.lane.b32.xlu0 %v3939, 1
    %v4086 = vpop.permute.xlu0 %4085
    %4087 = vrot.lane.b32.xlu0 %v4008, 1
    %v4088 = vpop.permute.xlu0 %4087
    %4089 = vrot.lane.b32.xlu0 %v4010, 1
    %v4090 = vpop.permute.xlu0 %4089
    %4091 = vrot.lane.b32.xlu0 %v4079, 1
    %v4092 = vpop.permute.xlu0 %4091
    %4093 = vrot.lane.b32.xlu0 %v4081, 1
    %v4094 = vpop.permute.xlu0 %4093
    %v4095 = vsel %vm1033, %v4092, %v4094
    %v4096 = vsel %vm1033, %v4090, %v4092
    %v4097 = vsel %vm1033, %v4088, %v4090
    %v4098 = vsel %vm1033, %v4086, %v4088
    %v4099 = vsel %vm1033, %v4084, %v4086
    %v4100 = vsel %vm1033, %v4094, %v4084
    %v4101 = vadd.f32 %v3859, %v4100
    %v4102 = vadd.f32 %v3860, %v4099
    %v4103 = vadd.f32 %v3861, %v4098
    %v4104 = vadd.f32 %v3862, %v4097
    %v4105 = vadd.f32 %v3863, %v4096
    %v4106 = vadd.f32 %v3864, %v4095
    %s4107 = scalar_lea.vmem %s2, 32
    %v4108 = vld [vmem:[%s4107] sm:$0xff]
    %v4110 = vsel %vm3146, %v4108, 0
    %4112 = vmatprep.subr.mxu0 %v3122
    %4113 = vmatpush1.msra.mxu0 %v3121
    %4114 = vmatprep.subr.mxu0 %v3128
    %4115 = vmatpush1.msra.mxu0 %v3127
    %4116 = vmatprep.subr.mxu0 %v3134
    %4117 = vmatpush1.msra.mxu0 %v3133
    %4118 = vmatprep.subr.mxu0 %v3140
    %4119 = vmatpush1.msra.mxu0 %v3139
    %4120 = vmatprep.subr.mxu0 0.0
    %4121 = vmatpush1.msra.mxu0 0.0
    %4122 = vmatprep.subr.mxu0 0.0
    %4123 = vmatpush1.msra.mxu0 0.0
    %4124 = vmatprep.subr.mxu0 0.0
    %4125 = vmatpush1.msra.mxu0 0.0
    %4126 = vmatprep.subr.mxu0 0.0
    %4127 = vmatpush1.msra.mxu0 0.0
    %4128 = vmatprep.subr.mxu0 0.0
    %4129 = vmatpush1.msra.mxu0 0.0
    %4130 = vmatprep.subr.mxu0 0.0
    %4131 = vmatpush1.msra.mxu0 0.0
    %4132 = vmatprep.subr.mxu0 0.0
    %4133 = vmatpush1.msra.mxu0 0.0
    %4134 = vmatprep.subr.mxu0 0.0
    %4135 = vmatpush1.msra.mxu0 0.0
    %4136 = vmatprep.subr.mxu0 0.0
    %4137 = vmatpush1.msra.mxu0 0.0
    %4138 = vmatprep.subr.mxu0 0.0
    %4139 = vmatpush1.msra.mxu0 0.0
    %4140 = vmatprep.subr.mxu0 0.0
    %4141 = vmatpush1.msra.mxu0 0.0
    %4142 = vmatprep.subr.mxu0 0.0
    %4143 = vmatpush1.msra.mxu0 0.0
    %4144 = vmatprep.subr.mxu0 0.0
    %4145 = vmatpush1.msra.mxu0 0.0
    %4146 = vmatprep.subr.mxu0 0.0
    %4147 = vmatpush1.msra.mxu0 0.0
    %4148 = vmatprep.subr.mxu0 0.0
    %4149 = vmatpush1.msra.mxu0 0.0
    %4150 = vmatprep.subr.mxu0 0.0
    %4151 = vmatpush1.msra.mxu0 0.0
    %4152 = vmatprep.subr.mxu0 0.0
    %4153 = vmatpush1.msra.mxu0 0.0
    %4154 = vmatprep.subr.mxu0 0.0
    %4155 = vmatpush1.msra.mxu0 0.0
    %4156 = vmatprep.subr.mxu0 0.0
    %4157 = vmatpush1.msra.mxu0 0.0
    %4158 = vmatprep.subr.mxu0 0.0
    %4159 = vmatpush1.msra.mxu0 0.0
    %4160 = vmatprep.subr.mxu0 0.0
    %4161 = vmatpush1.msra.mxu0 0.0
    %4162 = vmatprep.subr.mxu0 0.0
    %4163 = vmatpush1.msra.mxu0 0.0
    %4164 = vmatprep.subr.mxu0 0.0
    %4165 = vmatpush1.msra.mxu0 0.0
    %4166 = vmatprep.subr.mxu0 0.0
    %4167 = vmatpush1.msra.mxu0 0.0
    %4168 = vmatprep.subr.mxu0 0.0
    %4169 = vmatpush1.msra.mxu0 0.0
    %4170 = vmatprep.subr.mxu0 0.0
    %4171 = vmatpush1.msra.mxu0 0.0
    %4172 = vmatprep.subr.mxu0 0.0
    %4173 = vmatpush1.msra.mxu0 0.0
    %4174 = vmatprep.subr.mxu0 0.0
    %4175 = vmatpush1.msra.mxu0 0.0
    %4176 = vmatprep.mubr.f32.mxu0 0.0
    %4177 = vmatmul.mubr.f32.gmra.mrb[0].mxu0 %v4110
    %v4178 = vpop.f32.mrb[0].mxu0
    %v4179 = vadd.f32 0.0, %v4178
    %v4180 = vpop.f32.mrb[0].mxu0
    %v4181 = vadd.f32 0.0, %v4180
    %4182 = vdwg.mxu0
    %4183 = vmatprep.subr.mxu0 %v3124
    %4184 = vmatpush1.msra.mxu0 %v3123
    %4185 = vmatprep.subr.mxu0 %v3130
    %4186 = vmatpush1.msra.mxu0 %v3129
    %4187 = vmatprep.subr.mxu0 %v3136
    %4188 = vmatpush1.msra.mxu0 %v3135
    %4189 = vmatprep.subr.mxu0 %v3142
    %4190 = vmatpush1.msra.mxu0 %v3141
    %4191 = vmatprep.subr.mxu0 0.0
    %4192 = vmatpush1.msra.mxu0 0.0
    %4193 = vmatprep.subr.mxu0 0.0
    %4194 = vmatpush1.msra.mxu0 0.0
    %4195 = vmatprep.subr.mxu0 0.0
    %4196 = vmatpush1.msra.mxu0 0.0
    %4197 = vmatprep.subr.mxu0 0.0
    %4198 = vmatpush1.msra.mxu0 0.0
    %4199 = vmatprep.subr.mxu0 0.0
    %4200 = vmatpush1.msra.mxu0 0.0
    %4201 = vmatprep.subr.mxu0 0.0
    %4202 = vmatpush1.msra.mxu0 0.0
    %4203 = vmatprep.subr.mxu0 0.0
    %4204 = vmatpush1.msra.mxu0 0.0
    %4205 = vmatprep.subr.mxu0 0.0
    %4206 = vmatpush1.msra.mxu0 0.0
    %4207 = vmatprep.subr.mxu0 0.0
    %4208 = vmatpush1.msra.mxu0 0.0
    %4209 = vmatprep.subr.mxu0 0.0
    %4210 = vmatpush1.msra.mxu0 0.0
    %4211 = vmatprep.subr.mxu0 0.0
    %4212 = vmatpush1.msra.mxu0 0.0
    %4213 = vmatprep.subr.mxu0 0.0
    %4214 = vmatpush1.msra.mxu0 0.0
    %4215 = vmatprep.subr.mxu0 0.0
    %4216 = vmatpush1.msra.mxu0 0.0
    %4217 = vmatprep.subr.mxu0 0.0
    %4218 = vmatpush1.msra.mxu0 0.0
    %4219 = vmatprep.subr.mxu0 0.0
    %4220 = vmatpush1.msra.mxu0 0.0
    %4221 = vmatprep.subr.mxu0 0.0
    %4222 = vmatpush1.msra.mxu0 0.0
    %4223 = vmatprep.subr.mxu0 0.0
    %4224 = vmatpush1.msra.mxu0 0.0
    %4225 = vmatprep.subr.mxu0 0.0
    %4226 = vmatpush1.msra.mxu0 0.0
    %4227 = vmatprep.subr.mxu0 0.0
    %4228 = vmatpush1.msra.mxu0 0.0
    %4229 = vmatprep.subr.mxu0 0.0
    %4230 = vmatpush1.msra.mxu0 0.0
    %4231 = vmatprep.subr.mxu0 0.0
    %4232 = vmatpush1.msra.mxu0 0.0
    %4233 = vmatprep.subr.mxu0 0.0
    %4234 = vmatpush1.msra.mxu0 0.0
    %4235 = vmatprep.subr.mxu0 0.0
    %4236 = vmatpush1.msra.mxu0 0.0
    %4237 = vmatprep.subr.mxu0 0.0
    %4238 = vmatpush1.msra.mxu0 0.0
    %4239 = vmatprep.subr.mxu0 0.0
    %4240 = vmatpush1.msra.mxu0 0.0
    %4241 = vmatprep.subr.mxu0 0.0
    %4242 = vmatpush1.msra.mxu0 0.0
    %4243 = vmatprep.subr.mxu0 0.0
    %4244 = vmatpush1.msra.mxu0 0.0
    %4245 = vmatprep.subr.mxu0 0.0
    %4246 = vmatpush1.msra.mxu0 0.0
    %4247 = vmatprep.mubr.f32.mxu0 0.0
    %4248 = vmatmul.mubr.f32.gmra.mrb[0].mxu0 %v4110
    %v4249 = vpop.f32.mrb[0].mxu0
    %v4250 = vadd.f32 0.0, %v4249
    %v4251 = vpop.f32.mrb[0].mxu0
    %v4252 = vadd.f32 0.0, %v4251
    %4253 = vdwg.mxu0
    %4254 = vmatprep.subr.mxu0 %v3126
    %4255 = vmatpush1.msra.mxu0 %v3125
    %4256 = vmatprep.subr.mxu0 %v3132
    %4257 = vmatpush1.msra.mxu0 %v3131
    %4258 = vmatprep.subr.mxu0 %v3138
    %4259 = vmatpush1.msra.mxu0 %v3137
    %4260 = vmatprep.subr.mxu0 %v3144
    %4261 = vmatpush1.msra.mxu0 %v3143
    %4262 = vmatprep.subr.mxu0 0.0
    %4263 = vmatpush1.msra.mxu0 0.0
    %4264 = vmatprep.subr.mxu0 0.0
    %4265 = vmatpush1.msra.mxu0 0.0
    %4266 = vmatprep.subr.mxu0 0.0
    %4267 = vmatpush1.msra.mxu0 0.0
    %4268 = vmatprep.subr.mxu0 0.0
    %4269 = vmatpush1.msra.mxu0 0.0
    %4270 = vmatprep.subr.mxu0 0.0
    %4271 = vmatpush1.msra.mxu0 0.0
    %4272 = vmatprep.subr.mxu0 0.0
    %4273 = vmatpush1.msra.mxu0 0.0
    %4274 = vmatprep.subr.mxu0 0.0
    %4275 = vmatpush1.msra.mxu0 0.0
    %4276 = vmatprep.subr.mxu0 0.0
    %4277 = vmatpush1.msra.mxu0 0.0
    %4278 = vmatprep.subr.mxu0 0.0
    %4279 = vmatpush1.msra.mxu0 0.0
    %4280 = vmatprep.subr.mxu0 0.0
    %4281 = vmatpush1.msra.mxu0 0.0
    %4282 = vmatprep.subr.mxu0 0.0
    %4283 = vmatpush1.msra.mxu0 0.0
    %4284 = vmatprep.subr.mxu0 0.0
    %4285 = vmatpush1.msra.mxu0 0.0
    %4286 = vmatprep.subr.mxu0 0.0
    %4287 = vmatpush1.msra.mxu0 0.0
    %4288 = vmatprep.subr.mxu0 0.0
    %4289 = vmatpush1.msra.mxu0 0.0
    %4290 = vmatprep.subr.mxu0 0.0
    %4291 = vmatpush1.msra.mxu0 0.0
    %4292 = vmatprep.subr.mxu0 0.0
    %4293 = vmatpush1.msra.mxu0 0.0
    %4294 = vmatprep.subr.mxu0 0.0
    %4295 = vmatpush1.msra.mxu0 0.0
    %4296 = vmatprep.subr.mxu0 0.0
    %4297 = vmatpush1.msra.mxu0 0.0
    %4298 = vmatprep.subr.mxu0 0.0
    %4299 = vmatpush1.msra.mxu0 0.0
    %4300 = vmatprep.subr.mxu0 0.0
    %4301 = vmatpush1.msra.mxu0 0.0
    %4302 = vmatprep.subr.mxu0 0.0
    %4303 = vmatpush1.msra.mxu0 0.0
    %4304 = vmatprep.subr.mxu0 0.0
    %4305 = vmatpush1.msra.mxu0 0.0
    %4306 = vmatprep.subr.mxu0 0.0
    %4307 = vmatpush1.msra.mxu0 0.0
    %4308 = vmatprep.subr.mxu0 0.0
    %4309 = vmatpush1.msra.mxu0 0.0
    %4310 = vmatprep.subr.mxu0 0.0
    %4311 = vmatpush1.msra.mxu0 0.0
    %4312 = vmatprep.subr.mxu0 0.0
    %4313 = vmatpush1.msra.mxu0 0.0
    %4314 = vmatprep.subr.mxu0 0.0
    %4315 = vmatpush1.msra.mxu0 0.0
    %4316 = vmatprep.subr.mxu0 0.0
    %4317 = vmatpush1.msra.mxu0 0.0
    %4318 = vmatprep.mubr.f32.mxu0 0.0
    %4319 = vmatmul.mubr.f32.gmra.mrb[0].mxu0 %v4110
    %v4320 = vpop.f32.mrb[0].mxu0
    %v4321 = vadd.f32 0.0, %v4320
    %v4322 = vpop.f32.mrb[0].mxu0
    %v4323 = vadd.f32 0.0, %v4322
    %4324 = vdwg.mxu0
    %v4325 = vadd.f32 %v4101, %v4179
    %v4326 = vadd.f32 %v4102, %v4181
    %v4327 = vadd.f32 %v4103, %v4250
    %v4328 = vadd.f32 %v4104, %v4252
    %v4329 = vadd.f32 %v4105, %v4321
    %v4330 = vadd.f32 %v4106, %v4323
    %s4331 = scalar_lea.vmem %s2, 40
    %v4332 = vld [vmem:[%s4331] sm:$0xff]
    %v4334 = vsel %vm3146, %v4332, 0
    %4336 = vmatprep.subr.mxu0 %v3122
    %4337 = vmatpush1.msra.mxu0 %v3121
    %4338 = vmatprep.subr.mxu0 %v3128
    %4339 = vmatpush1.msra.mxu0 %v3127
    %4340 = vmatprep.subr.mxu0 %v3134
    %4341 = vmatpush1.msra.mxu0 %v3133
    %4342 = vmatprep.subr.mxu0 %v3140
    %4343 = vmatpush1.msra.mxu0 %v3139
    %4344 = vmatprep.subr.mxu0 0.0
    %4345 = vmatpush1.msra.mxu0 0.0
    %4346 = vmatprep.subr.mxu0 0.0
    %4347 = vmatpush1.msra.mxu0 0.0
    %4348 = vmatprep.subr.mxu0 0.0
    %4349 = vmatpush1.msra.mxu0 0.0
    %4350 = vmatprep.subr.mxu0 0.0
    %4351 = vmatpush1.msra.mxu0 0.0
    %4352 = vmatprep.subr.mxu0 0.0
    %4353 = vmatpush1.msra.mxu0 0.0
    %4354 = vmatprep.subr.mxu0 0.0
    %4355 = vmatpush1.msra.mxu0 0.0
    %4356 = vmatprep.subr.mxu0 0.0
    %4357 = vmatpush1.msra.mxu0 0.0
    %4358 = vmatprep.subr.mxu0 0.0
    %4359 = vmatpush1.msra.mxu0 0.0
    %4360 = vmatprep.subr.mxu0 0.0
    %4361 = vmatpush1.msra.mxu0 0.0
    %4362 = vmatprep.subr.mxu0 0.0
    %4363 = vmatpush1.msra.mxu0 0.0
    %4364 = vmatprep.subr.mxu0 0.0
    %4365 = vmatpush1.msra.mxu0 0.0
    %4366 = vmatprep.subr.mxu0 0.0
    %4367 = vmatpush1.msra.mxu0 0.0
    %4368 = vmatprep.subr.mxu0 0.0
    %4369 = vmatpush1.msra.mxu0 0.0
    %4370 = vmatprep.subr.mxu0 0.0
    %4371 = vmatpush1.msra.mxu0 0.0
    %4372 = vmatprep.subr.mxu0 0.0
    %4373 = vmatpush1.msra.mxu0 0.0
    %4374 = vmatprep.subr.mxu0 0.0
    %4375 = vmatpush1.msra.mxu0 0.0
    %4376 = vmatprep.subr.mxu0 0.0
    %4377 = vmatpush1.msra.mxu0 0.0
    %4378 = vmatprep.subr.mxu0 0.0
    %4379 = vmatpush1.msra.mxu0 0.0
    %4380 = vmatprep.subr.mxu0 0.0
    %4381 = vmatpush1.msra.mxu0 0.0
    %4382 = vmatprep.subr.mxu0 0.0
    %4383 = vmatpush1.msra.mxu0 0.0
    %4384 = vmatprep.subr.mxu0 0.0
    %4385 = vmatpush1.msra.mxu0 0.0
    %4386 = vmatprep.subr.mxu0 0.0
    %4387 = vmatpush1.msra.mxu0 0.0
    %4388 = vmatprep.subr.mxu0 0.0
    %4389 = vmatpush1.msra.mxu0 0.0
    %4390 = vmatprep.subr.mxu0 0.0
    %4391 = vmatpush1.msra.mxu0 0.0
    %4392 = vmatprep.subr.mxu0 0.0
    %4393 = vmatpush1.msra.mxu0 0.0
    %4394 = vmatprep.subr.mxu0 0.0
    %4395 = vmatpush1.msra.mxu0 0.0
    %4396 = vmatprep.subr.mxu0 0.0
    %4397 = vmatpush1.msra.mxu0 0.0
    %4398 = vmatprep.subr.mxu0 0.0
    %4399 = vmatpush1.msra.mxu0 0.0
    %4400 = vmatprep.mubr.f32.mxu0 0.0
    %4401 = vmatmul.mubr.f32.gmra.mrb[0].mxu0 %v4334
    %v4402 = vpop.f32.mrb[0].mxu0
    %v4403 = vadd.f32 0.0, %v4402
    %v4404 = vpop.f32.mrb[0].mxu0
    %v4405 = vadd.f32 0.0, %v4404
    %4406 = vdwg.mxu0
    %4407 = vmatprep.subr.mxu0 %v3124
    %4408 = vmatpush1.msra.mxu0 %v3123
    %4409 = vmatprep.subr.mxu0 %v3130
    %4410 = vmatpush1.msra.mxu0 %v3129
    %4411 = vmatprep.subr.mxu0 %v3136
    %4412 = vmatpush1.msra.mxu0 %v3135
    %4413 = vmatprep.subr.mxu0 %v3142
    %4414 = vmatpush1.msra.mxu0 %v3141
    %4415 = vmatprep.subr.mxu0 0.0
    %4416 = vmatpush1.msra.mxu0 0.0
    %4417 = vmatprep.subr.mxu0 0.0
    %4418 = vmatpush1.msra.mxu0 0.0
    %4419 = vmatprep.subr.mxu0 0.0
    %4420 = vmatpush1.msra.mxu0 0.0
    %4421 = vmatprep.subr.mxu0 0.0
    %4422 = vmatpush1.msra.mxu0 0.0
    %4423 = vmatprep.subr.mxu0 0.0
    %4424 = vmatpush1.msra.mxu0 0.0
    %4425 = vmatprep.subr.mxu0 0.0
    %4426 = vmatpush1.msra.mxu0 0.0
    %4427 = vmatprep.subr.mxu0 0.0
    %4428 = vmatpush1.msra.mxu0 0.0
    %4429 = vmatprep.subr.mxu0 0.0
    %4430 = vmatpush1.msra.mxu0 0.0
    %4431 = vmatprep.subr.mxu0 0.0
    %4432 = vmatpush1.msra.mxu0 0.0
    %4433 = vmatprep.subr.mxu0 0.0
    %4434 = vmatpush1.msra.mxu0 0.0
    %4435 = vmatprep.subr.mxu0 0.0
    %4436 = vmatpush1.msra.mxu0 0.0
    %4437 = vmatprep.subr.mxu0 0.0
    %4438 = vmatpush1.msra.mxu0 0.0
    %4439 = vmatprep.subr.mxu0 0.0
    %4440 = vmatpush1.msra.mxu0 0.0
    %4441 = vmatprep.subr.mxu0 0.0
    %4442 = vmatpush1.msra.mxu0 0.0
    %4443 = vmatprep.subr.mxu0 0.0
    %4444 = vmatpush1.msra.mxu0 0.0
    %4445 = vmatprep.subr.mxu0 0.0
    %4446 = vmatpush1.msra.mxu0 0.0
    %4447 = vmatprep.subr.mxu0 0.0
    %4448 = vmatpush1.msra.mxu0 0.0
    %4449 = vmatprep.subr.mxu0 0.0
    %4450 = vmatpush1.msra.mxu0 0.0
    %4451 = vmatprep.subr.mxu0 0.0
    %4452 = vmatpush1.msra.mxu0 0.0
    %4453 = vmatprep.subr.mxu0 0.0
    %4454 = vmatpush1.msra.mxu0 0.0
    %4455 = vmatprep.subr.mxu0 0.0
    %4456 = vmatpush1.msra.mxu0 0.0
    %4457 = vmatprep.subr.mxu0 0.0
    %4458 = vmatpush1.msra.mxu0 0.0
    %4459 = vmatprep.subr.mxu0 0.0
    %4460 = vmatpush1.msra.mxu0 0.0
    %4461 = vmatprep.subr.mxu0 0.0
    %4462 = vmatpush1.msra.mxu0 0.0
    %4463 = vmatprep.subr.mxu0 0.0
    %4464 = vmatpush1.msra.mxu0 0.0
    %4465 = vmatprep.subr.mxu0 0.0
    %4466 = vmatpush1.msra.mxu0 0.0
    %4467 = vmatprep.subr.mxu0 0.0
    %4468 = vmatpush1.msra.mxu0 0.0
    %4469 = vmatprep.subr.mxu0 0.0
    %4470 = vmatpush1.msra.mxu0 0.0
    %4471 = vmatprep.mubr.f32.mxu0 0.0
    %4472 = vmatmul.mubr.f32.gmra.mrb[0].mxu0 %v4334
    %v4473 = vpop.f32.mrb[0].mxu0
    %v4474 = vadd.f32 0.0, %v4473
    %v4475 = vpop.f32.mrb[0].mxu0
    %v4476 = vadd.f32 0.0, %v4475
    %4477 = vdwg.mxu0
    %4478 = vmatprep.subr.mxu0 %v3126
    %4479 = vmatpush1.msra.mxu0 %v3125
    %4480 = vmatprep.subr.mxu0 %v3132
    %4481 = vmatpush1.msra.mxu0 %v3131
    %4482 = vmatprep.subr.mxu0 %v3138
    %4483 = vmatpush1.msra.mxu0 %v3137
    %4484 = vmatprep.subr.mxu0 %v3144
    %4485 = vmatpush1.msra.mxu0 %v3143
    %4486 = vmatprep.subr.mxu0 0.0
    %4487 = vmatpush1.msra.mxu0 0.0
    %4488 = vmatprep.subr.mxu0 0.0
    %4489 = vmatpush1.msra.mxu0 0.0
    %4490 = vmatprep.subr.mxu0 0.0
    %4491 = vmatpush1.msra.mxu0 0.0
    %4492 = vmatprep.subr.mxu0 0.0
    %4493 = vmatpush1.msra.mxu0 0.0
    %4494 = vmatprep.subr.mxu0 0.0
    %4495 = vmatpush1.msra.mxu0 0.0
    %4496 = vmatprep.subr.mxu0 0.0
    %4497 = vmatpush1.msra.mxu0 0.0
    %4498 = vmatprep.subr.mxu0 0.0
    %4499 = vmatpush1.msra.mxu0 0.0
    %4500 = vmatprep.subr.mxu0 0.0
    %4501 = vmatpush1.msra.mxu0 0.0
    %4502 = vmatprep.subr.mxu0 0.0
    %4503 = vmatpush1.msra.mxu0 0.0
    %4504 = vmatprep.subr.mxu0 0.0
    %4505 = vmatpush1.msra.mxu0 0.0
    %4506 = vmatprep.subr.mxu0 0.0
    %4507 = vmatpush1.msra.mxu0 0.0
    %4508 = vmatprep.subr.mxu0 0.0
    %4509 = vmatpush1.msra.mxu0 0.0
    %4510 = vmatprep.subr.mxu0 0.0
    %4511 = vmatpush1.msra.mxu0 0.0
    %4512 = vmatprep.subr.mxu0 0.0
    %4513 = vmatpush1.msra.mxu0 0.0
    %4514 = vmatprep.subr.mxu0 0.0
    %4515 = vmatpush1.msra.mxu0 0.0
    %4516 = vmatprep.subr.mxu0 0.0
    %4517 = vmatpush1.msra.mxu0 0.0
    %4518 = vmatprep.subr.mxu0 0.0
    %4519 = vmatpush1.msra.mxu0 0.0
    %4520 = vmatprep.subr.mxu0 0.0
    %4521 = vmatpush1.msra.mxu0 0.0
    %4522 = vmatprep.subr.mxu0 0.0
    %4523 = vmatpush1.msra.mxu0 0.0
    %4524 = vmatprep.subr.mxu0 0.0
    %4525 = vmatpush1.msra.mxu0 0.0
    %4526 = vmatprep.subr.mxu0 0.0
    %4527 = vmatpush1.msra.mxu0 0.0
    %4528 = vmatprep.subr.mxu0 0.0
    %4529 = vmatpush1.msra.mxu0 0.0
    %4530 = vmatprep.subr.mxu0 0.0
    %4531 = vmatpush1.msra.mxu0 0.0
    %4532 = vmatprep.subr.mxu0 0.0
    %4533 = vmatpush1.msra.mxu0 0.0
    %4534 = vmatprep.subr.mxu0 0.0
    %4535 = vmatpush1.msra.mxu0 0.0
    %4536 = vmatprep.subr.mxu0 0.0
    %4537 = vmatpush1.msra.mxu0 0.0
    %4538 = vmatprep.subr.mxu0 0.0
    %4539 = vmatpush1.msra.mxu0 0.0
    %4540 = vmatprep.subr.mxu0 0.0
    %4541 = vmatpush1.msra.mxu0 0.0
    %4542 = vmatprep.mubr.f32.mxu0 0.0
    %4543 = vmatmul.mubr.f32.gmra.mrb[0].mxu0 %v4334
    %v4544 = vpop.f32.mrb[0].mxu0
    %v4545 = vadd.f32 0.0, %v4544
    %v4546 = vpop.f32.mrb[0].mxu0
    %v4547 = vadd.f32 0.0, %v4546
    %4548 = vdwg.mxu0
    %4549 = vrot.lane.b32.xlu0 %v4403, 127
    %v4550 = vpop.permute.xlu0 %4549
    %4551 = vrot.lane.b32.xlu0 %v4405, 127
    %v4552 = vpop.permute.xlu0 %4551
    %4553 = vrot.lane.b32.xlu0 %v4474, 127
    %v4554 = vpop.permute.xlu0 %4553
    %4555 = vrot.lane.b32.xlu0 %v4476, 127
    %v4556 = vpop.permute.xlu0 %4555
    %4557 = vrot.lane.b32.xlu0 %v4545, 127
    %v4558 = vpop.permute.xlu0 %4557
    %4559 = vrot.lane.b32.xlu0 %v4547, 127
    %v4560 = vpop.permute.xlu0 %4559
    %v4561 = vsel %vm1698, %v4558, %v4560
    %v4562 = vsel %vm1698, %v4556, %v4558
    %v4563 = vsel %vm1698, %v4554, %v4556
    %v4564 = vsel %vm1698, %v4552, %v4554
    %v4565 = vsel %vm1698, %v4550, %v4552
    %v4566 = vsel %vm1698, %v4560, %v4550
    %v4567 = vadd.f32 %v4325, %v4565
    %v4568 = vadd.f32 %v4326, %v4564
    %v4569 = vadd.f32 %v4327, %v4563
    %v4570 = vadd.f32 %v4328, %v4562
    %v4571 = vadd.f32 %v4329, %v4561
    %v4572 = vadd.f32 %v4330, %v4566
    %s4573 = scalar_lea.vmem %s2, 48
    %v4574 = vld [vmem:[%s4573] sm:$0xff]
    %v4576 = vsel %vm3146, %v4574, 0
    %4578 = vmatprep.subr.mxu0 %v3122
    %4579 = vmatpush1.msra.mxu0 %v3121
    %4580 = vmatprep.subr.mxu0 %v3128
    %4581 = vmatpush1.msra.mxu0 %v3127
    %4582 = vmatprep.subr.mxu0 %v3134
    %4583 = vmatpush1.msra.mxu0 %v3133
    %4584 = vmatprep.subr.mxu0 %v3140
    %4585 = vmatpush1.msra.mxu0 %v3139
    %4586 = vmatprep.subr.mxu0 0.0
    %4587 = vmatpush1.msra.mxu0 0.0
    %4588 = vmatprep.subr.mxu0 0.0
    %4589 = vmatpush1.msra.mxu0 0.0
    %4590 = vmatprep.subr.mxu0 0.0
    %4591 = vmatpush1.msra.mxu0 0.0
    %4592 = vmatprep.subr.mxu0 0.0
    %4593 = vmatpush1.msra.mxu0 0.0
    %4594 = vmatprep.subr.mxu0 0.0
    %4595 = vmatpush1.msra.mxu0 0.0
    %4596 = vmatprep.subr.mxu0 0.0
    %4597 = vmatpush1.msra.mxu0 0.0
    %4598 = vmatprep.subr.mxu0 0.0
    %4599 = vmatpush1.msra.mxu0 0.0
    %4600 = vmatprep.subr.mxu0 0.0
    %4601 = vmatpush1.msra.mxu0 0.0
    %4602 = vmatprep.subr.mxu0 0.0
    %4603 = vmatpush1.msra.mxu0 0.0
    %4604 = vmatprep.subr.mxu0 0.0
    %4605 = vmatpush1.msra.mxu0 0.0
    %4606 = vmatprep.subr.mxu0 0.0
    %4607 = vmatpush1.msra.mxu0 0.0
    %4608 = vmatprep.subr.mxu0 0.0
    %4609 = vmatpush1.msra.mxu0 0.0
    %4610 = vmatprep.subr.mxu0 0.0
    %4611 = vmatpush1.msra.mxu0 0.0
    %4612 = vmatprep.subr.mxu0 0.0
    %4613 = vmatpush1.msra.mxu0 0.0
    %4614 = vmatprep.subr.mxu0 0.0
    %4615 = vmatpush1.msra.mxu0 0.0
    %4616 = vmatprep.subr.mxu0 0.0
    %4617 = vmatpush1.msra.mxu0 0.0
    %4618 = vmatprep.subr.mxu0 0.0
    %4619 = vmatpush1.msra.mxu0 0.0
    %4620 = vmatprep.subr.mxu0 0.0
    %4621 = vmatpush1.msra.mxu0 0.0
    %4622 = vmatprep.subr.mxu0 0.0
    %4623 = vmatpush1.msra.mxu0 0.0
    %4624 = vmatprep.subr.mxu0 0.0
    %4625 = vmatpush1.msra.mxu0 0.0
    %4626 = vmatprep.subr.mxu0 0.0
    %4627 = vmatpush1.msra.mxu0 0.0
    %4628 = vmatprep.subr.mxu0 0.0
    %4629 = vmatpush1.msra.mxu0 0.0
    %4630 = vmatprep.subr.mxu0 0.0
    %4631 = vmatpush1.msra.mxu0 0.0
    %4632 = vmatprep.subr.mxu0 0.0
    %4633 = vmatpush1.msra.mxu0 0.0
    %4634 = vmatprep.subr.mxu0 0.0
    %4635 = vmatpush1.msra.mxu0 0.0
    %4636 = vmatprep.subr.mxu0 0.0
    %4637 = vmatpush1.msra.mxu0 0.0
    %4638 = vmatprep.subr.mxu0 0.0
    %4639 = vmatpush1.msra.mxu0 0.0
    %4640 = vmatprep.subr.mxu0 0.0
    %4641 = vmatpush1.msra.mxu0 0.0
    %4642 = vmatprep.mubr.f32.mxu0 0.0
    %4643 = vmatmul.mubr.f32.gmra.mrb[0].mxu0 %v4576
    %v4644 = vpop.f32.mrb[0].mxu0
    %v4645 = vadd.f32 0.0, %v4644
    %v4646 = vpop.f32.mrb[0].mxu0
    %v4647 = vadd.f32 0.0, %v4646
    %4648 = vdwg.mxu0
    %4649 = vmatprep.subr.mxu0 %v3124
    %4650 = vmatpush1.msra.mxu0 %v3123
    %4651 = vmatprep.subr.mxu0 %v3130
    %4652 = vmatpush1.msra.mxu0 %v3129
    %4653 = vmatprep.subr.mxu0 %v3136
    %4654 = vmatpush1.msra.mxu0 %v3135
    %4655 = vmatprep.subr.mxu0 %v3142
    %4656 = vmatpush1.msra.mxu0 %v3141
    %4657 = vmatprep.subr.mxu0 0.0
    %4658 = vmatpush1.msra.mxu0 0.0
    %4659 = vmatprep.subr.mxu0 0.0
    %4660 = vmatpush1.msra.mxu0 0.0
    %4661 = vmatprep.subr.mxu0 0.0
    %4662 = vmatpush1.msra.mxu0 0.0
    %4663 = vmatprep.subr.mxu0 0.0
    %4664 = vmatpush1.msra.mxu0 0.0
    %4665 = vmatprep.subr.mxu0 0.0
    %4666 = vmatpush1.msra.mxu0 0.0
    %4667 = vmatprep.subr.mxu0 0.0
    %4668 = vmatpush1.msra.mxu0 0.0
    %4669 = vmatprep.subr.mxu0 0.0
    %4670 = vmatpush1.msra.mxu0 0.0
    %4671 = vmatprep.subr.mxu0 0.0
    %4672 = vmatpush1.msra.mxu0 0.0
    %4673 = vmatprep.subr.mxu0 0.0
    %4674 = vmatpush1.msra.mxu0 0.0
    %4675 = vmatprep.subr.mxu0 0.0
    %4676 = vmatpush1.msra.mxu0 0.0
    %4677 = vmatprep.subr.mxu0 0.0
    %4678 = vmatpush1.msra.mxu0 0.0
    %4679 = vmatprep.subr.mxu0 0.0
    %4680 = vmatpush1.msra.mxu0 0.0
    %4681 = vmatprep.subr.mxu0 0.0
    %4682 = vmatpush1.msra.mxu0 0.0
    %4683 = vmatprep.subr.mxu0 0.0
    %4684 = vmatpush1.msra.mxu0 0.0
    %4685 = vmatprep.subr.mxu0 0.0
    %4686 = vmatpush1.msra.mxu0 0.0
    %4687 = vmatprep.subr.mxu0 0.0
    %4688 = vmatpush1.msra.mxu0 0.0
    %4689 = vmatprep.subr.mxu0 0.0
    %4690 = vmatpush1.msra.mxu0 0.0
    %4691 = vmatprep.subr.mxu0 0.0
    %4692 = vmatpush1.msra.mxu0 0.0
    %4693 = vmatprep.subr.mxu0 0.0
    %4694 = vmatpush1.msra.mxu0 0.0
    %4695 = vmatprep.subr.mxu0 0.0
    %4696 = vmatpush1.msra.mxu0 0.0
    %4697 = vmatprep.subr.mxu0 0.0
    %4698 = vmatpush1.msra.mxu0 0.0
    %4699 = vmatprep.subr.mxu0 0.0
    %4700 = vmatpush1.msra.mxu0 0.0
    %4701 = vmatprep.subr.mxu0 0.0
    %4702 = vmatpush1.msra.mxu0 0.0
    %4703 = vmatprep.subr.mxu0 0.0
    %4704 = vmatpush1.msra.mxu0 0.0
    %4705 = vmatprep.subr.mxu0 0.0
    %4706 = vmatpush1.msra.mxu0 0.0
    %4707 = vmatprep.subr.mxu0 0.0
    %4708 = vmatpush1.msra.mxu0 0.0
    %4709 = vmatprep.subr.mxu0 0.0
    %4710 = vmatpush1.msra.mxu0 0.0
    %4711 = vmatprep.subr.mxu0 0.0
    %4712 = vmatpush1.msra.mxu0 0.0
    %4713 = vmatprep.mubr.f32.mxu0 0.0
    %4714 = vmatmul.mubr.f32.gmra.mrb[0].mxu0 %v4576
    %v4715 = vpop.f32.mrb[0].mxu0
    %v4716 = vadd.f32 0.0, %v4715
    %v4717 = vpop.f32.mrb[0].mxu0
    %v4718 = vadd.f32 0.0, %v4717
    %4719 = vdwg.mxu0
    %4720 = vmatprep.subr.mxu0 %v3126
    %4721 = vmatpush1.msra.mxu0 %v3125
    %4722 = vmatprep.subr.mxu0 %v3132
    %4723 = vmatpush1.msra.mxu0 %v3131
    %4724 = vmatprep.subr.mxu0 %v3138
    %4725 = vmatpush1.msra.mxu0 %v3137
    %4726 = vmatprep.subr.mxu0 %v3144
    %4727 = vmatpush1.msra.mxu0 %v3143
    %4728 = vmatprep.subr.mxu0 0.0
    %4729 = vmatpush1.msra.mxu0 0.0
    %4730 = vmatprep.subr.mxu0 0.0
    %4731 = vmatpush1.msra.mxu0 0.0
    %4732 = vmatprep.subr.mxu0 0.0
    %4733 = vmatpush1.msra.mxu0 0.0
    %4734 = vmatprep.subr.mxu0 0.0
    %4735 = vmatpush1.msra.mxu0 0.0
    %4736 = vmatprep.subr.mxu0 0.0
    %4737 = vmatpush1.msra.mxu0 0.0
    %4738 = vmatprep.subr.mxu0 0.0
    %4739 = vmatpush1.msra.mxu0 0.0
    %4740 = vmatprep.subr.mxu0 0.0
    %4741 = vmatpush1.msra.mxu0 0.0
    %4742 = vmatprep.subr.mxu0 0.0
    %4743 = vmatpush1.msra.mxu0 0.0
    %4744 = vmatprep.subr.mxu0 0.0
    %4745 = vmatpush1.msra.mxu0 0.0
    %4746 = vmatprep.subr.mxu0 0.0
    %4747 = vmatpush1.msra.mxu0 0.0
    %4748 = vmatprep.subr.mxu0 0.0
    %4749 = vmatpush1.msra.mxu0 0.0
    %4750 = vmatprep.subr.mxu0 0.0
    %4751 = vmatpush1.msra.mxu0 0.0
    %4752 = vmatprep.subr.mxu0 0.0
    %4753 = vmatpush1.msra.mxu0 0.0
    %4754 = vmatprep.subr.mxu0 0.0
    %4755 = vmatpush1.msra.mxu0 0.0
    %4756 = vmatprep.subr.mxu0 0.0
    %4757 = vmatpush1.msra.mxu0 0.0
    %4758 = vmatprep.subr.mxu0 0.0
    %4759 = vmatpush1.msra.mxu0 0.0
    %4760 = vmatprep.subr.mxu0 0.0
    %4761 = vmatpush1.msra.mxu0 0.0
    %4762 = vmatprep.subr.mxu0 0.0
    %4763 = vmatpush1.msra.mxu0 0.0
    %4764 = vmatprep.subr.mxu0 0.0
    %4765 = vmatpush1.msra.mxu0 0.0
    %4766 = vmatprep.subr.mxu0 0.0
    %4767 = vmatpush1.msra.mxu0 0.0
    %4768 = vmatprep.subr.mxu0 0.0
    %4769 = vmatpush1.msra.mxu0 0.0
    %4770 = vmatprep.subr.mxu0 0.0
    %4771 = vmatpush1.msra.mxu0 0.0
    %4772 = vmatprep.subr.mxu0 0.0
    %4773 = vmatpush1.msra.mxu0 0.0
    %4774 = vmatprep.subr.mxu0 0.0
    %4775 = vmatpush1.msra.mxu0 0.0
    %4776 = vmatprep.subr.mxu0 0.0
    %4777 = vmatpush1.msra.mxu0 0.0
    %4778 = vmatprep.subr.mxu0 0.0
    %4779 = vmatpush1.msra.mxu0 0.0
    %4780 = vmatprep.subr.mxu0 0.0
    %4781 = vmatpush1.msra.mxu0 0.0
    %4782 = vmatprep.subr.mxu0 0.0
    %4783 = vmatpush1.msra.mxu0 0.0
    %4784 = vmatprep.mubr.f32.mxu0 0.0
    %4785 = vmatmul.mubr.f32.gmra.mrb[0].mxu0 %v4576
    %v4786 = vpop.f32.mrb[0].mxu0
    %v4787 = vadd.f32 0.0, %v4786
    %v4788 = vpop.f32.mrb[0].mxu0
    %v4789 = vadd.f32 0.0, %v4788
    %4790 = vdwg.mxu0
    %4791 = vrot.lane.b32.xlu0 %v4645, 111
    %v4792 = vpop.permute.xlu0 %4791
    %4793 = vrot.lane.b32.xlu0 %v4647, 111
    %v4794 = vpop.permute.xlu0 %4793
    %4795 = vrot.lane.b32.xlu0 %v4716, 111
    %v4796 = vpop.permute.xlu0 %4795
    %4797 = vrot.lane.b32.xlu0 %v4718, 111
    %v4798 = vpop.permute.xlu0 %4797
    %4799 = vrot.lane.b32.xlu0 %v4787, 111
    %v4800 = vpop.permute.xlu0 %4799
    %4801 = vrot.lane.b32.xlu0 %v4789, 111
    %v4802 = vpop.permute.xlu0 %4801
    %v4803 = vsel %vm2043, %v4800, %v4802
    %v4804 = vsel %vm2043, %v4798, %v4800
    %v4805 = vsel %vm2043, %v4796, %v4798
    %v4806 = vsel %vm2043, %v4794, %v4796
    %v4807 = vsel %vm2043, %v4792, %v4794
    %v4808 = vsel %vm2043, %v4802, %v4792
    %v4809 = vadd.f32 %v4567, %v4807
    %v4810 = vadd.f32 %v4568, %v4806
    %v4811 = vadd.f32 %v4569, %v4805
    %v4812 = vadd.f32 %v4570, %v4804
    %v4813 = vadd.f32 %v4571, %v4803
    %v4814 = vadd.f32 %v4572, %v4808
    %s4815 = scalar_lea.vmem %s2, 56
    %v4816 = vld [vmem:[%s4815] sm:$0xff]
    %v4818 = vsel %vm3146, %v4816, 0
    %4820 = vmatprep.subr.mxu0 %v3122
    %4821 = vmatpush1.msra.mxu0 %v3121
    %4822 = vmatprep.subr.mxu0 %v3128
    %4823 = vmatpush1.msra.mxu0 %v3127
    %4824 = vmatprep.subr.mxu0 %v3134
    %4825 = vmatpush1.msra.mxu0 %v3133
    %4826 = vmatprep.subr.mxu0 %v3140
    %4827 = vmatpush1.msra.mxu0 %v3139
    %4828 = vmatprep.subr.mxu0 0.0
    %4829 = vmatpush1.msra.mxu0 0.0
    %4830 = vmatprep.subr.mxu0 0.0
    %4831 = vmatpush1.msra.mxu0 0.0
    %4832 = vmatprep.subr.mxu0 0.0
    %4833 = vmatpush1.msra.mxu0 0.0
    %4834 = vmatprep.subr.mxu0 0.0
    %4835 = vmatpush1.msra.mxu0 0.0
    %4836 = vmatprep.subr.mxu0 0.0
    %4837 = vmatpush1.msra.mxu0 0.0
    %4838 = vmatprep.subr.mxu0 0.0
    %4839 = vmatpush1.msra.mxu0 0.0
    %4840 = vmatprep.subr.mxu0 0.0
    %4841 = vmatpush1.msra.mxu0 0.0
    %4842 = vmatprep.subr.mxu0 0.0
    %4843 = vmatpush1.msra.mxu0 0.0
    %4844 = vmatprep.subr.mxu0 0.0
    %4845 = vmatpush1.msra.mxu0 0.0
    %4846 = vmatprep.subr.mxu0 0.0
    %4847 = vmatpush1.msra.mxu0 0.0
    %4848 = vmatprep.subr.mxu0 0.0
    %4849 = vmatpush1.msra.mxu0 0.0
    %4850 = vmatprep.subr.mxu0 0.0
    %4851 = vmatpush1.msra.mxu0 0.0
    %4852 = vmatprep.subr.mxu0 0.0
    %4853 = vmatpush1.msra.mxu0 0.0
    %4854 = vmatprep.subr.mxu0 0.0
    %4855 = vmatpush1.msra.mxu0 0.0
    %4856 = vmatprep.subr.mxu0 0.0
    %4857 = vmatpush1.msra.mxu0 0.0
    %4858 = vmatprep.subr.mxu0 0.0
    %4859 = vmatpush1.msra.mxu0 0.0
    %4860 = vmatprep.subr.mxu0 0.0
    %4861 = vmatpush1.msra.mxu0 0.0
    %4862 = vmatprep.subr.mxu0 0.0
    %4863 = vmatpush1.msra.mxu0 0.0
    %4864 = vmatprep.subr.mxu0 0.0
    %4865 = vmatpush1.msra.mxu0 0.0
    %4866 = vmatprep.subr.mxu0 0.0
    %4867 = vmatpush1.msra.mxu0 0.0
    %4868 = vmatprep.subr.mxu0 0.0
    %4869 = vmatpush1.msra.mxu0 0.0
    %4870 = vmatprep.subr.mxu0 0.0
    %4871 = vmatpush1.msra.mxu0 0.0
    %4872 = vmatprep.subr.mxu0 0.0
    %4873 = vmatpush1.msra.mxu0 0.0
    %4874 = vmatprep.subr.mxu0 0.0
    %4875 = vmatpush1.msra.mxu0 0.0
    %4876 = vmatprep.subr.mxu0 0.0
    %4877 = vmatpush1.msra.mxu0 0.0
    %4878 = vmatprep.subr.mxu0 0.0
    %4879 = vmatpush1.msra.mxu0 0.0
    %4880 = vmatprep.subr.mxu0 0.0
    %4881 = vmatpush1.msra.mxu0 0.0
    %4882 = vmatprep.subr.mxu0 0.0
    %4883 = vmatpush1.msra.mxu0 0.0
    %4884 = vmatprep.mubr.f32.mxu0 0.0
    %4885 = vmatmul.mubr.f32.gmra.mrb[0].mxu0 %v4818
    %v4886 = vpop.f32.mrb[0].mxu0
    %v4887 = vadd.f32 0.0, %v4886
    %v4888 = vpop.f32.mrb[0].mxu0
    %v4889 = vadd.f32 0.0, %v4888
    %4890 = vdwg.mxu0
    %4891 = vmatprep.subr.mxu0 %v3124
    %4892 = vmatpush1.msra.mxu0 %v3123
    %4893 = vmatprep.subr.mxu0 %v3130
    %4894 = vmatpush1.msra.mxu0 %v3129
    %4895 = vmatprep.subr.mxu0 %v3136
    %4896 = vmatpush1.msra.mxu0 %v3135
    %4897 = vmatprep.subr.mxu0 %v3142
    %4898 = vmatpush1.msra.mxu0 %v3141
    %4899 = vmatprep.subr.mxu0 0.0
    %4900 = vmatpush1.msra.mxu0 0.0
    %4901 = vmatprep.subr.mxu0 0.0
    %4902 = vmatpush1.msra.mxu0 0.0
    %4903 = vmatprep.subr.mxu0 0.0
    %4904 = vmatpush1.msra.mxu0 0.0
    %4905 = vmatprep.subr.mxu0 0.0
    %4906 = vmatpush1.msra.mxu0 0.0
    %4907 = vmatprep.subr.mxu0 0.0
    %4908 = vmatpush1.msra.mxu0 0.0
    %4909 = vmatprep.subr.mxu0 0.0
    %4910 = vmatpush1.msra.mxu0 0.0
    %4911 = vmatprep.subr.mxu0 0.0
    %4912 = vmatpush1.msra.mxu0 0.0
    %4913 = vmatprep.subr.mxu0 0.0
    %4914 = vmatpush1.msra.mxu0 0.0
    %4915 = vmatprep.subr.mxu0 0.0
    %4916 = vmatpush1.msra.mxu0 0.0
    %4917 = vmatprep.subr.mxu0 0.0
    %4918 = vmatpush1.msra.mxu0 0.0
    %4919 = vmatprep.subr.mxu0 0.0
    %4920 = vmatpush1.msra.mxu0 0.0
    %4921 = vmatprep.subr.mxu0 0.0
    %4922 = vmatpush1.msra.mxu0 0.0
    %4923 = vmatprep.subr.mxu0 0.0
    %4924 = vmatpush1.msra.mxu0 0.0
    %4925 = vmatprep.subr.mxu0 0.0
    %4926 = vmatpush1.msra.mxu0 0.0
    %4927 = vmatprep.subr.mxu0 0.0
    %4928 = vmatpush1.msra.mxu0 0.0
    %4929 = vmatprep.subr.mxu0 0.0
    %4930 = vmatpush1.msra.mxu0 0.0
    %4931 = vmatprep.subr.mxu0 0.0
    %4932 = vmatpush1.msra.mxu0 0.0
    %4933 = vmatprep.subr.mxu0 0.0
    %4934 = vmatpush1.msra.mxu0 0.0
    %4935 = vmatprep.subr.mxu0 0.0
    %4936 = vmatpush1.msra.mxu0 0.0
    %4937 = vmatprep.subr.mxu0 0.0
    %4938 = vmatpush1.msra.mxu0 0.0
    %4939 = vmatprep.subr.mxu0 0.0
    %4940 = vmatpush1.msra.mxu0 0.0
    %4941 = vmatprep.subr.mxu0 0.0
    %4942 = vmatpush1.msra.mxu0 0.0
    %4943 = vmatprep.subr.mxu0 0.0
    %4944 = vmatpush1.msra.mxu0 0.0
    %4945 = vmatprep.subr.mxu0 0.0
    %4946 = vmatpush1.msra.mxu0 0.0
    %4947 = vmatprep.subr.mxu0 0.0
    %4948 = vmatpush1.msra.mxu0 0.0
    %4949 = vmatprep.subr.mxu0 0.0
    %4950 = vmatpush1.msra.mxu0 0.0
    %4951 = vmatprep.subr.mxu0 0.0
    %4952 = vmatpush1.msra.mxu0 0.0
    %4953 = vmatprep.subr.mxu0 0.0
    %4954 = vmatpush1.msra.mxu0 0.0
    %4955 = vmatprep.mubr.f32.mxu0 0.0
    %4956 = vmatmul.mubr.f32.gmra.mrb[0].mxu0 %v4818
    %v4957 = vpop.f32.mrb[0].mxu0
    %v4958 = vadd.f32 0.0, %v4957
    %v4959 = vpop.f32.mrb[0].mxu0
    %v4960 = vadd.f32 0.0, %v4959
    %4961 = vdwg.mxu0
    %4962 = vmatprep.subr.mxu0 %v3126
    %4963 = vmatpush1.msra.mxu0 %v3125
    %4964 = vmatprep.subr.mxu0 %v3132
    %4965 = vmatpush1.msra.mxu0 %v3131
    %4966 = vmatprep.subr.mxu0 %v3138
    %4967 = vmatpush1.msra.mxu0 %v3137
    %4968 = vmatprep.subr.mxu0 %v3144
    %4969 = vmatpush1.msra.mxu0 %v3143
    %4970 = vmatprep.subr.mxu0 0.0
    %4971 = vmatpush1.msra.mxu0 0.0
    %4972 = vmatprep.subr.mxu0 0.0
    %4973 = vmatpush1.msra.mxu0 0.0
    %4974 = vmatprep.subr.mxu0 0.0
    %4975 = vmatpush1.msra.mxu0 0.0
    %4976 = vmatprep.subr.mxu0 0.0
    %4977 = vmatpush1.msra.mxu0 0.0
    %4978 = vmatprep.subr.mxu0 0.0
    %4979 = vmatpush1.msra.mxu0 0.0
    %4980 = vmatprep.subr.mxu0 0.0
    %4981 = vmatpush1.msra.mxu0 0.0
    %4982 = vmatprep.subr.mxu0 0.0
    %4983 = vmatpush1.msra.mxu0 0.0
    %4984 = vmatprep.subr.mxu0 0.0
    %4985 = vmatpush1.msra.mxu0 0.0
    %4986 = vmatprep.subr.mxu0 0.0
    %4987 = vmatpush1.msra.mxu0 0.0
    %4988 = vmatprep.subr.mxu0 0.0
    %4989 = vmatpush1.msra.mxu0 0.0
    %4990 = vmatprep.subr.mxu0 0.0
    %4991 = vmatpush1.msra.mxu0 0.0
    %4992 = vmatprep.subr.mxu0 0.0
    %4993 = vmatpush1.msra.mxu0 0.0
    %4994 = vmatprep.subr.mxu0 0.0
    %4995 = vmatpush1.msra.mxu0 0.0
    %4996 = vmatprep.subr.mxu0 0.0
    %4997 = vmatpush1.msra.mxu0 0.0
    %4998 = vmatprep.subr.mxu0 0.0
    %4999 = vmatpush1.msra.mxu0 0.0
    %5000 = vmatprep.subr.mxu0 0.0
    %5001 = vmatpush1.msra.mxu0 0.0
    %5002 = vmatprep.subr.mxu0 0.0
    %5003 = vmatpush1.msra.mxu0 0.0
    %5004 = vmatprep.subr.mxu0 0.0
    %5005 = vmatpush1.msra.mxu0 0.0
    %5006 = vmatprep.subr.mxu0 0.0
    %5007 = vmatpush1.msra.mxu0 0.0
    %5008 = vmatprep.subr.mxu0 0.0
    %5009 = vmatpush1.msra.mxu0 0.0
    %5010 = vmatprep.subr.mxu0 0.0
    %5011 = vmatpush1.msra.mxu0 0.0
    %5012 = vmatprep.subr.mxu0 0.0
    %5013 = vmatpush1.msra.mxu0 0.0
    %5014 = vmatprep.subr.mxu0 0.0
    %5015 = vmatpush1.msra.mxu0 0.0
    %5016 = vmatprep.subr.mxu0 0.0
    %5017 = vmatpush1.msra.mxu0 0.0
    %5018 = vmatprep.subr.mxu0 0.0
    %5019 = vmatpush1.msra.mxu0 0.0
    %5020 = vmatprep.subr.mxu0 0.0
    %5021 = vmatpush1.msra.mxu0 0.0
    %5022 = vmatprep.subr.mxu0 0.0
    %5023 = vmatpush1.msra.mxu0 0.0
    %5024 = vmatprep.subr.mxu0 0.0
    %5025 = vmatpush1.msra.mxu0 0.0
    %5026 = vmatprep.mubr.f32.mxu0 0.0
    %5027 = vmatmul.mubr.f32.gmra.mrb[0].mxu0 %v4818
    %v5028 = vpop.f32.mrb[0].mxu0
    %v5029 = vadd.f32 0.0, %v5028
    %v5030 = vpop.f32.mrb[0].mxu0
    %v5031 = vadd.f32 0.0, %v5030
    %5032 = vdwg.mxu0
    %5033 = vrot.lane.b32.xlu0 %v4887, 110
    %v5034 = vpop.permute.xlu0 %5033
    %5035 = vrot.lane.b32.xlu0 %v4889, 110
    %v5036 = vpop.permute.xlu0 %5035
    %5037 = vrot.lane.b32.xlu0 %v4958, 110
    %v5038 = vpop.permute.xlu0 %5037
    %5039 = vrot.lane.b32.xlu0 %v4960, 110
    %v5040 = vpop.permute.xlu0 %5039
    %5041 = vrot.lane.b32.xlu0 %v5029, 110
    %v5042 = vpop.permute.xlu0 %5041
    %5043 = vrot.lane.b32.xlu0 %v5031, 110
    %v5044 = vpop.permute.xlu0 %5043
    %v5045 = vsel %vm2388, %v5042, %v5044
    %v5046 = vsel %vm2388, %v5040, %v5042
    %v5047 = vsel %vm2388, %v5038, %v5040
    %v5048 = vsel %vm2388, %v5036, %v5038
    %v5049 = vsel %vm2388, %v5034, %v5036
    %v5050 = vsel %vm2388, %v5044, %v5034
    %v5051 = vadd.f32 %v4809, %v5049
    %v5052 = vadd.f32 %v4810, %v5048
    %v5053 = vadd.f32 %v4811, %v5047
    %v5054 = vadd.f32 %v4812, %v5046
    %v5055 = vadd.f32 %v4813, %v5045
    %v5056 = vadd.f32 %v4814, %v5050
    %s5057 = scalar_lea.vmem %s2, 64
    %v5058 = vld [vmem:[%s5057] sm:$0xff]
    %v5060 = vsel %vm3146, %v5058, 0
    %5062 = vmatprep.subr.mxu0 %v3122
    %5063 = vmatpush1.msra.mxu0 %v3121
    %5064 = vmatprep.subr.mxu0 %v3128
    %5065 = vmatpush1.msra.mxu0 %v3127
    %5066 = vmatprep.subr.mxu0 %v3134
    %5067 = vmatpush1.msra.mxu0 %v3133
    %5068 = vmatprep.subr.mxu0 %v3140
    %5069 = vmatpush1.msra.mxu0 %v3139
    %5070 = vmatprep.subr.mxu0 0.0
    %5071 = vmatpush1.msra.mxu0 0.0
    %5072 = vmatprep.subr.mxu0 0.0
    %5073 = vmatpush1.msra.mxu0 0.0
    %5074 = vmatprep.subr.mxu0 0.0
    %5075 = vmatpush1.msra.mxu0 0.0
    %5076 = vmatprep.subr.mxu0 0.0
    %5077 = vmatpush1.msra.mxu0 0.0
    %5078 = vmatprep.subr.mxu0 0.0
    %5079 = vmatpush1.msra.mxu0 0.0
    %5080 = vmatprep.subr.mxu0 0.0
    %5081 = vmatpush1.msra.mxu0 0.0
    %5082 = vmatprep.subr.mxu0 0.0
    %5083 = vmatpush1.msra.mxu0 0.0
    %5084 = vmatprep.subr.mxu0 0.0
    %5085 = vmatpush1.msra.mxu0 0.0
    %5086 = vmatprep.subr.mxu0 0.0
    %5087 = vmatpush1.msra.mxu0 0.0
    %5088 = vmatprep.subr.mxu0 0.0
    %5089 = vmatpush1.msra.mxu0 0.0
    %5090 = vmatprep.subr.mxu0 0.0
    %5091 = vmatpush1.msra.mxu0 0.0
    %5092 = vmatprep.subr.mxu0 0.0
    %5093 = vmatpush1.msra.mxu0 0.0
    %5094 = vmatprep.subr.mxu0 0.0
    %5095 = vmatpush1.msra.mxu0 0.0
    %5096 = vmatprep.subr.mxu0 0.0
    %5097 = vmatpush1.msra.mxu0 0.0
    %5098 = vmatprep.subr.mxu0 0.0
    %5099 = vmatpush1.msra.mxu0 0.0
    %5100 = vmatprep.subr.mxu0 0.0
    %5101 = vmatpush1.msra.mxu0 0.0
    %5102 = vmatprep.subr.mxu0 0.0
    %5103 = vmatpush1.msra.mxu0 0.0
    %5104 = vmatprep.subr.mxu0 0.0
    %5105 = vmatpush1.msra.mxu0 0.0
    %5106 = vmatprep.subr.mxu0 0.0
    %5107 = vmatpush1.msra.mxu0 0.0
    %5108 = vmatprep.subr.mxu0 0.0
    %5109 = vmatpush1.msra.mxu0 0.0
    %5110 = vmatprep.subr.mxu0 0.0
    %5111 = vmatpush1.msra.mxu0 0.0
    %5112 = vmatprep.subr.mxu0 0.0
    %5113 = vmatpush1.msra.mxu0 0.0
    %5114 = vmatprep.subr.mxu0 0.0
    %5115 = vmatpush1.msra.mxu0 0.0
    %5116 = vmatprep.subr.mxu0 0.0
    %5117 = vmatpush1.msra.mxu0 0.0
    %5118 = vmatprep.subr.mxu0 0.0
    %5119 = vmatpush1.msra.mxu0 0.0
    %5120 = vmatprep.subr.mxu0 0.0
    %5121 = vmatpush1.msra.mxu0 0.0
    %5122 = vmatprep.subr.mxu0 0.0
    %5123 = vmatpush1.msra.mxu0 0.0
    %5124 = vmatprep.subr.mxu0 0.0
    %5125 = vmatpush1.msra.mxu0 0.0
    %5126 = vmatprep.mubr.f32.mxu0 0.0
    %5127 = vmatmul.mubr.f32.gmra.mrb[0].mxu0 %v5060
    %v5128 = vpop.f32.mrb[0].mxu0
    %v5129 = vadd.f32 0.0, %v5128
    %v5130 = vpop.f32.mrb[0].mxu0
    %v5131 = vadd.f32 0.0, %v5130
    %5132 = vdwg.mxu0
    %5133 = vmatprep.subr.mxu0 %v3124
    %5134 = vmatpush1.msra.mxu0 %v3123
    %5135 = vmatprep.subr.mxu0 %v3130
    %5136 = vmatpush1.msra.mxu0 %v3129
    %5137 = vmatprep.subr.mxu0 %v3136
    %5138 = vmatpush1.msra.mxu0 %v3135
    %5139 = vmatprep.subr.mxu0 %v3142
    %5140 = vmatpush1.msra.mxu0 %v3141
    %5141 = vmatprep.subr.mxu0 0.0
    %5142 = vmatpush1.msra.mxu0 0.0
    %5143 = vmatprep.subr.mxu0 0.0
    %5144 = vmatpush1.msra.mxu0 0.0
    %5145 = vmatprep.subr.mxu0 0.0
    %5146 = vmatpush1.msra.mxu0 0.0
    %5147 = vmatprep.subr.mxu0 0.0
    %5148 = vmatpush1.msra.mxu0 0.0
    %5149 = vmatprep.subr.mxu0 0.0
    %5150 = vmatpush1.msra.mxu0 0.0
    %5151 = vmatprep.subr.mxu0 0.0
    %5152 = vmatpush1.msra.mxu0 0.0
    %5153 = vmatprep.subr.mxu0 0.0
    %5154 = vmatpush1.msra.mxu0 0.0
    %5155 = vmatprep.subr.mxu0 0.0
    %5156 = vmatpush1.msra.mxu0 0.0
    %5157 = vmatprep.subr.mxu0 0.0
    %5158 = vmatpush1.msra.mxu0 0.0
    %5159 = vmatprep.subr.mxu0 0.0
    %5160 = vmatpush1.msra.mxu0 0.0
    %5161 = vmatprep.subr.mxu0 0.0
    %5162 = vmatpush1.msra.mxu0 0.0
    %5163 = vmatprep.subr.mxu0 0.0
    %5164 = vmatpush1.msra.mxu0 0.0
    %5165 = vmatprep.subr.mxu0 0.0
    %5166 = vmatpush1.msra.mxu0 0.0
    %5167 = vmatprep.subr.mxu0 0.0
    %5168 = vmatpush1.msra.mxu0 0.0
    %5169 = vmatprep.subr.mxu0 0.0
    %5170 = vmatpush1.msra.mxu0 0.0
    %5171 = vmatprep.subr.mxu0 0.0
    %5172 = vmatpush1.msra.mxu0 0.0
    %5173 = vmatprep.subr.mxu0 0.0
    %5174 = vmatpush1.msra.mxu0 0.0
    %5175 = vmatprep.subr.mxu0 0.0
    %5176 = vmatpush1.msra.mxu0 0.0
    %5177 = vmatprep.subr.mxu0 0.0
    %5178 = vmatpush1.msra.mxu0 0.0
    %5179 = vmatprep.subr.mxu0 0.0
    %5180 = vmatpush1.msra.mxu0 0.0
    %5181 = vmatprep.subr.mxu0 0.0
    %5182 = vmatpush1.msra.mxu0 0.0
    %5183 = vmatprep.subr.mxu0 0.0
    %5184 = vmatpush1.msra.mxu0 0.0
    %5185 = vmatprep.subr.mxu0 0.0
    %5186 = vmatpush1.msra.mxu0 0.0
    %5187 = vmatprep.subr.mxu0 0.0
    %5188 = vmatpush1.msra.mxu0 0.0
    %5189 = vmatprep.subr.mxu0 0.0
    %5190 = vmatpush1.msra.mxu0 0.0
    %5191 = vmatprep.subr.mxu0 0.0
    %5192 = vmatpush1.msra.mxu0 0.0
    %5193 = vmatprep.subr.mxu0 0.0
    %5194 = vmatpush1.msra.mxu0 0.0
    %5195 = vmatprep.subr.mxu0 0.0
    %5196 = vmatpush1.msra.mxu0 0.0
    %5197 = vmatprep.mubr.f32.mxu0 0.0
    %5198 = vmatmul.mubr.f32.gmra.mrb[0].mxu0 %v5060
    %v5199 = vpop.f32.mrb[0].mxu0
    %v5200 = vadd.f32 0.0, %v5199
    %v5201 = vpop.f32.mrb[0].mxu0
    %v5202 = vadd.f32 0.0, %v5201
    %5203 = vdwg.mxu0
    %5204 = vmatprep.subr.mxu0 %v3126
    %5205 = vmatpush1.msra.mxu0 %v3125
    %5206 = vmatprep.subr.mxu0 %v3132
    %5207 = vmatpush1.msra.mxu0 %v3131
    %5208 = vmatprep.subr.mxu0 %v3138
    %5209 = vmatpush1.msra.mxu0 %v3137
    %5210 = vmatprep.subr.mxu0 %v3144
    %5211 = vmatpush1.msra.mxu0 %v3143
    %5212 = vmatprep.subr.mxu0 0.0
    %5213 = vmatpush1.msra.mxu0 0.0
    %5214 = vmatprep.subr.mxu0 0.0
    %5215 = vmatpush1.msra.mxu0 0.0
    %5216 = vmatprep.subr.mxu0 0.0
    %5217 = vmatpush1.msra.mxu0 0.0
    %5218 = vmatprep.subr.mxu0 0.0
    %5219 = vmatpush1.msra.mxu0 0.0
    %5220 = vmatprep.subr.mxu0 0.0
    %5221 = vmatpush1.msra.mxu0 0.0
    %5222 = vmatprep.subr.mxu0 0.0
    %5223 = vmatpush1.msra.mxu0 0.0
    %5224 = vmatprep.subr.mxu0 0.0
    %5225 = vmatpush1.msra.mxu0 0.0
    %5226 = vmatprep.subr.mxu0 0.0
    %5227 = vmatpush1.msra.mxu0 0.0
    %5228 = vmatprep.subr.mxu0 0.0
    %5229 = vmatpush1.msra.mxu0 0.0
    %5230 = vmatprep.subr.mxu0 0.0
    %5231 = vmatpush1.msra.mxu0 0.0
    %5232 = vmatprep.subr.mxu0 0.0
    %5233 = vmatpush1.msra.mxu0 0.0
    %5234 = vmatprep.subr.mxu0 0.0
    %5235 = vmatpush1.msra.mxu0 0.0
    %5236 = vmatprep.subr.mxu0 0.0
    %5237 = vmatpush1.msra.mxu0 0.0
    %5238 = vmatprep.subr.mxu0 0.0
    %5239 = vmatpush1.msra.mxu0 0.0
    %5240 = vmatprep.subr.mxu0 0.0
    %5241 = vmatpush1.msra.mxu0 0.0
    %5242 = vmatprep.subr.mxu0 0.0
    %5243 = vmatpush1.msra.mxu0 0.0
    %5244 = vmatprep.subr.mxu0 0.0
    %5245 = vmatpush1.msra.mxu0 0.0
    %5246 = vmatprep.subr.mxu0 0.0
    %5247 = vmatpush1.msra.mxu0 0.0
    %5248 = vmatprep.subr.mxu0 0.0
    %5249 = vmatpush1.msra.mxu0 0.0
    %5250 = vmatprep.subr.mxu0 0.0
    %5251 = vmatpush1.msra.mxu0 0.0
    %5252 = vmatprep.subr.mxu0 0.0
    %5253 = vmatpush1.msra.mxu0 0.0
    %5254 = vmatprep.subr.mxu0 0.0
    %5255 = vmatpush1.msra.mxu0 0.0
    %5256 = vmatprep.subr.mxu0 0.0
    %5257 = vmatpush1.msra.mxu0 0.0
    %5258 = vmatprep.subr.mxu0 0.0
    %5259 = vmatpush1.msra.mxu0 0.0
    %5260 = vmatprep.subr.mxu0 0.0
    %5261 = vmatpush1.msra.mxu0 0.0
    %5262 = vmatprep.subr.mxu0 0.0
    %5263 = vmatpush1.msra.mxu0 0.0
    %5264 = vmatprep.subr.mxu0 0.0
    %5265 = vmatpush1.msra.mxu0 0.0
    %5266 = vmatprep.subr.mxu0 0.0
    %5267 = vmatpush1.msra.mxu0 0.0
    %5268 = vmatprep.mubr.f32.mxu0 0.0
    %5269 = vmatmul.mubr.f32.gmra.mrb[0].mxu0 %v5060
    %v5270 = vpop.f32.mrb[0].mxu0
    %v5271 = vadd.f32 0.0, %v5270
    %v5272 = vpop.f32.mrb[0].mxu0
    %v5273 = vadd.f32 0.0, %v5272
    %5274 = vdwg.mxu0
    %5275 = vrot.lane.b32.xlu0 %v5129, 109
    %v5276 = vpop.permute.xlu0 %5275
    %5277 = vrot.lane.b32.xlu0 %v5131, 109
    %v5278 = vpop.permute.xlu0 %5277
    %5279 = vrot.lane.b32.xlu0 %v5200, 109
    %v5280 = vpop.permute.xlu0 %5279
    %5281 = vrot.lane.b32.xlu0 %v5202, 109
    %v5282 = vpop.permute.xlu0 %5281
    %5283 = vrot.lane.b32.xlu0 %v5271, 109
    %v5284 = vpop.permute.xlu0 %5283
    %5285 = vrot.lane.b32.xlu0 %v5273, 109
    %v5286 = vpop.permute.xlu0 %5285
    %v5287 = vsel %vm2733, %v5284, %v5286
    %v5288 = vsel %vm2733, %v5282, %v5284
    %v5289 = vsel %vm2733, %v5280, %v5282
    %v5290 = vsel %vm2733, %v5278, %v5280
    %v5291 = vsel %vm2733, %v5276, %v5278
    %v5292 = vsel %vm2733, %v5286, %v5276
    %v5293 = vadd.f32 %v5051, %v5291
    %v5294 = vadd.f32 %v5052, %v5290
    %v5295 = vadd.f32 %v5053, %v5289
    %v5296 = vadd.f32 %v5054, %v5288
    %v5297 = vadd.f32 %v5055, %v5287
    %v5298 = vadd.f32 %v5056, %v5292
    %v5299 = vmax.f32 %v5293, 0.0
    %v5300 = vmax.f32 %v5294, 0.0
    %v5301 = vmax.f32 %v5295, 0.0
    %v5302 = vmax.f32 %v5296, 0.0
    %v5303 = vmax.f32 %v5297, 0.0
    %v5304 = vmax.f32 %v5298, 0.0
    %5305 = vst [vmem:[#allocation2] sm:$0xff] %v5299
    %5306 = vst [vmem:[#allocation2 + $0x8] sm:$0xff] %v5300
    %5307 = vst [vmem:[#allocation2 + $0x10] sm:$0xff] %v5301
    %5308 = vst [vmem:[#allocation2 + $0x18] sm:$0xff] %v5302
    %5309 = vst [vmem:[#allocation2 + $0x20] sm:$0xff] %v5303
    %5310 = vst [vmem:[#allocation2 + $0x28] sm:$0xff] %v5304
    // Predicated region
    $region18: #{tpu_custom_call.1} parent=1 // pred_check
      _
    $region19: #{tpu_custom_call.1} parent=1 // pred_check_branch
      %5312 = sbr.rel (0) target = $region21
    $region20: #{tpu_custom_call.1} parent=1 // pred_region
      %s5314 = ssub.s32 768, 768
      %5315 = vsyncadd [#allocation3], %s5314
      %s5317 = sshll.u32 [#allocation2], 4
      %s5318 = int_to_ptr.vmem [resolvable:$true] %s5317
      %5320 = dma.vmem_to_hbm [thread:$0]  %s5318, 768, %s4, [#allocation3]
    $region21: #{tpu_custom_call.1} parent=1 // pred_fallthru
      _
    // Predicated region
    $region22: #{tpu_custom_call.1} parent=1 // pred_check
      _
    $region23: #{tpu_custom_call.1} parent=1 // pred_check_branch
      %5322 = sbr.rel (0) target = $region25
    $region24: #{tpu_custom_call.1} parent=1 // pred_region
      %5323 = dma.done [#allocation3], 768
    $region25: #{tpu_custom_call.1} parent=1 // pred_fallthru
      _
    %5324 = vsyncpa [#allocation3], 1

</llo_original>
